<compile_context>
chip_gen: v7x
topology: tpu7x:2x2x1
jax: 0.10.0
libtpu: 0.0.40
codegen_flags: <defaults>
</compile_context>

<pallas_src>
import jax
import jax.numpy as jnp
from jax.experimental import pallas as pl
from jax.experimental.pallas import tpu as pltpu

OUT_PAD = 128  # lane-dense padded width of the final (256 -> 10) layer


def mlp_kernel(x_ref, w1_ref, b1_ref, w2_ref, b2_ref, w3_ref, b3_ref, o_ref):
    # x arrives as f32 straight from HBM; cast to bf16 in-kernel so the wrapper
    # does not need a separate casting pass over x.
    x = x_ref[...].astype(jnp.bfloat16)

    # Layer 1: Linear(2048 -> 512) + ReLU   (bf16 MXU matmul, f32 accumulate)
    h1 = jnp.dot(x, w1_ref[...], preferred_element_type=jnp.float32)
    h1 = jnp.maximum(h1 + b1_ref[...], 0.0)

    # Dropout(0.2): identity at inference time.
    # TODO(synk): training-mode dropout not implemented.

    # Layer 2: Linear(512 -> 256) + ReLU
    h2 = jnp.dot(h1.astype(jnp.bfloat16), w2_ref[...],
                 preferred_element_type=jnp.float32)
    h2 = jnp.maximum(h2 + b2_ref[...], 0.0)

    # Layer 3: Linear(256 -> 10), zero-padded to 128 output lanes; bf16 store.
    out = jnp.dot(h2.astype(jnp.bfloat16), w3_ref[...],
                  preferred_element_type=jnp.float32)
    o_ref[...] = (out + b3_ref[...]).astype(o_ref.dtype)


def _round_up(n, m):
    return ((n + m - 1) // m) * m


def _cdiv(a, b):
    return (a + b - 1) // b


def _tpu_vmem_bytes():
    """Physical VMEM per core; conservative 64 MiB (v7x) if the query fails."""
    try:
        return int(pltpu.get_tpu_info().vmem_capacity_bytes)
    except Exception:
        return 64 << 20


def _choose_tiling(B, tm_max):
    """Pick (tm, Bp): 16-row-aligned batch tile and padded batch size.

    - tiny batches (<= 512 rows): single grid step, tile = whole (16-aligned)
      batch;
    - larger batches: >= 2 grid steps (so v7x megacore sharding has work for
      both TensorCores), tm <= tm_max, and at most ~15 padded rows per step.
    """
    B16 = _round_up(max(B, 1), 16)
    if B16 <= 512:
        return B16, B16
    nsteps = max(2, _cdiv(B16, tm_max))
    tm = _round_up(_cdiv(B16, nsteps), 16)
    Bp = _round_up(B16, tm)
    return tm, Bp


def c10_forward(x, params):
    """x: [B, 2048] float32. Returns [B, 10] float32.

    params: output of prepare_params (bf16 weights [in, out], f32 biases
    [1, out], last layer padded to OUT_PAD output lanes).
    """
    w1, b1, w2, b2, w3, b3 = params
    B, D = x.shape
    assert D == 2048

    # Generation-aware tile cap: 128-MiB-VMEM chips (v5e/v6e) can take 2048-row
    # tiles of f32 x; 64-MiB chips (v7x) stay at 1024 to keep double-buffering
    # plus resident weights comfortably inside VMEM.
    vmem = _tpu_vmem_bytes()
    big_vmem = vmem >= (96 << 20)
    tm_max = 2048 if big_vmem else 1024
    vmem_limit = (80 << 20) if big_vmem else (48 << 20)

    tm, Bp = _choose_tiling(B, tm_max)
    if Bp != B:
        x = jnp.pad(x, ((0, Bp - B), (0, 0)))

    grid = (Bp // tm,)
    const = lambda a: pl.BlockSpec(a.shape, lambda i: (0, 0))  # VMEM-resident

    out = pl.pallas_call(
        mlp_kernel,
        out_shape=jax.ShapeDtypeStruct((Bp, OUT_PAD), jnp.bfloat16),
        grid=grid,
        in_specs=[
            pl.BlockSpec((tm, 2048), lambda i: (i, 0)),   # x: f32, batch-tiled
            const(w1), const(b1),                         # weights/biases:
            const(w2), const(b2),                         # DMA'd once,
            const(w3), const(b3),                         # VMEM-resident
        ],
        out_specs=pl.BlockSpec((tm, OUT_PAD), lambda i: (i, 0)),
        compiler_params=pltpu.CompilerParams(
            dimension_semantics=("parallel",),
            vmem_limit_bytes=vmem_limit,
        ),
    )(x, w1, b1, w2, b2, w3, b3)

    # Only the first 10 logits are real; cast back to f32 for the caller.
    return out[:B, :10].astype(jnp.float32)


def init_params(key):
    """Deterministic init mimicking PyTorch Linear default
    (uniform +/- 1/sqrt(fan_in)). Weights stored as [in, out] (transposed)."""
    dims = [(2048, 512), (512, 256), (256, 10)]
    params = []
    for fan_in, fan_out in dims:
        kw, kb, key = jax.random.split(key, 3)
        bound = 1.0 / jnp.sqrt(fan_in)
        w = jax.random.uniform(kw, (fan_in, fan_out), jnp.float32, -bound, bound)
        b = jax.random.uniform(kb, (1, fan_out), jnp.float32, -bound, bound)
        params.extend([w, b])
    return tuple(params)


def prepare_params(params):
    """Cast weights to bf16, keep biases f32, pad final layer to OUT_PAD lanes."""
    w1, b1, w2, b2, w3, b3 = params
    w3p = jnp.zeros((w3.shape[0], OUT_PAD), jnp.float32).at[:, :10].set(w3)
    b3p = jnp.zeros((1, OUT_PAD), jnp.float32).at[:, :10].set(b3)
    return (
        w1.astype(jnp.bfloat16), b1.astype(jnp.float32),
        w2.astype(jnp.bfloat16), b2.astype(jnp.float32),
        w3p.astype(jnp.bfloat16), b3p.astype(jnp.float32),
    )


if __name__ == "__main__":
    key = jax.random.PRNGKey(0)
    k_x, k_p = jax.random.split(key)

    B = 8  # small batch for the check; feature dims are fixed by the module
    x = jax.random.normal(k_x, (B, 2048), jnp.float32)
    raw_params = init_params(k_p)
    params = prepare_params(raw_params)

    y = c10_forward(x, params)
    y = jax.block_until_ready(y)
    assert y.shape == (B, 10)

    # Reference in plain JAX using the same bf16-matmul / f32-elementwise /
    # bf16-output path as the kernel.
    w1, b1, w2, b2, w3, b3 = params
    xb = x.astype(jnp.bfloat16)
    ref = jnp.maximum(
        jnp.dot(xb, w1, preferred_element_type=jnp.float32) + b1, 0.0)
    ref = jnp.maximum(
        jnp.dot(ref.astype(jnp.bfloat16), w2,
                preferred_element_type=jnp.float32) + b2, 0.0)
    ref = jnp.dot(ref.astype(jnp.bfloat16), w3,
                  preferred_element_type=jnp.float32) + b3
    ref = ref[:, :10].astype(jnp.bfloat16).astype(jnp.float32)
    assert jnp.allclose(y, ref, atol=1e-2, rtol=1e-2), (
        float(jnp.max(jnp.abs(y - ref))))

    # Sanity check against the full-f32 math (looser tolerance for bf16 path).
    fw1, fb1, fw2, fb2, fw3, fb3 = raw_params
    ref32 = jnp.maximum(x @ fw1 + fb1, 0.0)
    ref32 = jnp.maximum(ref32 @ fw2 + fb2, 0.0)
    ref32 = ref32 @ fw3 + fb3
    assert jnp.allclose(y, ref32, atol=5e-2, rtol=5e-2)

    print("KERNEL_OK")
</pallas_src>

<mosaic_0001>
module attributes {stable_mosaic.version = 11 : i64} {
  func.func @mlp_kernel(%arg0: i32, %arg1: memref<16x2048xf32, #tpu.memory_space<vmem>>, %arg2: memref<2048x512xbf16, #tpu.memory_space<vmem>>, %arg3: memref<1x512xf32, #tpu.memory_space<vmem>>, %arg4: memref<512x256xbf16, #tpu.memory_space<vmem>>, %arg5: memref<1x256xf32, #tpu.memory_space<vmem>>, %arg6: memref<256x128xbf16, #tpu.memory_space<vmem>>, %arg7: memref<1x128xf32, #tpu.memory_space<vmem>>, %arg8: memref<16x128xbf16, #tpu.memory_space<vmem>>) attributes {dimension_semantics = [#tpu.dimension_semantics<parallel>], iteration_bounds = array<i64: 1>, scalar_prefetch = 0 : i64, scratch_operands = 0 : i64, tpu.core_type = #tpu.core_type<tc>, window_params = [{transform_indices = @transform_0, window_bounds = array<i64: 16, 2048>}, {pipeline_mode = #tpu.pipeline_mode<synchronous>, transform_indices = @transform_1, window_bounds = array<i64: 2048, 512>}, {pipeline_mode = #tpu.pipeline_mode<synchronous>, transform_indices = @transform_2, window_bounds = array<i64: 1, 512>}, {pipeline_mode = #tpu.pipeline_mode<synchronous>, transform_indices = @transform_3, window_bounds = array<i64: 512, 256>}, {pipeline_mode = #tpu.pipeline_mode<synchronous>, transform_indices = @transform_4, window_bounds = array<i64: 1, 256>}, {pipeline_mode = #tpu.pipeline_mode<synchronous>, transform_indices = @transform_5, window_bounds = array<i64: 256, 128>}, {pipeline_mode = #tpu.pipeline_mode<synchronous>, transform_indices = @transform_6, window_bounds = array<i64: 1, 128>}, {transform_indices = @transform_7, window_bounds = array<i64: 16, 128>}]} {
    %c0 = arith.constant 0 : index
    %c0_0 = arith.constant 0 : index
    %0 = vector.load %arg1[%c0, %c0_0] : memref<16x2048xf32, #tpu.memory_space<vmem>>, vector<16x2048xf32>
    %1 = arith.truncf %0 : vector<16x2048xf32> to vector<16x2048xbf16>
    %c0_1 = arith.constant 0 : index
    %c0_2 = arith.constant 0 : index
    %2 = vector.load %arg2[%c0_1, %c0_2] : memref<2048x512xbf16, #tpu.memory_space<vmem>>, vector<2048x512xbf16>
    %cst = arith.constant dense<0.000000e+00> : vector<16x512xf32>
    %3 = tpu.matmul %1, %2, %cst {dimension_numbers = #tpu.dot_dimension_numbers<[1], [0], [0], [1], [0, 0, 1, 1], [], []>} : vector<16x2048xbf16>, vector<2048x512xbf16>, vector<16x512xf32> -> vector<16x512xf32>
    %c0_3 = arith.constant 0 : index
    %c0_4 = arith.constant 0 : index
    %4 = vector.load %arg3[%c0_3, %c0_4] : memref<1x512xf32, #tpu.memory_space<vmem>>, vector<1x512xf32>
    %5 = vector.broadcast %4 : vector<1x512xf32> to vector<16x512xf32>
    %6 = arith.addf %3, %5 : vector<16x512xf32>
    %cst_5 = arith.constant 0.000000e+00 : f32
    %7 = vector.broadcast %cst_5 : f32 to vector<16x512xf32>
    %8 = arith.maximumf %6, %7 : vector<16x512xf32>
    %9 = arith.truncf %8 : vector<16x512xf32> to vector<16x512xbf16>
    %c0_6 = arith.constant 0 : index
    %c0_7 = arith.constant 0 : index
    %10 = vector.load %arg4[%c0_6, %c0_7] : memref<512x256xbf16, #tpu.memory_space<vmem>>, vector<512x256xbf16>
    %cst_8 = arith.constant dense<0.000000e+00> : vector<16x256xf32>
    %11 = tpu.matmul %9, %10, %cst_8 {dimension_numbers = #tpu.dot_dimension_numbers<[1], [0], [0], [1], [0, 0, 1, 1], [], []>} : vector<16x512xbf16>, vector<512x256xbf16>, vector<16x256xf32> -> vector<16x256xf32>
    %c0_9 = arith.constant 0 : index
    %c0_10 = arith.constant 0 : index
    %12 = vector.load %arg5[%c0_9, %c0_10] : memref<1x256xf32, #tpu.memory_space<vmem>>, vector<1x256xf32>
    %13 = vector.broadcast %12 : vector<1x256xf32> to vector<16x256xf32>
    %14 = arith.addf %11, %13 : vector<16x256xf32>
    %cst_11 = arith.constant 0.000000e+00 : f32
    %15 = vector.broadcast %cst_11 : f32 to vector<16x256xf32>
    %16 = arith.maximumf %14, %15 : vector<16x256xf32>
    %17 = arith.truncf %16 : vector<16x256xf32> to vector<16x256xbf16>
    %c0_12 = arith.constant 0 : index
    %c0_13 = arith.constant 0 : index
    %18 = vector.load %arg6[%c0_12, %c0_13] : memref<256x128xbf16, #tpu.memory_space<vmem>>, vector<256x128xbf16>
    %cst_14 = arith.constant dense<0.000000e+00> : vector<16x128xf32>
    %19 = tpu.matmul %17, %18, %cst_14 {dimension_numbers = #tpu.dot_dimension_numbers<[1], [0], [0], [1], [0, 0, 1, 1], [], []>} : vector<16x256xbf16>, vector<256x128xbf16>, vector<16x128xf32> -> vector<16x128xf32>
    %c0_15 = arith.constant 0 : index
    %c0_16 = arith.constant 0 : index
    %20 = vector.load %arg7[%c0_15, %c0_16] : memref<1x128xf32, #tpu.memory_space<vmem>>, vector<1x128xf32>
    %21 = vector.broadcast %20 : vector<1x128xf32> to vector<16x128xf32>
    %22 = arith.addf %19, %21 : vector<16x128xf32>
    %23 = arith.truncf %22 : vector<16x128xf32> to vector<16x128xbf16>
    %c0_17 = arith.constant 0 : index
    %c0_18 = arith.constant 0 : index
    %24 = vector.load %arg8[%c0_17, %c0_18] : memref<16x128xbf16, #tpu.memory_space<vmem>>, vector<16x128xbf16>
    tpu.vector_store %arg8[%c0_17, %c0_18], %23 {strides = array<i32>} : memref<16x128xbf16, #tpu.memory_space<vmem>>, vector<16x128xbf16>,
    return
  }
  func.func @transform_0(%arg0: i32) -> (i32, i32) {
    %c0_i32 = arith.constant 0 : i32
    %c0_i32_0 = arith.constant 0 : i32
    return %arg0, %c0_i32 : i32, i32
  }
  func.func @transform_1(%arg0: i32) -> (i32, i32) {
    %c0_i32 = arith.constant 0 : i32
    %c0_i32_0 = arith.constant 0 : i32
    %c0_i32_1 = arith.constant 0 : i32
    return %c0_i32, %c0_i32_0 : i32, i32
  }
  func.func @transform_2(%arg0: i32) -> (i32, i32) {
    %c0_i32 = arith.constant 0 : i32
    %c0_i32_0 = arith.constant 0 : i32
    %c0_i32_1 = arith.constant 0 : i32
    return %c0_i32, %c0_i32_0 : i32, i32
  }
  func.func @transform_3(%arg0: i32) -> (i32, i32) {
    %c0_i32 = arith.constant 0 : i32
    %c0_i32_0 = arith.constant 0 : i32
    %c0_i32_1 = arith.constant 0 : i32
    return %c0_i32, %c0_i32_0 : i32, i32
  }
  func.func @transform_4(%arg0: i32) -> (i32, i32) {
    %c0_i32 = arith.constant 0 : i32
    %c0_i32_0 = arith.constant 0 : i32
    %c0_i32_1 = arith.constant 0 : i32
    return %c0_i32, %c0_i32_0 : i32, i32
  }
  func.func @transform_5(%arg0: i32) -> (i32, i32) {
    %c0_i32 = arith.constant 0 : i32
    %c0_i32_0 = arith.constant 0 : i32
    %c0_i32_1 = arith.constant 0 : i32
    return %c0_i32, %c0_i32_0 : i32, i32
  }
  func.func @transform_6(%arg0: i32) -> (i32, i32) {
    %c0_i32 = arith.constant 0 : i32
    %c0_i32_0 = arith.constant 0 : i32
    %c0_i32_1 = arith.constant 0 : i32
    return %c0_i32, %c0_i32_0 : i32, i32
  }
  func.func @transform_7(%arg0: i32) -> (i32, i32) {
    %c0_i32 = arith.constant 0 : i32
    %c0_i32_0 = arith.constant 0 : i32
    return %arg0, %c0_i32 : i32, i32
  }
}

</mosaic_0001>

<llo_original>
// kernel: tpu_custom_call.1
$region0: #{tpu_custom_call.1}
  #allocation0 [shape = 'u32[]', space=smem, size = 0x4, offset = 0x4, fixed_abs, tag = 'smem constant byte address 0x4 - core index']
  #allocation1 [shape = 'u32[144,128]{1,0:T(1,128)}', space=vmem, size = 0x12000, scoped, tag = 'internal scratch']
  %s0 = inlined_call_operand.hbm [shape: f32[16,2048], index: 0, kind: input, shape index: {}]
  %s1 = inlined_call_operand.hbm [shape: bf16[2048,512], index: 1, kind: input, shape index: {}]
  %s2 = inlined_call_operand.hbm [shape: f32[1,512], index: 2, kind: input, shape index: {}]
  %s3 = inlined_call_operand.hbm [shape: bf16[512,256], index: 3, kind: input, shape index: {}]
  %s4 = inlined_call_operand.hbm [shape: f32[1,256], index: 4, kind: input, shape index: {}]
  %s5 = inlined_call_operand.hbm [shape: bf16[256,128], index: 5, kind: input, shape index: {}]
  %s6 = inlined_call_operand.hbm [shape: f32[1,128], index: 6, kind: input, shape index: {}]
  %s7 = inlined_call_operand.hbm [shape: bf16[16,128], index: 7, kind: output, shape index: {}]
  %s8 = sld [smem:[#allocation0]]
  $region66: #{tpu_custom_call.1} parent=0
    _
  %s10 = ssub.s32 1, %s8
  %s11 = scalar_select 0, %s10, %s8
  $region1: #{tpu_custom_call.1} parent=0
    #allocation2 [shape = 'u8[131072]{0}', space=vmem, size = 0x20000, scoped, tag = 'input window, operand 0, single buffered']
    #allocation3 [shape = 's32[1]{0}', space=sflag, size = 0x4, scoped, tag = 'scoped memory for tpu_custom_call.1']
    #allocation4 [shape = 's32[1]{0}', space=sflag, size = 0x4, scoped, tag = 'scoped memory for tpu_custom_call.1']
    #allocation5 [shape = 'u8[2097152]{0}', space=vmem, size = 0x200000, scoped, tag = 'input window, operand 1, single buffered']
    #allocation6 [shape = 's32[1]{0}', space=sflag, size = 0x4, scoped, tag = 'scoped memory for tpu_custom_call.1']
    #allocation7 [shape = 'u8[2048]{0}', space=vmem, size = 0x800, scoped, tag = 'input window, operand 2, single buffered']
    #allocation8 [shape = 'u8[262144]{0}', space=vmem, size = 0x40000, scoped, tag = 'input window, operand 3, single buffered']
    #allocation9 [shape = 's32[1]{0}', space=sflag, size = 0x4, scoped, tag = 'scoped memory for tpu_custom_call.1']
    #allocation10 [shape = 'u8[1024]{0}', space=vmem, size = 0x400, scoped, tag = 'input window, operand 4, single buffered']
    #allocation11 [shape = 'u8[65536]{0}', space=vmem, size = 0x10000, scoped, tag = 'input window, operand 5, single buffered']
    #allocation12 [shape = 's32[1]{0}', space=sflag, size = 0x4, scoped, tag = 'scoped memory for tpu_custom_call.1']
    #allocation13 [shape = 'u8[512]{0}', space=vmem, size = 0x400, scoped, tag = 'input window, operand 6, single buffered']
    #allocation14 [shape = 'u8[4096]{0}', space=vmem, size = 0x1000, scoped, tag = 'output window, operand 0, single buffered']
    %12 = vsyncpa [#allocation3], 0
    %13 = vsyncpa [#allocation6], 0
    %14 = vsyncpa [#allocation9], 0
    %15 = vsyncpa [#allocation12], 0
    %16 = vsyncpa [#allocation4], 0
    // Predicated region
    $region2: #{tpu_custom_call.1} parent=1 // pred_check
      _
    $region3: #{tpu_custom_call.1} parent=1 // pred_check_branch
      %18 = sbr.rel (0) target = $region5
    $region4: #{tpu_custom_call.1} parent=1 // pred_region
      %s20 = ssub.s32 4096, 4096
      %21 = vsyncadd [#allocation3], %s20
      %s22 = sshll.u32 [#allocation2], 4
      %s23 = int_to_ptr.vmem [resolvable:$true] %s22
      %28 = dma.hbm_to_vmem [thread:$0]  %s0, 4096, %s23, [#allocation3], 2048, 2048, 128
    $region5: #{tpu_custom_call.1} parent=1 // pred_fallthru
      _
    // Predicated region
    $region6: #{tpu_custom_call.1} parent=1 // pred_check
      _
    $region7: #{tpu_custom_call.1} parent=1 // pred_check_branch
      %30 = sbr.rel (0) target = $region9
    $region8: #{tpu_custom_call.1} parent=1 // pred_region
      %s32 = ssub.s32 65536, 65536
      %33 = vsyncadd [#allocation6], %s32
      %s34 = sshll.u32 [#allocation5], 4
      %s35 = int_to_ptr.vmem [resolvable:$true] %s34
      %40 = dma.hbm_to_vmem [thread:$0]  %s1, 65536, %s35, [#allocation6], 256, 256, 16
    $region9: #{tpu_custom_call.1} parent=1 // pred_fallthru
      _
    // Predicated region
    $region10: #{tpu_custom_call.1} parent=1 // pred_check
      _
    $region11: #{tpu_custom_call.1} parent=1 // pred_check_branch
      %42 = sbr.rel (0) target = $region13
    $region12: #{tpu_custom_call.1} parent=1 // pred_region
      %s44 = ssub.s32 64, 64
      %45 = vsyncadd [#allocation6], %s44
      %s47 = sshll.u32 [#allocation7], 4
      %s48 = int_to_ptr.vmem [resolvable:$true] %s47
      %50 = dma.hbm_to_vmem [thread:$0]  %s2, 64, %s48, [#allocation6]
    $region13: #{tpu_custom_call.1} parent=1 // pred_fallthru
      _
    // Predicated region
    $region14: #{tpu_custom_call.1} parent=1 // pred_check
      _
    $region15: #{tpu_custom_call.1} parent=1 // pred_check_branch
      %52 = sbr.rel (0) target = $region17
    $region16: #{tpu_custom_call.1} parent=1 // pred_region
      %s54 = ssub.s32 8192, 8192
      %55 = vsyncadd [#allocation9], %s54
      %s56 = sshll.u32 [#allocation8], 4
      %s57 = int_to_ptr.vmem [resolvable:$true] %s56
      %62 = dma.hbm_to_vmem [thread:$0]  %s3, 8192, %s57, [#allocation9], 128, 128, 8
    $region17: #{tpu_custom_call.1} parent=1 // pred_fallthru
      _
    // Predicated region
    $region18: #{tpu_custom_call.1} parent=1 // pred_check
      _
    $region19: #{tpu_custom_call.1} parent=1 // pred_check_branch
      %64 = sbr.rel (0) target = $region21
    $region20: #{tpu_custom_call.1} parent=1 // pred_region
      %s66 = ssub.s32 32, 32
      %67 = vsyncadd [#allocation9], %s66
      %s69 = sshll.u32 [#allocation10], 4
      %s70 = int_to_ptr.vmem [resolvable:$true] %s69
      %72 = dma.hbm_to_vmem [thread:$0]  %s4, 32, %s70, [#allocation9]
    $region21: #{tpu_custom_call.1} parent=1 // pred_fallthru
      _
    // Predicated region
    $region22: #{tpu_custom_call.1} parent=1 // pred_check
      _
    $region23: #{tpu_custom_call.1} parent=1 // pred_check_branch
      %74 = sbr.rel (0) target = $region25
    $region24: #{tpu_custom_call.1} parent=1 // pred_region
      %s76 = ssub.s32 2048, 2048
      %77 = vsyncadd [#allocation12], %s76
      %s78 = sshll.u32 [#allocation11], 4
      %s79 = int_to_ptr.vmem [resolvable:$true] %s78
      %84 = dma.hbm_to_vmem [thread:$0]  %s5, 2048, %s79, [#allocation12], 64, 64, 4
    $region25: #{tpu_custom_call.1} parent=1 // pred_fallthru
      _
    // Predicated region
    $region26: #{tpu_custom_call.1} parent=1 // pred_check
      _
    $region27: #{tpu_custom_call.1} parent=1 // pred_check_branch
      %86 = sbr.rel (0) target = $region29
    $region28: #{tpu_custom_call.1} parent=1 // pred_region
      %s88 = ssub.s32 16, 16
      %89 = vsyncadd [#allocation12], %s88
      %s91 = sshll.u32 [#allocation13], 4
      %s92 = int_to_ptr.vmem [resolvable:$true] %s91
      %94 = dma.hbm_to_vmem [thread:$0]  %s6, 16, %s92, [#allocation12]
    $region29: #{tpu_custom_call.1} parent=1 // pred_fallthru
      _
    // Predicated region
    $region30: #{tpu_custom_call.1} parent=1 // pred_check
      _
    $region31: #{tpu_custom_call.1} parent=1 // pred_check_branch
      %96 = sbr.rel (0) target = $region33
    $region32: #{tpu_custom_call.1} parent=1 // pred_region
      %97 = dma.done [#allocation3], 4096
    $region33: #{tpu_custom_call.1} parent=1 // pred_fallthru
      _
    // Predicated region
    $region34: #{tpu_custom_call.1} parent=1 // pred_check
      _
    $region35: #{tpu_custom_call.1} parent=1 // pred_check_branch
      %99 = sbr.rel (0) target = $region37
    $region36: #{tpu_custom_call.1} parent=1 // pred_region
      %100 = dma.done [#allocation6], 65536
    $region37: #{tpu_custom_call.1} parent=1 // pred_fallthru
      _
    // Predicated region
    $region38: #{tpu_custom_call.1} parent=1 // pred_check
      _
    $region39: #{tpu_custom_call.1} parent=1 // pred_check_branch
      %102 = sbr.rel (0) target = $region41
    $region40: #{tpu_custom_call.1} parent=1 // pred_region
      %103 = dma.done [#allocation6], 64
    $region41: #{tpu_custom_call.1} parent=1 // pred_fallthru
      _
    // Predicated region
    $region42: #{tpu_custom_call.1} parent=1 // pred_check
      _
    $region43: #{tpu_custom_call.1} parent=1 // pred_check_branch
      %105 = sbr.rel (0) target = $region45
    $region44: #{tpu_custom_call.1} parent=1 // pred_region
      %106 = dma.done [#allocation9], 8192
    $region45: #{tpu_custom_call.1} parent=1 // pred_fallthru
      _
    // Predicated region
    $region46: #{tpu_custom_call.1} parent=1 // pred_check
      _
    $region47: #{tpu_custom_call.1} parent=1 // pred_check_branch
      %108 = sbr.rel (0) target = $region49
    $region48: #{tpu_custom_call.1} parent=1 // pred_region
      %109 = dma.done [#allocation9], 32
    $region49: #{tpu_custom_call.1} parent=1 // pred_fallthru
      _
    // Predicated region
    $region50: #{tpu_custom_call.1} parent=1 // pred_check
      _
    $region51: #{tpu_custom_call.1} parent=1 // pred_check_branch
      %111 = sbr.rel (0) target = $region53
    $region52: #{tpu_custom_call.1} parent=1 // pred_region
      %112 = dma.done [#allocation12], 2048
    $region53: #{tpu_custom_call.1} parent=1 // pred_fallthru
      _
    // Predicated region
    $region54: #{tpu_custom_call.1} parent=1 // pred_check
      _
    $region55: #{tpu_custom_call.1} parent=1 // pred_check_branch
      %114 = sbr.rel (0) target = $region57
    $region56: #{tpu_custom_call.1} parent=1 // pred_region
      %115 = dma.done [#allocation12], 16
    $region57: #{tpu_custom_call.1} parent=1 // pred_fallthru
      _
    %v117 = vld [vmem:[#allocation2] sm:$0xff]
    %v118 = vld [vmem:[#allocation2 + $0x8] sm:$0xff]
    %v119 = vld [vmem:[#allocation2 + $0x10] sm:$0xff]
    %v120 = vld [vmem:[#allocation2 + $0x18] sm:$0xff]
    %v121 = vld [vmem:[#allocation2 + $0x20] sm:$0xff]
    %v122 = vld [vmem:[#allocation2 + $0x28] sm:$0xff]
    %v123 = vld [vmem:[#allocation2 + $0x30] sm:$0xff]
    %v124 = vld [vmem:[#allocation2 + $0x38] sm:$0xff]
    %v125 = vld [vmem:[#allocation2 + $0x40] sm:$0xff]
    %v126 = vld [vmem:[#allocation2 + $0x48] sm:$0xff]
    %v127 = vld [vmem:[#allocation2 + $0x50] sm:$0xff]
    %v128 = vld [vmem:[#allocation2 + $0x58] sm:$0xff]
    %v129 = vld [vmem:[#allocation2 + $0x60] sm:$0xff]
    %v130 = vld [vmem:[#allocation2 + $0x68] sm:$0xff]
    %v131 = vld [vmem:[#allocation2 + $0x70] sm:$0xff]
    %v132 = vld [vmem:[#allocation2 + $0x78] sm:$0xff]
    %v133 = vld [vmem:[#allocation2 + $0x80] sm:$0xff]
    %v134 = vld [vmem:[#allocation2 + $0x88] sm:$0xff]
    %v135 = vld [vmem:[#allocation2 + $0x90] sm:$0xff]
    %v136 = vld [vmem:[#allocation2 + $0x98] sm:$0xff]
    %v137 = vld [vmem:[#allocation2 + $0xa0] sm:$0xff]
    %v138 = vld [vmem:[#allocation2 + $0xa8] sm:$0xff]
    %v139 = vld [vmem:[#allocation2 + $0xb0] sm:$0xff]
    %v140 = vld [vmem:[#allocation2 + $0xb8] sm:$0xff]
    %v141 = vld [vmem:[#allocation2 + $0xc0] sm:$0xff]
    %v142 = vld [vmem:[#allocation2 + $0xc8] sm:$0xff]
    %v143 = vld [vmem:[#allocation2 + $0xd0] sm:$0xff]
    %v144 = vld [vmem:[#allocation2 + $0xd8] sm:$0xff]
    %v145 = vld [vmem:[#allocation2 + $0xe0] sm:$0xff]
    %v146 = vld [vmem:[#allocation2 + $0xe8] sm:$0xff]
    %v147 = vld [vmem:[#allocation2 + $0xf0] sm:$0xff]
    %v148 = vld [vmem:[#allocation2 + $0xf8] sm:$0xff]
    %v149 = vpack.c.bf16 %v133, %v117
    %v150 = vpack.c.bf16 %v134, %v118
    %v151 = vpack.c.bf16 %v135, %v119
    %v152 = vpack.c.bf16 %v136, %v120
    %v153 = vpack.c.bf16 %v137, %v121
    %v154 = vpack.c.bf16 %v138, %v122
    %v155 = vpack.c.bf16 %v139, %v123
    %v156 = vpack.c.bf16 %v140, %v124
    %v157 = vpack.c.bf16 %v141, %v125
    %v158 = vpack.c.bf16 %v142, %v126
    %v159 = vpack.c.bf16 %v143, %v127
    %v160 = vpack.c.bf16 %v144, %v128
    %v161 = vpack.c.bf16 %v145, %v129
    %v162 = vpack.c.bf16 %v146, %v130
    %v163 = vpack.c.bf16 %v147, %v131
    %v164 = vpack.c.bf16 %v148, %v132
    %v165 = vld [vmem:[#allocation5] sm:$0xff]
    %v166 = vld [vmem:[#allocation5 + $0x8] sm:$0xff]
    %v167 = vld [vmem:[#allocation5 + $0x10] sm:$0xff]
    %v168 = vld [vmem:[#allocation5 + $0x18] sm:$0xff]
    %v169 = vld [vmem:[#allocation5 + $0x20] sm:$0xff]
    %v170 = vld [vmem:[#allocation5 + $0x28] sm:$0xff]
    %v171 = vld [vmem:[#allocation5 + $0x30] sm:$0xff]
    %v172 = vld [vmem:[#allocation5 + $0x38] sm:$0xff]
    %v173 = vld [vmem:[#allocation5 + $0x40] sm:$0xff]
    %v174 = vld [vmem:[#allocation5 + $0x48] sm:$0xff]
    %v175 = vld [vmem:[#allocation5 + $0x50] sm:$0xff]
    %v176 = vld [vmem:[#allocation5 + $0x58] sm:$0xff]
    %v177 = vld [vmem:[#allocation5 + $0x60] sm:$0xff]
    %v178 = vld [vmem:[#allocation5 + $0x68] sm:$0xff]
    %v179 = vld [vmem:[#allocation5 + $0x70] sm:$0xff]
    %v180 = vld [vmem:[#allocation5 + $0x78] sm:$0xff]
    %v181 = vld [vmem:[#allocation5 + $0x80] sm:$0xff]
    %v182 = vld [vmem:[#allocation5 + $0x88] sm:$0xff]
    %v183 = vld [vmem:[#allocation5 + $0x90] sm:$0xff]
    %v184 = vld [vmem:[#allocation5 + $0x98] sm:$0xff]
    %v185 = vld [vmem:[#allocation5 + $0xa0] sm:$0xff]
    %v186 = vld [vmem:[#allocation5 + $0xa8] sm:$0xff]
    %v187 = vld [vmem:[#allocation5 + $0xb0] sm:$0xff]
    %v188 = vld [vmem:[#allocation5 + $0xb8] sm:$0xff]
    %v189 = vld [vmem:[#allocation5 + $0xc0] sm:$0xff]
    %v190 = vld [vmem:[#allocation5 + $0xc8] sm:$0xff]
    %v191 = vld [vmem:[#allocation5 + $0xd0] sm:$0xff]
    %v192 = vld [vmem:[#allocation5 + $0xd8] sm:$0xff]
    %v193 = vld [vmem:[#allocation5 + $0xe0] sm:$0xff]
    %v194 = vld [vmem:[#allocation5 + $0xe8] sm:$0xff]
    %v195 = vld [vmem:[#allocation5 + $0xf0] sm:$0xff]
    %v196 = vld [vmem:[#allocation5 + $0xf8] sm:$0xff]
    %v197 = vld [vmem:[#allocation5 + $0x100] sm:$0xff]
    %v198 = vld [vmem:[#allocation5 + $0x108] sm:$0xff]
    %v199 = vld [vmem:[#allocation5 + $0x110] sm:$0xff]
    %v200 = vld [vmem:[#allocation5 + $0x118] sm:$0xff]
    %v201 = vld [vmem:[#allocation5 + $0x120] sm:$0xff]
    %v202 = vld [vmem:[#allocation5 + $0x128] sm:$0xff]
    %v203 = vld [vmem:[#allocation5 + $0x130] sm:$0xff]
    %v204 = vld [vmem:[#allocation5 + $0x138] sm:$0xff]
    %v205 = vld [vmem:[#allocation5 + $0x140] sm:$0xff]
    %v206 = vld [vmem:[#allocation5 + $0x148] sm:$0xff]
    %v207 = vld [vmem:[#allocation5 + $0x150] sm:$0xff]
    %v208 = vld [vmem:[#allocation5 + $0x158] sm:$0xff]
    %v209 = vld [vmem:[#allocation5 + $0x160] sm:$0xff]
    %v210 = vld [vmem:[#allocation5 + $0x168] sm:$0xff]
    %v211 = vld [vmem:[#allocation5 + $0x170] sm:$0xff]
    %v212 = vld [vmem:[#allocation5 + $0x178] sm:$0xff]
    %v213 = vld [vmem:[#allocation5 + $0x180] sm:$0xff]
    %v214 = vld [vmem:[#allocation5 + $0x188] sm:$0xff]
    %v215 = vld [vmem:[#allocation5 + $0x190] sm:$0xff]
    %v216 = vld [vmem:[#allocation5 + $0x198] sm:$0xff]
    %v217 = vld [vmem:[#allocation5 + $0x1a0] sm:$0xff]
    %v218 = vld [vmem:[#allocation5 + $0x1a8] sm:$0xff]
    %v219 = vld [vmem:[#allocation5 + $0x1b0] sm:$0xff]
    %v220 = vld [vmem:[#allocation5 + $0x1b8] sm:$0xff]
    %v221 = vld [vmem:[#allocation5 + $0x1c0] sm:$0xff]
    %v222 = vld [vmem:[#allocation5 + $0x1c8] sm:$0xff]
    %v223 = vld [vmem:[#allocation5 + $0x1d0] sm:$0xff]
    %v224 = vld [vmem:[#allocation5 + $0x1d8] sm:$0xff]
    %v225 = vld [vmem:[#allocation5 + $0x1e0] sm:$0xff]
    %v226 = vld [vmem:[#allocation5 + $0x1e8] sm:$0xff]
    %v227 = vld [vmem:[#allocation5 + $0x1f0] sm:$0xff]
    %v228 = vld [vmem:[#allocation5 + $0x1f8] sm:$0xff]
    %v229 = vld [vmem:[#allocation5 + $0x200] sm:$0xff]
    %v230 = vld [vmem:[#allocation5 + $0x208] sm:$0xff]
    %v231 = vld [vmem:[#allocation5 + $0x210] sm:$0xff]
    %v232 = vld [vmem:[#allocation5 + $0x218] sm:$0xff]
    %v233 = vld [vmem:[#allocation5 + $0x220] sm:$0xff]
    %v234 = vld [vmem:[#allocation5 + $0x228] sm:$0xff]
    %v235 = vld [vmem:[#allocation5 + $0x230] sm:$0xff]
    %v236 = vld [vmem:[#allocation5 + $0x238] sm:$0xff]
    %v237 = vld [vmem:[#allocation5 + $0x240] sm:$0xff]
    %v238 = vld [vmem:[#allocation5 + $0x248] sm:$0xff]
    %v239 = vld [vmem:[#allocation5 + $0x250] sm:$0xff]
    %v240 = vld [vmem:[#allocation5 + $0x258] sm:$0xff]
    %v241 = vld [vmem:[#allocation5 + $0x260] sm:$0xff]
    %v242 = vld [vmem:[#allocation5 + $0x268] sm:$0xff]
    %v243 = vld [vmem:[#allocation5 + $0x270] sm:$0xff]
    %v244 = vld [vmem:[#allocation5 + $0x278] sm:$0xff]
    %v245 = vld [vmem:[#allocation5 + $0x280] sm:$0xff]
    %v246 = vld [vmem:[#allocation5 + $0x288] sm:$0xff]
    %v247 = vld [vmem:[#allocation5 + $0x290] sm:$0xff]
    %v248 = vld [vmem:[#allocation5 + $0x298] sm:$0xff]
    %v249 = vld [vmem:[#allocation5 + $0x2a0] sm:$0xff]
    %v250 = vld [vmem:[#allocation5 + $0x2a8] sm:$0xff]
    %v251 = vld [vmem:[#allocation5 + $0x2b0] sm:$0xff]
    %v252 = vld [vmem:[#allocation5 + $0x2b8] sm:$0xff]
    %v253 = vld [vmem:[#allocation5 + $0x2c0] sm:$0xff]
    %v254 = vld [vmem:[#allocation5 + $0x2c8] sm:$0xff]
    %v255 = vld [vmem:[#allocation5 + $0x2d0] sm:$0xff]
    %v256 = vld [vmem:[#allocation5 + $0x2d8] sm:$0xff]
    %v257 = vld [vmem:[#allocation5 + $0x2e0] sm:$0xff]
    %v258 = vld [vmem:[#allocation5 + $0x2e8] sm:$0xff]
    %v259 = vld [vmem:[#allocation5 + $0x2f0] sm:$0xff]
    %v260 = vld [vmem:[#allocation5 + $0x2f8] sm:$0xff]
    %v261 = vld [vmem:[#allocation5 + $0x300] sm:$0xff]
    %v262 = vld [vmem:[#allocation5 + $0x308] sm:$0xff]
    %v263 = vld [vmem:[#allocation5 + $0x310] sm:$0xff]
    %v264 = vld [vmem:[#allocation5 + $0x318] sm:$0xff]
    %v265 = vld [vmem:[#allocation5 + $0x320] sm:$0xff]
    %v266 = vld [vmem:[#allocation5 + $0x328] sm:$0xff]
    %v267 = vld [vmem:[#allocation5 + $0x330] sm:$0xff]
    %v268 = vld [vmem:[#allocation5 + $0x338] sm:$0xff]
    %v269 = vld [vmem:[#allocation5 + $0x340] sm:$0xff]
    %v270 = vld [vmem:[#allocation5 + $0x348] sm:$0xff]
    %v271 = vld [vmem:[#allocation5 + $0x350] sm:$0xff]
    %v272 = vld [vmem:[#allocation5 + $0x358] sm:$0xff]
    %v273 = vld [vmem:[#allocation5 + $0x360] sm:$0xff]
    %v274 = vld [vmem:[#allocation5 + $0x368] sm:$0xff]
    %v275 = vld [vmem:[#allocation5 + $0x370] sm:$0xff]
    %v276 = vld [vmem:[#allocation5 + $0x378] sm:$0xff]
    %v277 = vld [vmem:[#allocation5 + $0x380] sm:$0xff]
    %v278 = vld [vmem:[#allocation5 + $0x388] sm:$0xff]
    %v279 = vld [vmem:[#allocation5 + $0x390] sm:$0xff]
    %v280 = vld [vmem:[#allocation5 + $0x398] sm:$0xff]
    %v281 = vld [vmem:[#allocation5 + $0x3a0] sm:$0xff]
    %v282 = vld [vmem:[#allocation5 + $0x3a8] sm:$0xff]
    %v283 = vld [vmem:[#allocation5 + $0x3b0] sm:$0xff]
    %v284 = vld [vmem:[#allocation5 + $0x3b8] sm:$0xff]
    %v285 = vld [vmem:[#allocation5 + $0x3c0] sm:$0xff]
    %v286 = vld [vmem:[#allocation5 + $0x3c8] sm:$0xff]
    %v287 = vld [vmem:[#allocation5 + $0x3d0] sm:$0xff]
    %v288 = vld [vmem:[#allocation5 + $0x3d8] sm:$0xff]
    %v289 = vld [vmem:[#allocation5 + $0x3e0] sm:$0xff]
    %v290 = vld [vmem:[#allocation5 + $0x3e8] sm:$0xff]
    %v291 = vld [vmem:[#allocation5 + $0x3f0] sm:$0xff]
    %v292 = vld [vmem:[#allocation5 + $0x3f8] sm:$0xff]
    %v293 = vld [vmem:[#allocation5 + $0x400] sm:$0xff]
    %v294 = vld [vmem:[#allocation5 + $0x408] sm:$0xff]
    %v295 = vld [vmem:[#allocation5 + $0x410] sm:$0xff]
    %v296 = vld [vmem:[#allocation5 + $0x418] sm:$0xff]
    %v297 = vld [vmem:[#allocation5 + $0x420] sm:$0xff]
    %v298 = vld [vmem:[#allocation5 + $0x428] sm:$0xff]
    %v299 = vld [vmem:[#allocation5 + $0x430] sm:$0xff]
    %v300 = vld [vmem:[#allocation5 + $0x438] sm:$0xff]
    %v301 = vld [vmem:[#allocation5 + $0x440] sm:$0xff]
    %v302 = vld [vmem:[#allocation5 + $0x448] sm:$0xff]
    %v303 = vld [vmem:[#allocation5 + $0x450] sm:$0xff]
    %v304 = vld [vmem:[#allocation5 + $0x458] sm:$0xff]
    %v305 = vld [vmem:[#allocation5 + $0x460] sm:$0xff]
    %v306 = vld [vmem:[#allocation5 + $0x468] sm:$0xff]
    %v307 = vld [vmem:[#allocation5 + $0x470] sm:$0xff]
    %v308 = vld [vmem:[#allocation5 + $0x478] sm:$0xff]
    %v309 = vld [vmem:[#allocation5 + $0x480] sm:$0xff]
    %v310 = vld [vmem:[#allocation5 + $0x488] sm:$0xff]
    %v311 = vld [vmem:[#allocation5 + $0x490] sm:$0xff]
    %v312 = vld [vmem:[#allocation5 + $0x498] sm:$0xff]
    %v313 = vld [vmem:[#allocation5 + $0x4a0] sm:$0xff]
    %v314 = vld [vmem:[#allocation5 + $0x4a8] sm:$0xff]
    %v315 = vld [vmem:[#allocation5 + $0x4b0] sm:$0xff]
    %v316 = vld [vmem:[#allocation5 + $0x4b8] sm:$0xff]
    %v317 = vld [vmem:[#allocation5 + $0x4c0] sm:$0xff]
    %v318 = vld [vmem:[#allocation5 + $0x4c8] sm:$0xff]
    %v319 = vld [vmem:[#allocation5 + $0x4d0] sm:$0xff]
    %v320 = vld [vmem:[#allocation5 + $0x4d8] sm:$0xff]
    %v321 = vld [vmem:[#allocation5 + $0x4e0] sm:$0xff]
    %v322 = vld [vmem:[#allocation5 + $0x4e8] sm:$0xff]
    %v323 = vld [vmem:[#allocation5 + $0x4f0] sm:$0xff]
    %v324 = vld [vmem:[#allocation5 + $0x4f8] sm:$0xff]
    %v325 = vld [vmem:[#allocation5 + $0x500] sm:$0xff]
    %v326 = vld [vmem:[#allocation5 + $0x508] sm:$0xff]
    %v327 = vld [vmem:[#allocation5 + $0x510] sm:$0xff]
    %v328 = vld [vmem:[#allocation5 + $0x518] sm:$0xff]
    %v329 = vld [vmem:[#allocation5 + $0x520] sm:$0xff]
    %v330 = vld [vmem:[#allocation5 + $0x528] sm:$0xff]
    %v331 = vld [vmem:[#allocation5 + $0x530] sm:$0xff]
    %v332 = vld [vmem:[#allocation5 + $0x538] sm:$0xff]
    %v333 = vld [vmem:[#allocation5 + $0x540] sm:$0xff]
    %v334 = vld [vmem:[#allocation5 + $0x548] sm:$0xff]
    %v335 = vld [vmem:[#allocation5 + $0x550] sm:$0xff]
    %v336 = vld [vmem:[#allocation5 + $0x558] sm:$0xff]
    %v337 = vld [vmem:[#allocation5 + $0x560] sm:$0xff]
    %v338 = vld [vmem:[#allocation5 + $0x568] sm:$0xff]
    %v339 = vld [vmem:[#allocation5 + $0x570] sm:$0xff]
    %v340 = vld [vmem:[#allocation5 + $0x578] sm:$0xff]
    %v341 = vld [vmem:[#allocation5 + $0x580] sm:$0xff]
    %v342 = vld [vmem:[#allocation5 + $0x588] sm:$0xff]
    %v343 = vld [vmem:[#allocation5 + $0x590] sm:$0xff]
    %v344 = vld [vmem:[#allocation5 + $0x598] sm:$0xff]
    %v345 = vld [vmem:[#allocation5 + $0x5a0] sm:$0xff]
    %v346 = vld [vmem:[#allocation5 + $0x5a8] sm:$0xff]
    %v347 = vld [vmem:[#allocation5 + $0x5b0] sm:$0xff]
    %v348 = vld [vmem:[#allocation5 + $0x5b8] sm:$0xff]
    %v349 = vld [vmem:[#allocation5 + $0x5c0] sm:$0xff]
    %v350 = vld [vmem:[#allocation5 + $0x5c8] sm:$0xff]
    %v351 = vld [vmem:[#allocation5 + $0x5d0] sm:$0xff]
    %v352 = vld [vmem:[#allocation5 + $0x5d8] sm:$0xff]
    %v353 = vld [vmem:[#allocation5 + $0x5e0] sm:$0xff]
    %v354 = vld [vmem:[#allocation5 + $0x5e8] sm:$0xff]
    %v355 = vld [vmem:[#allocation5 + $0x5f0] sm:$0xff]
    %v356 = vld [vmem:[#allocation5 + $0x5f8] sm:$0xff]
    %v357 = vld [vmem:[#allocation5 + $0x600] sm:$0xff]
    %v358 = vld [vmem:[#allocation5 + $0x608] sm:$0xff]
    %v359 = vld [vmem:[#allocation5 + $0x610] sm:$0xff]
    %v360 = vld [vmem:[#allocation5 + $0x618] sm:$0xff]
    %v361 = vld [vmem:[#allocation5 + $0x620] sm:$0xff]
    %v362 = vld [vmem:[#allocation5 + $0x628] sm:$0xff]
    %v363 = vld [vmem:[#allocation5 + $0x630] sm:$0xff]
    %v364 = vld [vmem:[#allocation5 + $0x638] sm:$0xff]
    %v365 = vld [vmem:[#allocation5 + $0x640] sm:$0xff]
    %v366 = vld [vmem:[#allocation5 + $0x648] sm:$0xff]
    %v367 = vld [vmem:[#allocation5 + $0x650] sm:$0xff]
    %v368 = vld [vmem:[#allocation5 + $0x658] sm:$0xff]
    %v369 = vld [vmem:[#allocation5 + $0x660] sm:$0xff]
    %v370 = vld [vmem:[#allocation5 + $0x668] sm:$0xff]
    %v371 = vld [vmem:[#allocation5 + $0x670] sm:$0xff]
    %v372 = vld [vmem:[#allocation5 + $0x678] sm:$0xff]
    %v373 = vld [vmem:[#allocation5 + $0x680] sm:$0xff]
    %v374 = vld [vmem:[#allocation5 + $0x688] sm:$0xff]
    %v375 = vld [vmem:[#allocation5 + $0x690] sm:$0xff]
    %v376 = vld [vmem:[#allocation5 + $0x698] sm:$0xff]
    %v377 = vld [vmem:[#allocation5 + $0x6a0] sm:$0xff]
    %v378 = vld [vmem:[#allocation5 + $0x6a8] sm:$0xff]
    %v379 = vld [vmem:[#allocation5 + $0x6b0] sm:$0xff]
    %v380 = vld [vmem:[#allocation5 + $0x6b8] sm:$0xff]
    %v381 = vld [vmem:[#allocation5 + $0x6c0] sm:$0xff]
    %v382 = vld [vmem:[#allocation5 + $0x6c8] sm:$0xff]
    %v383 = vld [vmem:[#allocation5 + $0x6d0] sm:$0xff]
    %v384 = vld [vmem:[#allocation5 + $0x6d8] sm:$0xff]
    %v385 = vld [vmem:[#allocation5 + $0x6e0] sm:$0xff]
    %v386 = vld [vmem:[#allocation5 + $0x6e8] sm:$0xff]
    %v387 = vld [vmem:[#allocation5 + $0x6f0] sm:$0xff]
    %v388 = vld [vmem:[#allocation5 + $0x6f8] sm:$0xff]
    %v389 = vld [vmem:[#allocation5 + $0x700] sm:$0xff]
    %v390 = vld [vmem:[#allocation5 + $0x708] sm:$0xff]
    %v391 = vld [vmem:[#allocation5 + $0x710] sm:$0xff]
    %v392 = vld [vmem:[#allocation5 + $0x718] sm:$0xff]
    %v393 = vld [vmem:[#allocation5 + $0x720] sm:$0xff]
    %v394 = vld [vmem:[#allocation5 + $0x728] sm:$0xff]
    %v395 = vld [vmem:[#allocation5 + $0x730] sm:$0xff]
    %v396 = vld [vmem:[#allocation5 + $0x738] sm:$0xff]
    %v397 = vld [vmem:[#allocation5 + $0x740] sm:$0xff]
    %v398 = vld [vmem:[#allocation5 + $0x748] sm:$0xff]
    %v399 = vld [vmem:[#allocation5 + $0x750] sm:$0xff]
    %v400 = vld [vmem:[#allocation5 + $0x758] sm:$0xff]
    %v401 = vld [vmem:[#allocation5 + $0x760] sm:$0xff]
    %v402 = vld [vmem:[#allocation5 + $0x768] sm:$0xff]
    %v403 = vld [vmem:[#allocation5 + $0x770] sm:$0xff]
    %v404 = vld [vmem:[#allocation5 + $0x778] sm:$0xff]
    %v405 = vld [vmem:[#allocation5 + $0x780] sm:$0xff]
    %v406 = vld [vmem:[#allocation5 + $0x788] sm:$0xff]
    %v407 = vld [vmem:[#allocation5 + $0x790] sm:$0xff]
    %v408 = vld [vmem:[#allocation5 + $0x798] sm:$0xff]
    %v409 = vld [vmem:[#allocation5 + $0x7a0] sm:$0xff]
    %v410 = vld [vmem:[#allocation5 + $0x7a8] sm:$0xff]
    %v411 = vld [vmem:[#allocation5 + $0x7b0] sm:$0xff]
    %v412 = vld [vmem:[#allocation5 + $0x7b8] sm:$0xff]
    %v413 = vld [vmem:[#allocation5 + $0x7c0] sm:$0xff]
    %v414 = vld [vmem:[#allocation5 + $0x7c8] sm:$0xff]
    %v415 = vld [vmem:[#allocation5 + $0x7d0] sm:$0xff]
    %v416 = vld [vmem:[#allocation5 + $0x7d8] sm:$0xff]
    %v417 = vld [vmem:[#allocation5 + $0x7e0] sm:$0xff]
    %v418 = vld [vmem:[#allocation5 + $0x7e8] sm:$0xff]
    %v419 = vld [vmem:[#allocation5 + $0x7f0] sm:$0xff]
    %v420 = vld [vmem:[#allocation5 + $0x7f8] sm:$0xff]
    %v421 = vld [vmem:[#allocation5 + $0x800] sm:$0xff]
    %v422 = vld [vmem:[#allocation5 + $0x808] sm:$0xff]
    %v423 = vld [vmem:[#allocation5 + $0x810] sm:$0xff]
    %v424 = vld [vmem:[#allocation5 + $0x818] sm:$0xff]
    %v425 = vld [vmem:[#allocation5 + $0x820] sm:$0xff]
    %v426 = vld [vmem:[#allocation5 + $0x828] sm:$0xff]
    %v427 = vld [vmem:[#allocation5 + $0x830] sm:$0xff]
    %v428 = vld [vmem:[#allocation5 + $0x838] sm:$0xff]
    %v429 = vld [vmem:[#allocation5 + $0x840] sm:$0xff]
    %v430 = vld [vmem:[#allocation5 + $0x848] sm:$0xff]
    %v431 = vld [vmem:[#allocation5 + $0x850] sm:$0xff]
    %v432 = vld [vmem:[#allocation5 + $0x858] sm:$0xff]
    %v433 = vld [vmem:[#allocation5 + $0x860] sm:$0xff]
    %v434 = vld [vmem:[#allocation5 + $0x868] sm:$0xff]
    %v435 = vld [vmem:[#allocation5 + $0x870] sm:$0xff]
    %v436 = vld [vmem:[#allocation5 + $0x878] sm:$0xff]
    %v437 = vld [vmem:[#allocation5 + $0x880] sm:$0xff]
    %v438 = vld [vmem:[#allocation5 + $0x888] sm:$0xff]
    %v439 = vld [vmem:[#allocation5 + $0x890] sm:$0xff]
    %v440 = vld [vmem:[#allocation5 + $0x898] sm:$0xff]
    %v441 = vld [vmem:[#allocation5 + $0x8a0] sm:$0xff]
    %v442 = vld [vmem:[#allocation5 + $0x8a8] sm:$0xff]
    %v443 = vld [vmem:[#allocation5 + $0x8b0] sm:$0xff]
    %v444 = vld [vmem:[#allocation5 + $0x8b8] sm:$0xff]
    %v445 = vld [vmem:[#allocation5 + $0x8c0] sm:$0xff]
    %v446 = vld [vmem:[#allocation5 + $0x8c8] sm:$0xff]
    %v447 = vld [vmem:[#allocation5 + $0x8d0] sm:$0xff]
    %v448 = vld [vmem:[#allocation5 + $0x8d8] sm:$0xff]
    %v449 = vld [vmem:[#allocation5 + $0x8e0] sm:$0xff]
    %v450 = vld [vmem:[#allocation5 + $0x8e8] sm:$0xff]
    %v451 = vld [vmem:[#allocation5 + $0x8f0] sm:$0xff]
    %v452 = vld [vmem:[#allocation5 + $0x8f8] sm:$0xff]
    %v453 = vld [vmem:[#allocation5 + $0x900] sm:$0xff]
    %v454 = vld [vmem:[#allocation5 + $0x908] sm:$0xff]
    %v455 = vld [vmem:[#allocation5 + $0x910] sm:$0xff]
    %v456 = vld [vmem:[#allocation5 + $0x918] sm:$0xff]
    %v457 = vld [vmem:[#allocation5 + $0x920] sm:$0xff]
    %v458 = vld [vmem:[#allocation5 + $0x928] sm:$0xff]
    %v459 = vld [vmem:[#allocation5 + $0x930] sm:$0xff]
    %v460 = vld [vmem:[#allocation5 + $0x938] sm:$0xff]
    %v461 = vld [vmem:[#allocation5 + $0x940] sm:$0xff]
    %v462 = vld [vmem:[#allocation5 + $0x948] sm:$0xff]
    %v463 = vld [vmem:[#allocation5 + $0x950] sm:$0xff]
    %v464 = vld [vmem:[#allocation5 + $0x958] sm:$0xff]
    %v465 = vld [vmem:[#allocation5 + $0x960] sm:$0xff]
    %v466 = vld [vmem:[#allocation5 + $0x968] sm:$0xff]
    %v467 = vld [vmem:[#allocation5 + $0x970] sm:$0xff]
    %v468 = vld [vmem:[#allocation5 + $0x978] sm:$0xff]
    %v469 = vld [vmem:[#allocation5 + $0x980] sm:$0xff]
    %v470 = vld [vmem:[#allocation5 + $0x988] sm:$0xff]
    %v471 = vld [vmem:[#allocation5 + $0x990] sm:$0xff]
    %v472 = vld [vmem:[#allocation5 + $0x998] sm:$0xff]
    %v473 = vld [vmem:[#allocation5 + $0x9a0] sm:$0xff]
    %v474 = vld [vmem:[#allocation5 + $0x9a8] sm:$0xff]
    %v475 = vld [vmem:[#allocation5 + $0x9b0] sm:$0xff]
    %v476 = vld [vmem:[#allocation5 + $0x9b8] sm:$0xff]
    %v477 = vld [vmem:[#allocation5 + $0x9c0] sm:$0xff]
    %v478 = vld [vmem:[#allocation5 + $0x9c8] sm:$0xff]
    %v479 = vld [vmem:[#allocation5 + $0x9d0] sm:$0xff]
    %v480 = vld [vmem:[#allocation5 + $0x9d8] sm:$0xff]
    %v481 = vld [vmem:[#allocation5 + $0x9e0] sm:$0xff]
    %v482 = vld [vmem:[#allocation5 + $0x9e8] sm:$0xff]
    %v483 = vld [vmem:[#allocation5 + $0x9f0] sm:$0xff]
    %v484 = vld [vmem:[#allocation5 + $0x9f8] sm:$0xff]
    %v485 = vld [vmem:[#allocation5 + $0xa00] sm:$0xff]
    %v486 = vld [vmem:[#allocation5 + $0xa08] sm:$0xff]
    %v487 = vld [vmem:[#allocation5 + $0xa10] sm:$0xff]
    %v488 = vld [vmem:[#allocation5 + $0xa18] sm:$0xff]
    %v489 = vld [vmem:[#allocation5 + $0xa20] sm:$0xff]
    %v490 = vld [vmem:[#allocation5 + $0xa28] sm:$0xff]
    %v491 = vld [vmem:[#allocation5 + $0xa30] sm:$0xff]
    %v492 = vld [vmem:[#allocation5 + $0xa38] sm:$0xff]
    %v493 = vld [vmem:[#allocation5 + $0xa40] sm:$0xff]
    %v494 = vld [vmem:[#allocation5 + $0xa48] sm:$0xff]
    %v495 = vld [vmem:[#allocation5 + $0xa50] sm:$0xff]
    %v496 = vld [vmem:[#allocation5 + $0xa58] sm:$0xff]
    %v497 = vld [vmem:[#allocation5 + $0xa60] sm:$0xff]
    %v498 = vld [vmem:[#allocation5 + $0xa68] sm:$0xff]
    %v499 = vld [vmem:[#allocation5 + $0xa70] sm:$0xff]
    %v500 = vld [vmem:[#allocation5 + $0xa78] sm:$0xff]
    %v501 = vld [vmem:[#allocation5 + $0xa80] sm:$0xff]
    %v502 = vld [vmem:[#allocation5 + $0xa88] sm:$0xff]
    %v503 = vld [vmem:[#allocation5 + $0xa90] sm:$0xff]
    %v504 = vld [vmem:[#allocation5 + $0xa98] sm:$0xff]
    %v505 = vld [vmem:[#allocation5 + $0xaa0] sm:$0xff]
    %v506 = vld [vmem:[#allocation5 + $0xaa8] sm:$0xff]
    %v507 = vld [vmem:[#allocation5 + $0xab0] sm:$0xff]
    %v508 = vld [vmem:[#allocation5 + $0xab8] sm:$0xff]
    %v509 = vld [vmem:[#allocation5 + $0xac0] sm:$0xff]
    %v510 = vld [vmem:[#allocation5 + $0xac8] sm:$0xff]
    %v511 = vld [vmem:[#allocation5 + $0xad0] sm:$0xff]
    %v512 = vld [vmem:[#allocation5 + $0xad8] sm:$0xff]
    %v513 = vld [vmem:[#allocation5 + $0xae0] sm:$0xff]
    %v514 = vld [vmem:[#allocation5 + $0xae8] sm:$0xff]
    %v515 = vld [vmem:[#allocation5 + $0xaf0] sm:$0xff]
    %v516 = vld [vmem:[#allocation5 + $0xaf8] sm:$0xff]
    %v517 = vld [vmem:[#allocation5 + $0xb00] sm:$0xff]
    %v518 = vld [vmem:[#allocation5 + $0xb08] sm:$0xff]
    %v519 = vld [vmem:[#allocation5 + $0xb10] sm:$0xff]
    %v520 = vld [vmem:[#allocation5 + $0xb18] sm:$0xff]
    %v521 = vld [vmem:[#allocation5 + $0xb20] sm:$0xff]
    %v522 = vld [vmem:[#allocation5 + $0xb28] sm:$0xff]
    %v523 = vld [vmem:[#allocation5 + $0xb30] sm:$0xff]
    %v524 = vld [vmem:[#allocation5 + $0xb38] sm:$0xff]
    %v525 = vld [vmem:[#allocation5 + $0xb40] sm:$0xff]
    %v526 = vld [vmem:[#allocation5 + $0xb48] sm:$0xff]
    %v527 = vld [vmem:[#allocation5 + $0xb50] sm:$0xff]
    %v528 = vld [vmem:[#allocation5 + $0xb58] sm:$0xff]
    %v529 = vld [vmem:[#allocation5 + $0xb60] sm:$0xff]
    %v530 = vld [vmem:[#allocation5 + $0xb68] sm:$0xff]
    %v531 = vld [vmem:[#allocation5 + $0xb70] sm:$0xff]
    %v532 = vld [vmem:[#allocation5 + $0xb78] sm:$0xff]
    %v533 = vld [vmem:[#allocation5 + $0xb80] sm:$0xff]
    %v534 = vld [vmem:[#allocation5 + $0xb88] sm:$0xff]
    %v535 = vld [vmem:[#allocation5 + $0xb90] sm:$0xff]
    %v536 = vld [vmem:[#allocation5 + $0xb98] sm:$0xff]
    %v537 = vld [vmem:[#allocation5 + $0xba0] sm:$0xff]
    %v538 = vld [vmem:[#allocation5 + $0xba8] sm:$0xff]
    %v539 = vld [vmem:[#allocation5 + $0xbb0] sm:$0xff]
    %v540 = vld [vmem:[#allocation5 + $0xbb8] sm:$0xff]
    %v541 = vld [vmem:[#allocation5 + $0xbc0] sm:$0xff]
    %v542 = vld [vmem:[#allocation5 + $0xbc8] sm:$0xff]
    %v543 = vld [vmem:[#allocation5 + $0xbd0] sm:$0xff]
    %v544 = vld [vmem:[#allocation5 + $0xbd8] sm:$0xff]
    %v545 = vld [vmem:[#allocation5 + $0xbe0] sm:$0xff]
    %v546 = vld [vmem:[#allocation5 + $0xbe8] sm:$0xff]
    %v547 = vld [vmem:[#allocation5 + $0xbf0] sm:$0xff]
    %v548 = vld [vmem:[#allocation5 + $0xbf8] sm:$0xff]
    %v549 = vld [vmem:[#allocation5 + $0xc00] sm:$0xff]
    %v550 = vld [vmem:[#allocation5 + $0xc08] sm:$0xff]
    %v551 = vld [vmem:[#allocation5 + $0xc10] sm:$0xff]
    %v552 = vld [vmem:[#allocation5 + $0xc18] sm:$0xff]
    %v553 = vld [vmem:[#allocation5 + $0xc20] sm:$0xff]
    %v554 = vld [vmem:[#allocation5 + $0xc28] sm:$0xff]
    %v555 = vld [vmem:[#allocation5 + $0xc30] sm:$0xff]
    %v556 = vld [vmem:[#allocation5 + $0xc38] sm:$0xff]
    %v557 = vld [vmem:[#allocation5 + $0xc40] sm:$0xff]
    %v558 = vld [vmem:[#allocation5 + $0xc48] sm:$0xff]
    %v559 = vld [vmem:[#allocation5 + $0xc50] sm:$0xff]
    %v560 = vld [vmem:[#allocation5 + $0xc58] sm:$0xff]
    %v561 = vld [vmem:[#allocation5 + $0xc60] sm:$0xff]
    %v562 = vld [vmem:[#allocation5 + $0xc68] sm:$0xff]
    %v563 = vld [vmem:[#allocation5 + $0xc70] sm:$0xff]
    %v564 = vld [vmem:[#allocation5 + $0xc78] sm:$0xff]
    %v565 = vld [vmem:[#allocation5 + $0xc80] sm:$0xff]
    %v566 = vld [vmem:[#allocation5 + $0xc88] sm:$0xff]
    %v567 = vld [vmem:[#allocation5 + $0xc90] sm:$0xff]
    %v568 = vld [vmem:[#allocation5 + $0xc98] sm:$0xff]
    %v569 = vld [vmem:[#allocation5 + $0xca0] sm:$0xff]
    %v570 = vld [vmem:[#allocation5 + $0xca8] sm:$0xff]
    %v571 = vld [vmem:[#allocation5 + $0xcb0] sm:$0xff]
    %v572 = vld [vmem:[#allocation5 + $0xcb8] sm:$0xff]
    %v573 = vld [vmem:[#allocation5 + $0xcc0] sm:$0xff]
    %v574 = vld [vmem:[#allocation5 + $0xcc8] sm:$0xff]
    %v575 = vld [vmem:[#allocation5 + $0xcd0] sm:$0xff]
    %v576 = vld [vmem:[#allocation5 + $0xcd8] sm:$0xff]
    %v577 = vld [vmem:[#allocation5 + $0xce0] sm:$0xff]
    %v578 = vld [vmem:[#allocation5 + $0xce8] sm:$0xff]
    %v579 = vld [vmem:[#allocation5 + $0xcf0] sm:$0xff]
    %v580 = vld [vmem:[#allocation5 + $0xcf8] sm:$0xff]
    %v581 = vld [vmem:[#allocation5 + $0xd00] sm:$0xff]
    %v582 = vld [vmem:[#allocation5 + $0xd08] sm:$0xff]
    %v583 = vld [vmem:[#allocation5 + $0xd10] sm:$0xff]
    %v584 = vld [vmem:[#allocation5 + $0xd18] sm:$0xff]
    %v585 = vld [vmem:[#allocation5 + $0xd20] sm:$0xff]
    %v586 = vld [vmem:[#allocation5 + $0xd28] sm:$0xff]
    %v587 = vld [vmem:[#allocation5 + $0xd30] sm:$0xff]
    %v588 = vld [vmem:[#allocation5 + $0xd38] sm:$0xff]
    %v589 = vld [vmem:[#allocation5 + $0xd40] sm:$0xff]
    %v590 = vld [vmem:[#allocation5 + $0xd48] sm:$0xff]
    %v591 = vld [vmem:[#allocation5 + $0xd50] sm:$0xff]
    %v592 = vld [vmem:[#allocation5 + $0xd58] sm:$0xff]
    %v593 = vld [vmem:[#allocation5 + $0xd60] sm:$0xff]
    %v594 = vld [vmem:[#allocation5 + $0xd68] sm:$0xff]
    %v595 = vld [vmem:[#allocation5 + $0xd70] sm:$0xff]
    %v596 = vld [vmem:[#allocation5 + $0xd78] sm:$0xff]
    %v597 = vld [vmem:[#allocation5 + $0xd80] sm:$0xff]
    %v598 = vld [vmem:[#allocation5 + $0xd88] sm:$0xff]
    %v599 = vld [vmem:[#allocation5 + $0xd90] sm:$0xff]
    %v600 = vld [vmem:[#allocation5 + $0xd98] sm:$0xff]
    %v601 = vld [vmem:[#allocation5 + $0xda0] sm:$0xff]
    %v602 = vld [vmem:[#allocation5 + $0xda8] sm:$0xff]
    %v603 = vld [vmem:[#allocation5 + $0xdb0] sm:$0xff]
    %v604 = vld [vmem:[#allocation5 + $0xdb8] sm:$0xff]
    %v605 = vld [vmem:[#allocation5 + $0xdc0] sm:$0xff]
    %v606 = vld [vmem:[#allocation5 + $0xdc8] sm:$0xff]
    %v607 = vld [vmem:[#allocation5 + $0xdd0] sm:$0xff]
    %v608 = vld [vmem:[#allocation5 + $0xdd8] sm:$0xff]
    %v609 = vld [vmem:[#allocation5 + $0xde0] sm:$0xff]
    %v610 = vld [vmem:[#allocation5 + $0xde8] sm:$0xff]
    %v611 = vld [vmem:[#allocation5 + $0xdf0] sm:$0xff]
    %v612 = vld [vmem:[#allocation5 + $0xdf8] sm:$0xff]
    %v613 = vld [vmem:[#allocation5 + $0xe00] sm:$0xff]
    %v614 = vld [vmem:[#allocation5 + $0xe08] sm:$0xff]
    %v615 = vld [vmem:[#allocation5 + $0xe10] sm:$0xff]
    %v616 = vld [vmem:[#allocation5 + $0xe18] sm:$0xff]
    %v617 = vld [vmem:[#allocation5 + $0xe20] sm:$0xff]
    %v618 = vld [vmem:[#allocation5 + $0xe28] sm:$0xff]
    %v619 = vld [vmem:[#allocation5 + $0xe30] sm:$0xff]
    %v620 = vld [vmem:[#allocation5 + $0xe38] sm:$0xff]
    %v621 = vld [vmem:[#allocation5 + $0xe40] sm:$0xff]
    %v622 = vld [vmem:[#allocation5 + $0xe48] sm:$0xff]
    %v623 = vld [vmem:[#allocation5 + $0xe50] sm:$0xff]
    %v624 = vld [vmem:[#allocation5 + $0xe58] sm:$0xff]
    %v625 = vld [vmem:[#allocation5 + $0xe60] sm:$0xff]
    %v626 = vld [vmem:[#allocation5 + $0xe68] sm:$0xff]
    %v627 = vld [vmem:[#allocation5 + $0xe70] sm:$0xff]
    %v628 = vld [vmem:[#allocation5 + $0xe78] sm:$0xff]
    %v629 = vld [vmem:[#allocation5 + $0xe80] sm:$0xff]
    %v630 = vld [vmem:[#allocation5 + $0xe88] sm:$0xff]
    %v631 = vld [vmem:[#allocation5 + $0xe90] sm:$0xff]
    %v632 = vld [vmem:[#allocation5 + $0xe98] sm:$0xff]
    %v633 = vld [vmem:[#allocation5 + $0xea0] sm:$0xff]
    %v634 = vld [vmem:[#allocation5 + $0xea8] sm:$0xff]
    %v635 = vld [vmem:[#allocation5 + $0xeb0] sm:$0xff]
    %v636 = vld [vmem:[#allocation5 + $0xeb8] sm:$0xff]
    %v637 = vld [vmem:[#allocation5 + $0xec0] sm:$0xff]
    %v638 = vld [vmem:[#allocation5 + $0xec8] sm:$0xff]
    %v639 = vld [vmem:[#allocation5 + $0xed0] sm:$0xff]
    %v640 = vld [vmem:[#allocation5 + $0xed8] sm:$0xff]
    %v641 = vld [vmem:[#allocation5 + $0xee0] sm:$0xff]
    %v642 = vld [vmem:[#allocation5 + $0xee8] sm:$0xff]
    %v643 = vld [vmem:[#allocation5 + $0xef0] sm:$0xff]
    %v644 = vld [vmem:[#allocation5 + $0xef8] sm:$0xff]
    %v645 = vld [vmem:[#allocation5 + $0xf00] sm:$0xff]
    %v646 = vld [vmem:[#allocation5 + $0xf08] sm:$0xff]
    %v647 = vld [vmem:[#allocation5 + $0xf10] sm:$0xff]
    %v648 = vld [vmem:[#allocation5 + $0xf18] sm:$0xff]
    %v649 = vld [vmem:[#allocation5 + $0xf20] sm:$0xff]
    %v650 = vld [vmem:[#allocation5 + $0xf28] sm:$0xff]
    %v651 = vld [vmem:[#allocation5 + $0xf30] sm:$0xff]
    %v652 = vld [vmem:[#allocation5 + $0xf38] sm:$0xff]
    %v653 = vld [vmem:[#allocation5 + $0xf40] sm:$0xff]
    %v654 = vld [vmem:[#allocation5 + $0xf48] sm:$0xff]
    %v655 = vld [vmem:[#allocation5 + $0xf50] sm:$0xff]
    %v656 = vld [vmem:[#allocation5 + $0xf58] sm:$0xff]
    %v657 = vld [vmem:[#allocation5 + $0xf60] sm:$0xff]
    %v658 = vld [vmem:[#allocation5 + $0xf68] sm:$0xff]
    %v659 = vld [vmem:[#allocation5 + $0xf70] sm:$0xff]
    %v660 = vld [vmem:[#allocation5 + $0xf78] sm:$0xff]
    %v661 = vld [vmem:[#allocation5 + $0xf80] sm:$0xff]
    %v662 = vld [vmem:[#allocation5 + $0xf88] sm:$0xff]
    %v663 = vld [vmem:[#allocation5 + $0xf90] sm:$0xff]
    %v664 = vld [vmem:[#allocation5 + $0xf98] sm:$0xff]
    %v665 = vld [vmem:[#allocation5 + $0xfa0] sm:$0xff]
    %v666 = vld [vmem:[#allocation5 + $0xfa8] sm:$0xff]
    %v667 = vld [vmem:[#allocation5 + $0xfb0] sm:$0xff]
    %v668 = vld [vmem:[#allocation5 + $0xfb8] sm:$0xff]
    %v669 = vld [vmem:[#allocation5 + $0xfc0] sm:$0xff]
    %v670 = vld [vmem:[#allocation5 + $0xfc8] sm:$0xff]
    %v671 = vld [vmem:[#allocation5 + $0xfd0] sm:$0xff]
    %v672 = vld [vmem:[#allocation5 + $0xfd8] sm:$0xff]
    %v673 = vld [vmem:[#allocation5 + $0xfe0] sm:$0xff]
    %v674 = vld [vmem:[#allocation5 + $0xfe8] sm:$0xff]
    %v675 = vld [vmem:[#allocation5 + $0xff0] sm:$0xff]
    %v676 = vld [vmem:[#allocation5 + $0xff8] sm:$0xff]
    %v677 = vld [vmem:[#allocation7] sm:$0xf]
    %v679 = vlaneseq
    %v680 = vshrl.u32 %v679, 7
    %v681 = vsub.s32 0, %v680
    %v682 = vrot.slane %v677, %v681
    %v683 = vlaneseq
    %v684 = vshrl.u32 %v683, 7
    %v685 = vsub.s32 1, %v684
    %v686 = vrot.slane %v677, %v685
    %v687 = vlaneseq
    %v688 = vshrl.u32 %v687, 7
    %v689 = vsub.s32 2, %v688
    %v690 = vrot.slane %v677, %v689
    %v691 = vlaneseq
    %v692 = vshrl.u32 %v691, 7
    %v693 = vsub.s32 3, %v692
    %v694 = vrot.slane %v677, %v693
    %v1211 = vunpack.c.l.b16 %v165
    %v1212 = vunpack.c.h.b16 %v165
    %v1213 = vunpack.c.l.b16 %v166
    %v1214 = vunpack.c.h.b16 %v166
    %v1215 = vunpack.c.l.b16 %v167
    %v1216 = vunpack.c.h.b16 %v167
    %v1217 = vunpack.c.l.b16 %v168
    %v1218 = vunpack.c.h.b16 %v168
    %v1219 = vunpack.c.l.b16 %v169
    %v1220 = vunpack.c.h.b16 %v169
    %v1221 = vunpack.c.l.b16 %v170
    %v1222 = vunpack.c.h.b16 %v170
    %v1223 = vunpack.c.l.b16 %v171
    %v1224 = vunpack.c.h.b16 %v171
    %v1225 = vunpack.c.l.b16 %v172
    %v1226 = vunpack.c.h.b16 %v172
    %v1227 = vunpack.c.l.b16 %v173
    %v1228 = vunpack.c.h.b16 %v173
    %v1229 = vunpack.c.l.b16 %v174
    %v1230 = vunpack.c.h.b16 %v174
    %v1231 = vunpack.c.l.b16 %v175
    %v1232 = vunpack.c.h.b16 %v175
    %v1233 = vunpack.c.l.b16 %v176
    %v1234 = vunpack.c.h.b16 %v176
    %v1235 = vunpack.c.l.b16 %v177
    %v1236 = vunpack.c.h.b16 %v177
    %v1237 = vunpack.c.l.b16 %v178
    %v1238 = vunpack.c.h.b16 %v178
    %v1239 = vunpack.c.l.b16 %v179
    %v1240 = vunpack.c.h.b16 %v179
    %v1241 = vunpack.c.l.b16 %v180
    %v1242 = vunpack.c.h.b16 %v180
    %v1243 = vunpack.c.l.b16 %v181
    %v1244 = vunpack.c.h.b16 %v181
    %v1245 = vunpack.c.l.b16 %v182
    %v1246 = vunpack.c.h.b16 %v182
    %v1247 = vunpack.c.l.b16 %v183
    %v1248 = vunpack.c.h.b16 %v183
    %v1249 = vunpack.c.l.b16 %v184
    %v1250 = vunpack.c.h.b16 %v184
    %v1251 = vunpack.c.l.b16 %v185
    %v1252 = vunpack.c.h.b16 %v185
    %v1253 = vunpack.c.l.b16 %v186
    %v1254 = vunpack.c.h.b16 %v186
    %v1255 = vunpack.c.l.b16 %v187
    %v1256 = vunpack.c.h.b16 %v187
    %v1257 = vunpack.c.l.b16 %v188
    %v1258 = vunpack.c.h.b16 %v188
    %v1259 = vunpack.c.l.b16 %v189
    %v1260 = vunpack.c.h.b16 %v189
    %v1261 = vunpack.c.l.b16 %v190
    %v1262 = vunpack.c.h.b16 %v190
    %v1263 = vunpack.c.l.b16 %v191
    %v1264 = vunpack.c.h.b16 %v191
    %v1265 = vunpack.c.l.b16 %v192
    %v1266 = vunpack.c.h.b16 %v192
    %v1267 = vunpack.c.l.b16 %v193
    %v1268 = vunpack.c.h.b16 %v193
    %v1269 = vunpack.c.l.b16 %v194
    %v1270 = vunpack.c.h.b16 %v194
    %v1271 = vunpack.c.l.b16 %v195
    %v1272 = vunpack.c.h.b16 %v195
    %v1273 = vunpack.c.l.b16 %v196
    %v1274 = vunpack.c.h.b16 %v196
    %v1275 = vunpack.c.l.b16 %v197
    %v1276 = vunpack.c.h.b16 %v197
    %v1277 = vunpack.c.l.b16 %v198
    %v1278 = vunpack.c.h.b16 %v198
    %v1279 = vunpack.c.l.b16 %v199
    %v1280 = vunpack.c.h.b16 %v199
    %v1281 = vunpack.c.l.b16 %v200
    %v1282 = vunpack.c.h.b16 %v200
    %v1283 = vunpack.c.l.b16 %v201
    %v1284 = vunpack.c.h.b16 %v201
    %v1285 = vunpack.c.l.b16 %v202
    %v1286 = vunpack.c.h.b16 %v202
    %v1287 = vunpack.c.l.b16 %v203
    %v1288 = vunpack.c.h.b16 %v203
    %v1289 = vunpack.c.l.b16 %v204
    %v1290 = vunpack.c.h.b16 %v204
    %v1291 = vunpack.c.l.b16 %v205
    %v1292 = vunpack.c.h.b16 %v205
    %v1293 = vunpack.c.l.b16 %v206
    %v1294 = vunpack.c.h.b16 %v206
    %v1295 = vunpack.c.l.b16 %v207
    %v1296 = vunpack.c.h.b16 %v207
    %v1297 = vunpack.c.l.b16 %v208
    %v1298 = vunpack.c.h.b16 %v208
    %v1299 = vunpack.c.l.b16 %v209
    %v1300 = vunpack.c.h.b16 %v209
    %v1301 = vunpack.c.l.b16 %v210
    %v1302 = vunpack.c.h.b16 %v210
    %v1303 = vunpack.c.l.b16 %v211
    %v1304 = vunpack.c.h.b16 %v211
    %v1305 = vunpack.c.l.b16 %v212
    %v1306 = vunpack.c.h.b16 %v212
    %v1307 = vunpack.c.l.b16 %v213
    %v1308 = vunpack.c.h.b16 %v213
    %v1309 = vunpack.c.l.b16 %v214
    %v1310 = vunpack.c.h.b16 %v214
    %v1311 = vunpack.c.l.b16 %v215
    %v1312 = vunpack.c.h.b16 %v215
    %v1313 = vunpack.c.l.b16 %v216
    %v1314 = vunpack.c.h.b16 %v216
    %v1315 = vunpack.c.l.b16 %v217
    %v1316 = vunpack.c.h.b16 %v217
    %v1317 = vunpack.c.l.b16 %v218
    %v1318 = vunpack.c.h.b16 %v218
    %v1319 = vunpack.c.l.b16 %v219
    %v1320 = vunpack.c.h.b16 %v219
    %v1321 = vunpack.c.l.b16 %v220
    %v1322 = vunpack.c.h.b16 %v220
    %v1323 = vunpack.c.l.b16 %v221
    %v1324 = vunpack.c.h.b16 %v221
    %v1325 = vunpack.c.l.b16 %v222
    %v1326 = vunpack.c.h.b16 %v222
    %v1327 = vunpack.c.l.b16 %v223
    %v1328 = vunpack.c.h.b16 %v223
    %v1329 = vunpack.c.l.b16 %v224
    %v1330 = vunpack.c.h.b16 %v224
    %v1331 = vunpack.c.l.b16 %v225
    %v1332 = vunpack.c.h.b16 %v225
    %v1333 = vunpack.c.l.b16 %v226
    %v1334 = vunpack.c.h.b16 %v226
    %v1335 = vunpack.c.l.b16 %v227
    %v1336 = vunpack.c.h.b16 %v227
    %v1337 = vunpack.c.l.b16 %v228
    %v1338 = vunpack.c.h.b16 %v228
    %v1339 = vunpack.c.l.b16 %v229
    %v1340 = vunpack.c.h.b16 %v229
    %v1341 = vunpack.c.l.b16 %v230
    %v1342 = vunpack.c.h.b16 %v230
    %v1343 = vunpack.c.l.b16 %v231
    %v1344 = vunpack.c.h.b16 %v231
    %v1345 = vunpack.c.l.b16 %v232
    %v1346 = vunpack.c.h.b16 %v232
    %v1347 = vunpack.c.l.b16 %v233
    %v1348 = vunpack.c.h.b16 %v233
    %v1349 = vunpack.c.l.b16 %v234
    %v1350 = vunpack.c.h.b16 %v234
    %v1351 = vunpack.c.l.b16 %v235
    %v1352 = vunpack.c.h.b16 %v235
    %v1353 = vunpack.c.l.b16 %v236
    %v1354 = vunpack.c.h.b16 %v236
    %v1355 = vunpack.c.l.b16 %v237
    %v1356 = vunpack.c.h.b16 %v237
    %v1357 = vunpack.c.l.b16 %v238
    %v1358 = vunpack.c.h.b16 %v238
    %v1359 = vunpack.c.l.b16 %v239
    %v1360 = vunpack.c.h.b16 %v239
    %v1361 = vunpack.c.l.b16 %v240
    %v1362 = vunpack.c.h.b16 %v240
    %v1363 = vunpack.c.l.b16 %v241
    %v1364 = vunpack.c.h.b16 %v241
    %v1365 = vunpack.c.l.b16 %v242
    %v1366 = vunpack.c.h.b16 %v242
    %v1367 = vunpack.c.l.b16 %v243
    %v1368 = vunpack.c.h.b16 %v243
    %v1369 = vunpack.c.l.b16 %v244
    %v1370 = vunpack.c.h.b16 %v244
    %v1371 = vunpack.c.l.b16 %v245
    %v1372 = vunpack.c.h.b16 %v245
    %v1373 = vunpack.c.l.b16 %v246
    %v1374 = vunpack.c.h.b16 %v246
    %v1375 = vunpack.c.l.b16 %v247
    %v1376 = vunpack.c.h.b16 %v247
    %v1377 = vunpack.c.l.b16 %v248
    %v1378 = vunpack.c.h.b16 %v248
    %v1379 = vunpack.c.l.b16 %v249
    %v1380 = vunpack.c.h.b16 %v249
    %v1381 = vunpack.c.l.b16 %v250
    %v1382 = vunpack.c.h.b16 %v250
    %v1383 = vunpack.c.l.b16 %v251
    %v1384 = vunpack.c.h.b16 %v251
    %v1385 = vunpack.c.l.b16 %v252
    %v1386 = vunpack.c.h.b16 %v252
    %v1387 = vunpack.c.l.b16 %v253
    %v1388 = vunpack.c.h.b16 %v253
    %v1389 = vunpack.c.l.b16 %v254
    %v1390 = vunpack.c.h.b16 %v254
    %v1391 = vunpack.c.l.b16 %v255
    %v1392 = vunpack.c.h.b16 %v255
    %v1393 = vunpack.c.l.b16 %v256
    %v1394 = vunpack.c.h.b16 %v256
    %v1395 = vunpack.c.l.b16 %v257
    %v1396 = vunpack.c.h.b16 %v257
    %v1397 = vunpack.c.l.b16 %v258
    %v1398 = vunpack.c.h.b16 %v258
    %v1399 = vunpack.c.l.b16 %v259
    %v1400 = vunpack.c.h.b16 %v259
    %v1401 = vunpack.c.l.b16 %v260
    %v1402 = vunpack.c.h.b16 %v260
    %v1403 = vunpack.c.l.b16 %v261
    %v1404 = vunpack.c.h.b16 %v261
    %v1405 = vunpack.c.l.b16 %v262
    %v1406 = vunpack.c.h.b16 %v262
    %v1407 = vunpack.c.l.b16 %v263
    %v1408 = vunpack.c.h.b16 %v263
    %v1409 = vunpack.c.l.b16 %v264
    %v1410 = vunpack.c.h.b16 %v264
    %v1411 = vunpack.c.l.b16 %v265
    %v1412 = vunpack.c.h.b16 %v265
    %v1413 = vunpack.c.l.b16 %v266
    %v1414 = vunpack.c.h.b16 %v266
    %v1415 = vunpack.c.l.b16 %v267
    %v1416 = vunpack.c.h.b16 %v267
    %v1417 = vunpack.c.l.b16 %v268
    %v1418 = vunpack.c.h.b16 %v268
    %v1419 = vunpack.c.l.b16 %v269
    %v1420 = vunpack.c.h.b16 %v269
    %v1421 = vunpack.c.l.b16 %v270
    %v1422 = vunpack.c.h.b16 %v270
    %v1423 = vunpack.c.l.b16 %v271
    %v1424 = vunpack.c.h.b16 %v271
    %v1425 = vunpack.c.l.b16 %v272
    %v1426 = vunpack.c.h.b16 %v272
    %v1427 = vunpack.c.l.b16 %v273
    %v1428 = vunpack.c.h.b16 %v273
    %v1429 = vunpack.c.l.b16 %v274
    %v1430 = vunpack.c.h.b16 %v274
    %v1431 = vunpack.c.l.b16 %v275
    %v1432 = vunpack.c.h.b16 %v275
    %v1433 = vunpack.c.l.b16 %v276
    %v1434 = vunpack.c.h.b16 %v276
    %v1435 = vunpack.c.l.b16 %v277
    %v1436 = vunpack.c.h.b16 %v277
    %v1437 = vunpack.c.l.b16 %v278
    %v1438 = vunpack.c.h.b16 %v278
    %v1439 = vunpack.c.l.b16 %v279
    %v1440 = vunpack.c.h.b16 %v279
    %v1441 = vunpack.c.l.b16 %v280
    %v1442 = vunpack.c.h.b16 %v280
    %v1443 = vunpack.c.l.b16 %v281
    %v1444 = vunpack.c.h.b16 %v281
    %v1445 = vunpack.c.l.b16 %v282
    %v1446 = vunpack.c.h.b16 %v282
    %v1447 = vunpack.c.l.b16 %v283
    %v1448 = vunpack.c.h.b16 %v283
    %v1449 = vunpack.c.l.b16 %v284
    %v1450 = vunpack.c.h.b16 %v284
    %v1451 = vunpack.c.l.b16 %v285
    %v1452 = vunpack.c.h.b16 %v285
    %v1453 = vunpack.c.l.b16 %v286
    %v1454 = vunpack.c.h.b16 %v286
    %v1455 = vunpack.c.l.b16 %v287
    %v1456 = vunpack.c.h.b16 %v287
    %v1457 = vunpack.c.l.b16 %v288
    %v1458 = vunpack.c.h.b16 %v288
    %v1459 = vunpack.c.l.b16 %v289
    %v1460 = vunpack.c.h.b16 %v289
    %v1461 = vunpack.c.l.b16 %v290
    %v1462 = vunpack.c.h.b16 %v290
    %v1463 = vunpack.c.l.b16 %v291
    %v1464 = vunpack.c.h.b16 %v291
    %v1465 = vunpack.c.l.b16 %v292
    %v1466 = vunpack.c.h.b16 %v292
    %v1467 = vunpack.c.l.b16 %v293
    %v1468 = vunpack.c.h.b16 %v293
    %v1469 = vunpack.c.l.b16 %v294
    %v1470 = vunpack.c.h.b16 %v294
    %v1471 = vunpack.c.l.b16 %v295
    %v1472 = vunpack.c.h.b16 %v295
    %v1473 = vunpack.c.l.b16 %v296
    %v1474 = vunpack.c.h.b16 %v296
    %v1475 = vunpack.c.l.b16 %v297
    %v1476 = vunpack.c.h.b16 %v297
    %v1477 = vunpack.c.l.b16 %v298
    %v1478 = vunpack.c.h.b16 %v298
    %v1479 = vunpack.c.l.b16 %v299
    %v1480 = vunpack.c.h.b16 %v299
    %v1481 = vunpack.c.l.b16 %v300
    %v1482 = vunpack.c.h.b16 %v300
    %v1483 = vunpack.c.l.b16 %v301
    %v1484 = vunpack.c.h.b16 %v301
    %v1485 = vunpack.c.l.b16 %v302
    %v1486 = vunpack.c.h.b16 %v302
    %v1487 = vunpack.c.l.b16 %v303
    %v1488 = vunpack.c.h.b16 %v303
    %v1489 = vunpack.c.l.b16 %v304
    %v1490 = vunpack.c.h.b16 %v304
    %v1491 = vunpack.c.l.b16 %v305
    %v1492 = vunpack.c.h.b16 %v305
    %v1493 = vunpack.c.l.b16 %v306
    %v1494 = vunpack.c.h.b16 %v306
    %v1495 = vunpack.c.l.b16 %v307
    %v1496 = vunpack.c.h.b16 %v307
    %v1497 = vunpack.c.l.b16 %v308
    %v1498 = vunpack.c.h.b16 %v308
    %v1499 = vunpack.c.l.b16 %v309
    %v1500 = vunpack.c.h.b16 %v309
    %v1501 = vunpack.c.l.b16 %v310
    %v1502 = vunpack.c.h.b16 %v310
    %v1503 = vunpack.c.l.b16 %v311
    %v1504 = vunpack.c.h.b16 %v311
    %v1505 = vunpack.c.l.b16 %v312
    %v1506 = vunpack.c.h.b16 %v312
    %v1507 = vunpack.c.l.b16 %v313
    %v1508 = vunpack.c.h.b16 %v313
    %v1509 = vunpack.c.l.b16 %v314
    %v1510 = vunpack.c.h.b16 %v314
    %v1511 = vunpack.c.l.b16 %v315
    %v1512 = vunpack.c.h.b16 %v315
    %v1513 = vunpack.c.l.b16 %v316
    %v1514 = vunpack.c.h.b16 %v316
    %v1515 = vunpack.c.l.b16 %v317
    %v1516 = vunpack.c.h.b16 %v317
    %v1517 = vunpack.c.l.b16 %v318
    %v1518 = vunpack.c.h.b16 %v318
    %v1519 = vunpack.c.l.b16 %v319
    %v1520 = vunpack.c.h.b16 %v319
    %v1521 = vunpack.c.l.b16 %v320
    %v1522 = vunpack.c.h.b16 %v320
    %v1523 = vunpack.c.l.b16 %v321
    %v1524 = vunpack.c.h.b16 %v321
    %v1525 = vunpack.c.l.b16 %v322
    %v1526 = vunpack.c.h.b16 %v322
    %v1527 = vunpack.c.l.b16 %v323
    %v1528 = vunpack.c.h.b16 %v323
    %v1529 = vunpack.c.l.b16 %v324
    %v1530 = vunpack.c.h.b16 %v324
    %v1531 = vunpack.c.l.b16 %v325
    %v1532 = vunpack.c.h.b16 %v325
    %v1533 = vunpack.c.l.b16 %v326
    %v1534 = vunpack.c.h.b16 %v326
    %v1535 = vunpack.c.l.b16 %v327
    %v1536 = vunpack.c.h.b16 %v327
    %v1537 = vunpack.c.l.b16 %v328
    %v1538 = vunpack.c.h.b16 %v328
    %v1539 = vunpack.c.l.b16 %v329
    %v1540 = vunpack.c.h.b16 %v329
    %v1541 = vunpack.c.l.b16 %v330
    %v1542 = vunpack.c.h.b16 %v330
    %v1543 = vunpack.c.l.b16 %v331
    %v1544 = vunpack.c.h.b16 %v331
    %v1545 = vunpack.c.l.b16 %v332
    %v1546 = vunpack.c.h.b16 %v332
    %v1547 = vunpack.c.l.b16 %v333
    %v1548 = vunpack.c.h.b16 %v333
    %v1549 = vunpack.c.l.b16 %v334
    %v1550 = vunpack.c.h.b16 %v334
    %v1551 = vunpack.c.l.b16 %v335
    %v1552 = vunpack.c.h.b16 %v335
    %v1553 = vunpack.c.l.b16 %v336
    %v1554 = vunpack.c.h.b16 %v336
    %v1555 = vunpack.c.l.b16 %v337
    %v1556 = vunpack.c.h.b16 %v337
    %v1557 = vunpack.c.l.b16 %v338
    %v1558 = vunpack.c.h.b16 %v338
    %v1559 = vunpack.c.l.b16 %v339
    %v1560 = vunpack.c.h.b16 %v339
    %v1561 = vunpack.c.l.b16 %v340
    %v1562 = vunpack.c.h.b16 %v340
    %v1563 = vunpack.c.l.b16 %v341
    %v1564 = vunpack.c.h.b16 %v341
    %v1565 = vunpack.c.l.b16 %v342
    %v1566 = vunpack.c.h.b16 %v342
    %v1567 = vunpack.c.l.b16 %v343
    %v1568 = vunpack.c.h.b16 %v343
    %v1569 = vunpack.c.l.b16 %v344
    %v1570 = vunpack.c.h.b16 %v344
    %v1571 = vunpack.c.l.b16 %v345
    %v1572 = vunpack.c.h.b16 %v345
    %v1573 = vunpack.c.l.b16 %v346
    %v1574 = vunpack.c.h.b16 %v346
    %v1575 = vunpack.c.l.b16 %v347
    %v1576 = vunpack.c.h.b16 %v347
    %v1577 = vunpack.c.l.b16 %v348
    %v1578 = vunpack.c.h.b16 %v348
    %v1579 = vunpack.c.l.b16 %v349
    %v1580 = vunpack.c.h.b16 %v349
    %v1581 = vunpack.c.l.b16 %v350
    %v1582 = vunpack.c.h.b16 %v350
    %v1583 = vunpack.c.l.b16 %v351
    %v1584 = vunpack.c.h.b16 %v351
    %v1585 = vunpack.c.l.b16 %v352
    %v1586 = vunpack.c.h.b16 %v352
    %v1587 = vunpack.c.l.b16 %v353
    %v1588 = vunpack.c.h.b16 %v353
    %v1589 = vunpack.c.l.b16 %v354
    %v1590 = vunpack.c.h.b16 %v354
    %v1591 = vunpack.c.l.b16 %v355
    %v1592 = vunpack.c.h.b16 %v355
    %v1593 = vunpack.c.l.b16 %v356
    %v1594 = vunpack.c.h.b16 %v356
    %v1595 = vunpack.c.l.b16 %v357
    %v1596 = vunpack.c.h.b16 %v357
    %v1597 = vunpack.c.l.b16 %v358
    %v1598 = vunpack.c.h.b16 %v358
    %v1599 = vunpack.c.l.b16 %v359
    %v1600 = vunpack.c.h.b16 %v359
    %v1601 = vunpack.c.l.b16 %v360
    %v1602 = vunpack.c.h.b16 %v360
    %v1603 = vunpack.c.l.b16 %v361
    %v1604 = vunpack.c.h.b16 %v361
    %v1605 = vunpack.c.l.b16 %v362
    %v1606 = vunpack.c.h.b16 %v362
    %v1607 = vunpack.c.l.b16 %v363
    %v1608 = vunpack.c.h.b16 %v363
    %v1609 = vunpack.c.l.b16 %v364
    %v1610 = vunpack.c.h.b16 %v364
    %v1611 = vunpack.c.l.b16 %v365
    %v1612 = vunpack.c.h.b16 %v365
    %v1613 = vunpack.c.l.b16 %v366
    %v1614 = vunpack.c.h.b16 %v366
    %v1615 = vunpack.c.l.b16 %v367
    %v1616 = vunpack.c.h.b16 %v367
    %v1617 = vunpack.c.l.b16 %v368
    %v1618 = vunpack.c.h.b16 %v368
    %v1619 = vunpack.c.l.b16 %v369
    %v1620 = vunpack.c.h.b16 %v369
    %v1621 = vunpack.c.l.b16 %v370
    %v1622 = vunpack.c.h.b16 %v370
    %v1623 = vunpack.c.l.b16 %v371
    %v1624 = vunpack.c.h.b16 %v371
    %v1625 = vunpack.c.l.b16 %v372
    %v1626 = vunpack.c.h.b16 %v372
    %v1627 = vunpack.c.l.b16 %v373
    %v1628 = vunpack.c.h.b16 %v373
    %v1629 = vunpack.c.l.b16 %v374
    %v1630 = vunpack.c.h.b16 %v374
    %v1631 = vunpack.c.l.b16 %v375
    %v1632 = vunpack.c.h.b16 %v375
    %v1633 = vunpack.c.l.b16 %v376
    %v1634 = vunpack.c.h.b16 %v376
    %v1635 = vunpack.c.l.b16 %v377
    %v1636 = vunpack.c.h.b16 %v377
    %v1637 = vunpack.c.l.b16 %v378
    %v1638 = vunpack.c.h.b16 %v378
    %v1639 = vunpack.c.l.b16 %v379
    %v1640 = vunpack.c.h.b16 %v379
    %v1641 = vunpack.c.l.b16 %v380
    %v1642 = vunpack.c.h.b16 %v380
    %v1643 = vunpack.c.l.b16 %v381
    %v1644 = vunpack.c.h.b16 %v381
    %v1645 = vunpack.c.l.b16 %v382
    %v1646 = vunpack.c.h.b16 %v382
    %v1647 = vunpack.c.l.b16 %v383
    %v1648 = vunpack.c.h.b16 %v383
    %v1649 = vunpack.c.l.b16 %v384
    %v1650 = vunpack.c.h.b16 %v384
    %v1651 = vunpack.c.l.b16 %v385
    %v1652 = vunpack.c.h.b16 %v385
    %v1653 = vunpack.c.l.b16 %v386
    %v1654 = vunpack.c.h.b16 %v386
    %v1655 = vunpack.c.l.b16 %v387
    %v1656 = vunpack.c.h.b16 %v387
    %v1657 = vunpack.c.l.b16 %v388
    %v1658 = vunpack.c.h.b16 %v388
    %v1659 = vunpack.c.l.b16 %v389
    %v1660 = vunpack.c.h.b16 %v389
    %v1661 = vunpack.c.l.b16 %v390
    %v1662 = vunpack.c.h.b16 %v390
    %v1663 = vunpack.c.l.b16 %v391
    %v1664 = vunpack.c.h.b16 %v391
    %v1665 = vunpack.c.l.b16 %v392
    %v1666 = vunpack.c.h.b16 %v392
    %v1667 = vunpack.c.l.b16 %v393
    %v1668 = vunpack.c.h.b16 %v393
    %v1669 = vunpack.c.l.b16 %v394
    %v1670 = vunpack.c.h.b16 %v394
    %v1671 = vunpack.c.l.b16 %v395
    %v1672 = vunpack.c.h.b16 %v395
    %v1673 = vunpack.c.l.b16 %v396
    %v1674 = vunpack.c.h.b16 %v396
    %v1675 = vunpack.c.l.b16 %v397
    %v1676 = vunpack.c.h.b16 %v397
    %v1677 = vunpack.c.l.b16 %v398
    %v1678 = vunpack.c.h.b16 %v398
    %v1679 = vunpack.c.l.b16 %v399
    %v1680 = vunpack.c.h.b16 %v399
    %v1681 = vunpack.c.l.b16 %v400
    %v1682 = vunpack.c.h.b16 %v400
    %v1683 = vunpack.c.l.b16 %v401
    %v1684 = vunpack.c.h.b16 %v401
    %v1685 = vunpack.c.l.b16 %v402
    %v1686 = vunpack.c.h.b16 %v402
    %v1687 = vunpack.c.l.b16 %v403
    %v1688 = vunpack.c.h.b16 %v403
    %v1689 = vunpack.c.l.b16 %v404
    %v1690 = vunpack.c.h.b16 %v404
    %v1691 = vunpack.c.l.b16 %v405
    %v1692 = vunpack.c.h.b16 %v405
    %v1693 = vunpack.c.l.b16 %v406
    %v1694 = vunpack.c.h.b16 %v406
    %v1695 = vunpack.c.l.b16 %v407
    %v1696 = vunpack.c.h.b16 %v407
    %v1697 = vunpack.c.l.b16 %v408
    %v1698 = vunpack.c.h.b16 %v408
    %v1699 = vunpack.c.l.b16 %v409
    %v1700 = vunpack.c.h.b16 %v409
    %v1701 = vunpack.c.l.b16 %v410
    %v1702 = vunpack.c.h.b16 %v410
    %v1703 = vunpack.c.l.b16 %v411
    %v1704 = vunpack.c.h.b16 %v411
    %v1705 = vunpack.c.l.b16 %v412
    %v1706 = vunpack.c.h.b16 %v412
    %v1707 = vunpack.c.l.b16 %v413
    %v1708 = vunpack.c.h.b16 %v413
    %v1709 = vunpack.c.l.b16 %v414
    %v1710 = vunpack.c.h.b16 %v414
    %v1711 = vunpack.c.l.b16 %v415
    %v1712 = vunpack.c.h.b16 %v415
    %v1713 = vunpack.c.l.b16 %v416
    %v1714 = vunpack.c.h.b16 %v416
    %v1715 = vunpack.c.l.b16 %v417
    %v1716 = vunpack.c.h.b16 %v417
    %v1717 = vunpack.c.l.b16 %v418
    %v1718 = vunpack.c.h.b16 %v418
    %v1719 = vunpack.c.l.b16 %v419
    %v1720 = vunpack.c.h.b16 %v419
    %v1721 = vunpack.c.l.b16 %v420
    %v1722 = vunpack.c.h.b16 %v420
    %v1723 = vunpack.c.l.b16 %v421
    %v1724 = vunpack.c.h.b16 %v421
    %v1725 = vunpack.c.l.b16 %v422
    %v1726 = vunpack.c.h.b16 %v422
    %v1727 = vunpack.c.l.b16 %v423
    %v1728 = vunpack.c.h.b16 %v423
    %v1729 = vunpack.c.l.b16 %v424
    %v1730 = vunpack.c.h.b16 %v424
    %v1731 = vunpack.c.l.b16 %v425
    %v1732 = vunpack.c.h.b16 %v425
    %v1733 = vunpack.c.l.b16 %v426
    %v1734 = vunpack.c.h.b16 %v426
    %v1735 = vunpack.c.l.b16 %v427
    %v1736 = vunpack.c.h.b16 %v427
    %v1737 = vunpack.c.l.b16 %v428
    %v1738 = vunpack.c.h.b16 %v428
    %v1739 = vunpack.c.l.b16 %v429
    %v1740 = vunpack.c.h.b16 %v429
    %v1741 = vunpack.c.l.b16 %v430
    %v1742 = vunpack.c.h.b16 %v430
    %v1743 = vunpack.c.l.b16 %v431
    %v1744 = vunpack.c.h.b16 %v431
    %v1745 = vunpack.c.l.b16 %v432
    %v1746 = vunpack.c.h.b16 %v432
    %v1747 = vunpack.c.l.b16 %v433
    %v1748 = vunpack.c.h.b16 %v433
    %v1749 = vunpack.c.l.b16 %v434
    %v1750 = vunpack.c.h.b16 %v434
    %v1751 = vunpack.c.l.b16 %v435
    %v1752 = vunpack.c.h.b16 %v435
    %v1753 = vunpack.c.l.b16 %v436
    %v1754 = vunpack.c.h.b16 %v436
    %v1755 = vunpack.c.l.b16 %v437
    %v1756 = vunpack.c.h.b16 %v437
    %v1757 = vunpack.c.l.b16 %v438
    %v1758 = vunpack.c.h.b16 %v438
    %v1759 = vunpack.c.l.b16 %v439
    %v1760 = vunpack.c.h.b16 %v439
    %v1761 = vunpack.c.l.b16 %v440
    %v1762 = vunpack.c.h.b16 %v440
    %v1763 = vunpack.c.l.b16 %v441
    %v1764 = vunpack.c.h.b16 %v441
    %v1765 = vunpack.c.l.b16 %v442
    %v1766 = vunpack.c.h.b16 %v442
    %v1767 = vunpack.c.l.b16 %v443
    %v1768 = vunpack.c.h.b16 %v443
    %v1769 = vunpack.c.l.b16 %v444
    %v1770 = vunpack.c.h.b16 %v444
    %v1771 = vunpack.c.l.b16 %v445
    %v1772 = vunpack.c.h.b16 %v445
    %v1773 = vunpack.c.l.b16 %v446
    %v1774 = vunpack.c.h.b16 %v446
    %v1775 = vunpack.c.l.b16 %v447
    %v1776 = vunpack.c.h.b16 %v447
    %v1777 = vunpack.c.l.b16 %v448
    %v1778 = vunpack.c.h.b16 %v448
    %v1779 = vunpack.c.l.b16 %v449
    %v1780 = vunpack.c.h.b16 %v449
    %v1781 = vunpack.c.l.b16 %v450
    %v1782 = vunpack.c.h.b16 %v450
    %v1783 = vunpack.c.l.b16 %v451
    %v1784 = vunpack.c.h.b16 %v451
    %v1785 = vunpack.c.l.b16 %v452
    %v1786 = vunpack.c.h.b16 %v452
    %v1787 = vunpack.c.l.b16 %v453
    %v1788 = vunpack.c.h.b16 %v453
    %v1789 = vunpack.c.l.b16 %v454
    %v1790 = vunpack.c.h.b16 %v454
    %v1791 = vunpack.c.l.b16 %v455
    %v1792 = vunpack.c.h.b16 %v455
    %v1793 = vunpack.c.l.b16 %v456
    %v1794 = vunpack.c.h.b16 %v456
    %v1795 = vunpack.c.l.b16 %v457
    %v1796 = vunpack.c.h.b16 %v457
    %v1797 = vunpack.c.l.b16 %v458
    %v1798 = vunpack.c.h.b16 %v458
    %v1799 = vunpack.c.l.b16 %v459
    %v1800 = vunpack.c.h.b16 %v459
    %v1801 = vunpack.c.l.b16 %v460
    %v1802 = vunpack.c.h.b16 %v460
    %v1803 = vunpack.c.l.b16 %v461
    %v1804 = vunpack.c.h.b16 %v461
    %v1805 = vunpack.c.l.b16 %v462
    %v1806 = vunpack.c.h.b16 %v462
    %v1807 = vunpack.c.l.b16 %v463
    %v1808 = vunpack.c.h.b16 %v463
    %v1809 = vunpack.c.l.b16 %v464
    %v1810 = vunpack.c.h.b16 %v464
    %v1811 = vunpack.c.l.b16 %v465
    %v1812 = vunpack.c.h.b16 %v465
    %v1813 = vunpack.c.l.b16 %v466
    %v1814 = vunpack.c.h.b16 %v466
    %v1815 = vunpack.c.l.b16 %v467
    %v1816 = vunpack.c.h.b16 %v467
    %v1817 = vunpack.c.l.b16 %v468
    %v1818 = vunpack.c.h.b16 %v468
    %v1819 = vunpack.c.l.b16 %v469
    %v1820 = vunpack.c.h.b16 %v469
    %v1821 = vunpack.c.l.b16 %v470
    %v1822 = vunpack.c.h.b16 %v470
    %v1823 = vunpack.c.l.b16 %v471
    %v1824 = vunpack.c.h.b16 %v471
    %v1825 = vunpack.c.l.b16 %v472
    %v1826 = vunpack.c.h.b16 %v472
    %v1827 = vunpack.c.l.b16 %v473
    %v1828 = vunpack.c.h.b16 %v473
    %v1829 = vunpack.c.l.b16 %v474
    %v1830 = vunpack.c.h.b16 %v474
    %v1831 = vunpack.c.l.b16 %v475
    %v1832 = vunpack.c.h.b16 %v475
    %v1833 = vunpack.c.l.b16 %v476
    %v1834 = vunpack.c.h.b16 %v476
    %v1835 = vunpack.c.l.b16 %v477
    %v1836 = vunpack.c.h.b16 %v477
    %v1837 = vunpack.c.l.b16 %v478
    %v1838 = vunpack.c.h.b16 %v478
    %v1839 = vunpack.c.l.b16 %v479
    %v1840 = vunpack.c.h.b16 %v479
    %v1841 = vunpack.c.l.b16 %v480
    %v1842 = vunpack.c.h.b16 %v480
    %v1843 = vunpack.c.l.b16 %v481
    %v1844 = vunpack.c.h.b16 %v481
    %v1845 = vunpack.c.l.b16 %v482
    %v1846 = vunpack.c.h.b16 %v482
    %v1847 = vunpack.c.l.b16 %v483
    %v1848 = vunpack.c.h.b16 %v483
    %v1849 = vunpack.c.l.b16 %v484
    %v1850 = vunpack.c.h.b16 %v484
    %v1851 = vunpack.c.l.b16 %v485
    %v1852 = vunpack.c.h.b16 %v485
    %v1853 = vunpack.c.l.b16 %v486
    %v1854 = vunpack.c.h.b16 %v486
    %v1855 = vunpack.c.l.b16 %v487
    %v1856 = vunpack.c.h.b16 %v487
    %v1857 = vunpack.c.l.b16 %v488
    %v1858 = vunpack.c.h.b16 %v488
    %v1859 = vunpack.c.l.b16 %v489
    %v1860 = vunpack.c.h.b16 %v489
    %v1861 = vunpack.c.l.b16 %v490
    %v1862 = vunpack.c.h.b16 %v490
    %v1863 = vunpack.c.l.b16 %v491
    %v1864 = vunpack.c.h.b16 %v491
    %v1865 = vunpack.c.l.b16 %v492
    %v1866 = vunpack.c.h.b16 %v492
    %v1867 = vunpack.c.l.b16 %v493
    %v1868 = vunpack.c.h.b16 %v493
    %v1869 = vunpack.c.l.b16 %v494
    %v1870 = vunpack.c.h.b16 %v494
    %v1871 = vunpack.c.l.b16 %v495
    %v1872 = vunpack.c.h.b16 %v495
    %v1873 = vunpack.c.l.b16 %v496
    %v1874 = vunpack.c.h.b16 %v496
    %v1875 = vunpack.c.l.b16 %v497
    %v1876 = vunpack.c.h.b16 %v497
    %v1877 = vunpack.c.l.b16 %v498
    %v1878 = vunpack.c.h.b16 %v498
    %v1879 = vunpack.c.l.b16 %v499
    %v1880 = vunpack.c.h.b16 %v499
    %v1881 = vunpack.c.l.b16 %v500
    %v1882 = vunpack.c.h.b16 %v500
    %v1883 = vunpack.c.l.b16 %v501
    %v1884 = vunpack.c.h.b16 %v501
    %v1885 = vunpack.c.l.b16 %v502
    %v1886 = vunpack.c.h.b16 %v502
    %v1887 = vunpack.c.l.b16 %v503
    %v1888 = vunpack.c.h.b16 %v503
    %v1889 = vunpack.c.l.b16 %v504
    %v1890 = vunpack.c.h.b16 %v504
    %v1891 = vunpack.c.l.b16 %v505
    %v1892 = vunpack.c.h.b16 %v505
    %v1893 = vunpack.c.l.b16 %v506
    %v1894 = vunpack.c.h.b16 %v506
    %v1895 = vunpack.c.l.b16 %v507
    %v1896 = vunpack.c.h.b16 %v507
    %v1897 = vunpack.c.l.b16 %v508
    %v1898 = vunpack.c.h.b16 %v508
    %v1899 = vunpack.c.l.b16 %v509
    %v1900 = vunpack.c.h.b16 %v509
    %v1901 = vunpack.c.l.b16 %v510
    %v1902 = vunpack.c.h.b16 %v510
    %v1903 = vunpack.c.l.b16 %v511
    %v1904 = vunpack.c.h.b16 %v511
    %v1905 = vunpack.c.l.b16 %v512
    %v1906 = vunpack.c.h.b16 %v512
    %v1907 = vunpack.c.l.b16 %v513
    %v1908 = vunpack.c.h.b16 %v513
    %v1909 = vunpack.c.l.b16 %v514
    %v1910 = vunpack.c.h.b16 %v514
    %v1911 = vunpack.c.l.b16 %v515
    %v1912 = vunpack.c.h.b16 %v515
    %v1913 = vunpack.c.l.b16 %v516
    %v1914 = vunpack.c.h.b16 %v516
    %v1915 = vunpack.c.l.b16 %v517
    %v1916 = vunpack.c.h.b16 %v517
    %v1917 = vunpack.c.l.b16 %v518
    %v1918 = vunpack.c.h.b16 %v518
    %v1919 = vunpack.c.l.b16 %v519
    %v1920 = vunpack.c.h.b16 %v519
    %v1921 = vunpack.c.l.b16 %v520
    %v1922 = vunpack.c.h.b16 %v520
    %v1923 = vunpack.c.l.b16 %v521
    %v1924 = vunpack.c.h.b16 %v521
    %v1925 = vunpack.c.l.b16 %v522
    %v1926 = vunpack.c.h.b16 %v522
    %v1927 = vunpack.c.l.b16 %v523
    %v1928 = vunpack.c.h.b16 %v523
    %v1929 = vunpack.c.l.b16 %v524
    %v1930 = vunpack.c.h.b16 %v524
    %v1931 = vunpack.c.l.b16 %v525
    %v1932 = vunpack.c.h.b16 %v525
    %v1933 = vunpack.c.l.b16 %v526
    %v1934 = vunpack.c.h.b16 %v526
    %v1935 = vunpack.c.l.b16 %v527
    %v1936 = vunpack.c.h.b16 %v527
    %v1937 = vunpack.c.l.b16 %v528
    %v1938 = vunpack.c.h.b16 %v528
    %v1939 = vunpack.c.l.b16 %v529
    %v1940 = vunpack.c.h.b16 %v529
    %v1941 = vunpack.c.l.b16 %v530
    %v1942 = vunpack.c.h.b16 %v530
    %v1943 = vunpack.c.l.b16 %v531
    %v1944 = vunpack.c.h.b16 %v531
    %v1945 = vunpack.c.l.b16 %v532
    %v1946 = vunpack.c.h.b16 %v532
    %v1947 = vunpack.c.l.b16 %v533
    %v1948 = vunpack.c.h.b16 %v533
    %v1949 = vunpack.c.l.b16 %v534
    %v1950 = vunpack.c.h.b16 %v534
    %v1951 = vunpack.c.l.b16 %v535
    %v1952 = vunpack.c.h.b16 %v535
    %v1953 = vunpack.c.l.b16 %v536
    %v1954 = vunpack.c.h.b16 %v536
    %v1955 = vunpack.c.l.b16 %v537
    %v1956 = vunpack.c.h.b16 %v537
    %v1957 = vunpack.c.l.b16 %v538
    %v1958 = vunpack.c.h.b16 %v538
    %v1959 = vunpack.c.l.b16 %v539
    %v1960 = vunpack.c.h.b16 %v539
    %v1961 = vunpack.c.l.b16 %v540
    %v1962 = vunpack.c.h.b16 %v540
    %v1963 = vunpack.c.l.b16 %v541
    %v1964 = vunpack.c.h.b16 %v541
    %v1965 = vunpack.c.l.b16 %v542
    %v1966 = vunpack.c.h.b16 %v542
    %v1967 = vunpack.c.l.b16 %v543
    %v1968 = vunpack.c.h.b16 %v543
    %v1969 = vunpack.c.l.b16 %v544
    %v1970 = vunpack.c.h.b16 %v544
    %v1971 = vunpack.c.l.b16 %v545
    %v1972 = vunpack.c.h.b16 %v545
    %v1973 = vunpack.c.l.b16 %v546
    %v1974 = vunpack.c.h.b16 %v546
    %v1975 = vunpack.c.l.b16 %v547
    %v1976 = vunpack.c.h.b16 %v547
    %v1977 = vunpack.c.l.b16 %v548
    %v1978 = vunpack.c.h.b16 %v548
    %v1979 = vunpack.c.l.b16 %v549
    %v1980 = vunpack.c.h.b16 %v549
    %v1981 = vunpack.c.l.b16 %v550
    %v1982 = vunpack.c.h.b16 %v550
    %v1983 = vunpack.c.l.b16 %v551
    %v1984 = vunpack.c.h.b16 %v551
    %v1985 = vunpack.c.l.b16 %v552
    %v1986 = vunpack.c.h.b16 %v552
    %v1987 = vunpack.c.l.b16 %v553
    %v1988 = vunpack.c.h.b16 %v553
    %v1989 = vunpack.c.l.b16 %v554
    %v1990 = vunpack.c.h.b16 %v554
    %v1991 = vunpack.c.l.b16 %v555
    %v1992 = vunpack.c.h.b16 %v555
    %v1993 = vunpack.c.l.b16 %v556
    %v1994 = vunpack.c.h.b16 %v556
    %v1995 = vunpack.c.l.b16 %v557
    %v1996 = vunpack.c.h.b16 %v557
    %v1997 = vunpack.c.l.b16 %v558
    %v1998 = vunpack.c.h.b16 %v558
    %v1999 = vunpack.c.l.b16 %v559
    %v2000 = vunpack.c.h.b16 %v559
    %v2001 = vunpack.c.l.b16 %v560
    %v2002 = vunpack.c.h.b16 %v560
    %v2003 = vunpack.c.l.b16 %v561
    %v2004 = vunpack.c.h.b16 %v561
    %v2005 = vunpack.c.l.b16 %v562
    %v2006 = vunpack.c.h.b16 %v562
    %v2007 = vunpack.c.l.b16 %v563
    %v2008 = vunpack.c.h.b16 %v563
    %v2009 = vunpack.c.l.b16 %v564
    %v2010 = vunpack.c.h.b16 %v564
    %v2011 = vunpack.c.l.b16 %v565
    %v2012 = vunpack.c.h.b16 %v565
    %v2013 = vunpack.c.l.b16 %v566
    %v2014 = vunpack.c.h.b16 %v566
    %v2015 = vunpack.c.l.b16 %v567
    %v2016 = vunpack.c.h.b16 %v567
    %v2017 = vunpack.c.l.b16 %v568
    %v2018 = vunpack.c.h.b16 %v568
    %v2019 = vunpack.c.l.b16 %v569
    %v2020 = vunpack.c.h.b16 %v569
    %v2021 = vunpack.c.l.b16 %v570
    %v2022 = vunpack.c.h.b16 %v570
    %v2023 = vunpack.c.l.b16 %v571
    %v2024 = vunpack.c.h.b16 %v571
    %v2025 = vunpack.c.l.b16 %v572
    %v2026 = vunpack.c.h.b16 %v572
    %v2027 = vunpack.c.l.b16 %v573
    %v2028 = vunpack.c.h.b16 %v573
    %v2029 = vunpack.c.l.b16 %v574
    %v2030 = vunpack.c.h.b16 %v574
    %v2031 = vunpack.c.l.b16 %v575
    %v2032 = vunpack.c.h.b16 %v575
    %v2033 = vunpack.c.l.b16 %v576
    %v2034 = vunpack.c.h.b16 %v576
    %v2035 = vunpack.c.l.b16 %v577
    %v2036 = vunpack.c.h.b16 %v577
    %v2037 = vunpack.c.l.b16 %v578
    %v2038 = vunpack.c.h.b16 %v578
    %v2039 = vunpack.c.l.b16 %v579
    %v2040 = vunpack.c.h.b16 %v579
    %v2041 = vunpack.c.l.b16 %v580
    %v2042 = vunpack.c.h.b16 %v580
    %v2043 = vunpack.c.l.b16 %v581
    %v2044 = vunpack.c.h.b16 %v581
    %v2045 = vunpack.c.l.b16 %v582
    %v2046 = vunpack.c.h.b16 %v582
    %v2047 = vunpack.c.l.b16 %v583
    %v2048 = vunpack.c.h.b16 %v583
    %v2049 = vunpack.c.l.b16 %v584
    %v2050 = vunpack.c.h.b16 %v584
    %v2051 = vunpack.c.l.b16 %v585
    %v2052 = vunpack.c.h.b16 %v585
    %v2053 = vunpack.c.l.b16 %v586
    %v2054 = vunpack.c.h.b16 %v586
    %v2055 = vunpack.c.l.b16 %v587
    %v2056 = vunpack.c.h.b16 %v587
    %v2057 = vunpack.c.l.b16 %v588
    %v2058 = vunpack.c.h.b16 %v588
    %v2059 = vunpack.c.l.b16 %v589
    %v2060 = vunpack.c.h.b16 %v589
    %v2061 = vunpack.c.l.b16 %v590
    %v2062 = vunpack.c.h.b16 %v590
    %v2063 = vunpack.c.l.b16 %v591
    %v2064 = vunpack.c.h.b16 %v591
    %v2065 = vunpack.c.l.b16 %v592
    %v2066 = vunpack.c.h.b16 %v592
    %v2067 = vunpack.c.l.b16 %v593
    %v2068 = vunpack.c.h.b16 %v593
    %v2069 = vunpack.c.l.b16 %v594
    %v2070 = vunpack.c.h.b16 %v594
    %v2071 = vunpack.c.l.b16 %v595
    %v2072 = vunpack.c.h.b16 %v595
    %v2073 = vunpack.c.l.b16 %v596
    %v2074 = vunpack.c.h.b16 %v596
    %v2075 = vunpack.c.l.b16 %v597
    %v2076 = vunpack.c.h.b16 %v597
    %v2077 = vunpack.c.l.b16 %v598
    %v2078 = vunpack.c.h.b16 %v598
    %v2079 = vunpack.c.l.b16 %v599
    %v2080 = vunpack.c.h.b16 %v599
    %v2081 = vunpack.c.l.b16 %v600
    %v2082 = vunpack.c.h.b16 %v600
    %v2083 = vunpack.c.l.b16 %v601
    %v2084 = vunpack.c.h.b16 %v601
    %v2085 = vunpack.c.l.b16 %v602
    %v2086 = vunpack.c.h.b16 %v602
    %v2087 = vunpack.c.l.b16 %v603
    %v2088 = vunpack.c.h.b16 %v603
    %v2089 = vunpack.c.l.b16 %v604
    %v2090 = vunpack.c.h.b16 %v604
    %v2091 = vunpack.c.l.b16 %v605
    %v2092 = vunpack.c.h.b16 %v605
    %v2093 = vunpack.c.l.b16 %v606
    %v2094 = vunpack.c.h.b16 %v606
    %v2095 = vunpack.c.l.b16 %v607
    %v2096 = vunpack.c.h.b16 %v607
    %v2097 = vunpack.c.l.b16 %v608
    %v2098 = vunpack.c.h.b16 %v608
    %v2099 = vunpack.c.l.b16 %v609
    %v2100 = vunpack.c.h.b16 %v609
    %v2101 = vunpack.c.l.b16 %v610
    %v2102 = vunpack.c.h.b16 %v610
    %v2103 = vunpack.c.l.b16 %v611
    %v2104 = vunpack.c.h.b16 %v611
    %v2105 = vunpack.c.l.b16 %v612
    %v2106 = vunpack.c.h.b16 %v612
    %v2107 = vunpack.c.l.b16 %v613
    %v2108 = vunpack.c.h.b16 %v613
    %v2109 = vunpack.c.l.b16 %v614
    %v2110 = vunpack.c.h.b16 %v614
    %v2111 = vunpack.c.l.b16 %v615
    %v2112 = vunpack.c.h.b16 %v615
    %v2113 = vunpack.c.l.b16 %v616
    %v2114 = vunpack.c.h.b16 %v616
    %v2115 = vunpack.c.l.b16 %v617
    %v2116 = vunpack.c.h.b16 %v617
    %v2117 = vunpack.c.l.b16 %v618
    %v2118 = vunpack.c.h.b16 %v618
    %v2119 = vunpack.c.l.b16 %v619
    %v2120 = vunpack.c.h.b16 %v619
    %v2121 = vunpack.c.l.b16 %v620
    %v2122 = vunpack.c.h.b16 %v620
    %v2123 = vunpack.c.l.b16 %v621
    %v2124 = vunpack.c.h.b16 %v621
    %v2125 = vunpack.c.l.b16 %v622
    %v2126 = vunpack.c.h.b16 %v622
    %v2127 = vunpack.c.l.b16 %v623
    %v2128 = vunpack.c.h.b16 %v623
    %v2129 = vunpack.c.l.b16 %v624
    %v2130 = vunpack.c.h.b16 %v624
    %v2131 = vunpack.c.l.b16 %v625
    %v2132 = vunpack.c.h.b16 %v625
    %v2133 = vunpack.c.l.b16 %v626
    %v2134 = vunpack.c.h.b16 %v626
    %v2135 = vunpack.c.l.b16 %v627
    %v2136 = vunpack.c.h.b16 %v627
    %v2137 = vunpack.c.l.b16 %v628
    %v2138 = vunpack.c.h.b16 %v628
    %v2139 = vunpack.c.l.b16 %v629
    %v2140 = vunpack.c.h.b16 %v629
    %v2141 = vunpack.c.l.b16 %v630
    %v2142 = vunpack.c.h.b16 %v630
    %v2143 = vunpack.c.l.b16 %v631
    %v2144 = vunpack.c.h.b16 %v631
    %v2145 = vunpack.c.l.b16 %v632
    %v2146 = vunpack.c.h.b16 %v632
    %v2147 = vunpack.c.l.b16 %v633
    %v2148 = vunpack.c.h.b16 %v633
    %v2149 = vunpack.c.l.b16 %v634
    %v2150 = vunpack.c.h.b16 %v634
    %v2151 = vunpack.c.l.b16 %v635
    %v2152 = vunpack.c.h.b16 %v635
    %v2153 = vunpack.c.l.b16 %v636
    %v2154 = vunpack.c.h.b16 %v636
    %v2155 = vunpack.c.l.b16 %v637
    %v2156 = vunpack.c.h.b16 %v637
    %v2157 = vunpack.c.l.b16 %v638
    %v2158 = vunpack.c.h.b16 %v638
    %v2159 = vunpack.c.l.b16 %v639
    %v2160 = vunpack.c.h.b16 %v639
    %v2161 = vunpack.c.l.b16 %v640
    %v2162 = vunpack.c.h.b16 %v640
    %v2163 = vunpack.c.l.b16 %v641
    %v2164 = vunpack.c.h.b16 %v641
    %v2165 = vunpack.c.l.b16 %v642
    %v2166 = vunpack.c.h.b16 %v642
    %v2167 = vunpack.c.l.b16 %v643
    %v2168 = vunpack.c.h.b16 %v643
    %v2169 = vunpack.c.l.b16 %v644
    %v2170 = vunpack.c.h.b16 %v644
    %v2171 = vunpack.c.l.b16 %v645
    %v2172 = vunpack.c.h.b16 %v645
    %v2173 = vunpack.c.l.b16 %v646
    %v2174 = vunpack.c.h.b16 %v646
    %v2175 = vunpack.c.l.b16 %v647
    %v2176 = vunpack.c.h.b16 %v647
    %v2177 = vunpack.c.l.b16 %v648
    %v2178 = vunpack.c.h.b16 %v648
    %v2179 = vunpack.c.l.b16 %v649
    %v2180 = vunpack.c.h.b16 %v649
    %v2181 = vunpack.c.l.b16 %v650
    %v2182 = vunpack.c.h.b16 %v650
    %v2183 = vunpack.c.l.b16 %v651
    %v2184 = vunpack.c.h.b16 %v651
    %v2185 = vunpack.c.l.b16 %v652
    %v2186 = vunpack.c.h.b16 %v652
    %v2187 = vunpack.c.l.b16 %v653
    %v2188 = vunpack.c.h.b16 %v653
    %v2189 = vunpack.c.l.b16 %v654
    %v2190 = vunpack.c.h.b16 %v654
    %v2191 = vunpack.c.l.b16 %v655
    %v2192 = vunpack.c.h.b16 %v655
    %v2193 = vunpack.c.l.b16 %v656
    %v2194 = vunpack.c.h.b16 %v656
    %v2195 = vunpack.c.l.b16 %v657
    %v2196 = vunpack.c.h.b16 %v657
    %v2197 = vunpack.c.l.b16 %v658
    %v2198 = vunpack.c.h.b16 %v658
    %v2199 = vunpack.c.l.b16 %v659
    %v2200 = vunpack.c.h.b16 %v659
    %v2201 = vunpack.c.l.b16 %v660
    %v2202 = vunpack.c.h.b16 %v660
    %v2203 = vunpack.c.l.b16 %v661
    %v2204 = vunpack.c.h.b16 %v661
    %v2205 = vunpack.c.l.b16 %v662
    %v2206 = vunpack.c.h.b16 %v662
    %v2207 = vunpack.c.l.b16 %v663
    %v2208 = vunpack.c.h.b16 %v663
    %v2209 = vunpack.c.l.b16 %v664
    %v2210 = vunpack.c.h.b16 %v664
    %v2211 = vunpack.c.l.b16 %v665
    %v2212 = vunpack.c.h.b16 %v665
    %v2213 = vunpack.c.l.b16 %v666
    %v2214 = vunpack.c.h.b16 %v666
    %v2215 = vunpack.c.l.b16 %v667
    %v2216 = vunpack.c.h.b16 %v667
    %v2217 = vunpack.c.l.b16 %v668
    %v2218 = vunpack.c.h.b16 %v668
    %v2219 = vunpack.c.l.b16 %v669
    %v2220 = vunpack.c.h.b16 %v669
    %v2221 = vunpack.c.l.b16 %v670
    %v2222 = vunpack.c.h.b16 %v670
    %v2223 = vunpack.c.l.b16 %v671
    %v2224 = vunpack.c.h.b16 %v671
    %v2225 = vunpack.c.l.b16 %v672
    %v2226 = vunpack.c.h.b16 %v672
    %v2227 = vunpack.c.l.b16 %v673
    %v2228 = vunpack.c.h.b16 %v673
    %v2229 = vunpack.c.l.b16 %v674
    %v2230 = vunpack.c.h.b16 %v674
    %v2231 = vunpack.c.l.b16 %v675
    %v2232 = vunpack.c.h.b16 %v675
    %v2233 = vunpack.c.l.b16 %v676
    %v2234 = vunpack.c.h.b16 %v676
    %v2235 = vpack.c.b16 %v1215, %v1211
    %v2236 = vpack.c.b16 %v1216, %v1212
    %v2237 = vpack.c.b16 %v1217, %v1213
    %v2238 = vpack.c.b16 %v1218, %v1214
    %v2239 = vpack.c.b16 %v1223, %v1219
    %v2240 = vpack.c.b16 %v1224, %v1220
    %v2241 = vpack.c.b16 %v1225, %v1221
    %v2242 = vpack.c.b16 %v1226, %v1222
    %v2243 = vpack.c.b16 %v1231, %v1227
    %v2244 = vpack.c.b16 %v1232, %v1228
    %v2245 = vpack.c.b16 %v1233, %v1229
    %v2246 = vpack.c.b16 %v1234, %v1230
    %v2247 = vpack.c.b16 %v1239, %v1235
    %v2248 = vpack.c.b16 %v1240, %v1236
    %v2249 = vpack.c.b16 %v1241, %v1237
    %v2250 = vpack.c.b16 %v1242, %v1238
    %v2251 = vpack.c.b16 %v1247, %v1243
    %v2252 = vpack.c.b16 %v1248, %v1244
    %v2253 = vpack.c.b16 %v1249, %v1245
    %v2254 = vpack.c.b16 %v1250, %v1246
    %v2255 = vpack.c.b16 %v1255, %v1251
    %v2256 = vpack.c.b16 %v1256, %v1252
    %v2257 = vpack.c.b16 %v1257, %v1253
    %v2258 = vpack.c.b16 %v1258, %v1254
    %v2259 = vpack.c.b16 %v1263, %v1259
    %v2260 = vpack.c.b16 %v1264, %v1260
    %v2261 = vpack.c.b16 %v1265, %v1261
    %v2262 = vpack.c.b16 %v1266, %v1262
    %v2263 = vpack.c.b16 %v1271, %v1267
    %v2264 = vpack.c.b16 %v1272, %v1268
    %v2265 = vpack.c.b16 %v1273, %v1269
    %v2266 = vpack.c.b16 %v1274, %v1270
    %v2267 = vpack.c.b16 %v1279, %v1275
    %v2268 = vpack.c.b16 %v1280, %v1276
    %v2269 = vpack.c.b16 %v1281, %v1277
    %v2270 = vpack.c.b16 %v1282, %v1278
    %v2271 = vpack.c.b16 %v1287, %v1283
    %v2272 = vpack.c.b16 %v1288, %v1284
    %v2273 = vpack.c.b16 %v1289, %v1285
    %v2274 = vpack.c.b16 %v1290, %v1286
    %v2275 = vpack.c.b16 %v1295, %v1291
    %v2276 = vpack.c.b16 %v1296, %v1292
    %v2277 = vpack.c.b16 %v1297, %v1293
    %v2278 = vpack.c.b16 %v1298, %v1294
    %v2279 = vpack.c.b16 %v1303, %v1299
    %v2280 = vpack.c.b16 %v1304, %v1300
    %v2281 = vpack.c.b16 %v1305, %v1301
    %v2282 = vpack.c.b16 %v1306, %v1302
    %v2283 = vpack.c.b16 %v1311, %v1307
    %v2284 = vpack.c.b16 %v1312, %v1308
    %v2285 = vpack.c.b16 %v1313, %v1309
    %v2286 = vpack.c.b16 %v1314, %v1310
    %v2287 = vpack.c.b16 %v1319, %v1315
    %v2288 = vpack.c.b16 %v1320, %v1316
    %v2289 = vpack.c.b16 %v1321, %v1317
    %v2290 = vpack.c.b16 %v1322, %v1318
    %v2291 = vpack.c.b16 %v1327, %v1323
    %v2292 = vpack.c.b16 %v1328, %v1324
    %v2293 = vpack.c.b16 %v1329, %v1325
    %v2294 = vpack.c.b16 %v1330, %v1326
    %v2295 = vpack.c.b16 %v1335, %v1331
    %v2296 = vpack.c.b16 %v1336, %v1332
    %v2297 = vpack.c.b16 %v1337, %v1333
    %v2298 = vpack.c.b16 %v1338, %v1334
    %v2299 = vpack.c.b16 %v1343, %v1339
    %v2300 = vpack.c.b16 %v1344, %v1340
    %v2301 = vpack.c.b16 %v1345, %v1341
    %v2302 = vpack.c.b16 %v1346, %v1342
    %v2303 = vpack.c.b16 %v1351, %v1347
    %v2304 = vpack.c.b16 %v1352, %v1348
    %v2305 = vpack.c.b16 %v1353, %v1349
    %v2306 = vpack.c.b16 %v1354, %v1350
    %v2307 = vpack.c.b16 %v1359, %v1355
    %v2308 = vpack.c.b16 %v1360, %v1356
    %v2309 = vpack.c.b16 %v1361, %v1357
    %v2310 = vpack.c.b16 %v1362, %v1358
    %v2311 = vpack.c.b16 %v1367, %v1363
    %v2312 = vpack.c.b16 %v1368, %v1364
    %v2313 = vpack.c.b16 %v1369, %v1365
    %v2314 = vpack.c.b16 %v1370, %v1366
    %v2315 = vpack.c.b16 %v1375, %v1371
    %v2316 = vpack.c.b16 %v1376, %v1372
    %v2317 = vpack.c.b16 %v1377, %v1373
    %v2318 = vpack.c.b16 %v1378, %v1374
    %v2319 = vpack.c.b16 %v1383, %v1379
    %v2320 = vpack.c.b16 %v1384, %v1380
    %v2321 = vpack.c.b16 %v1385, %v1381
    %v2322 = vpack.c.b16 %v1386, %v1382
    %v2323 = vpack.c.b16 %v1391, %v1387
    %v2324 = vpack.c.b16 %v1392, %v1388
    %v2325 = vpack.c.b16 %v1393, %v1389
    %v2326 = vpack.c.b16 %v1394, %v1390
    %v2327 = vpack.c.b16 %v1399, %v1395
    %v2328 = vpack.c.b16 %v1400, %v1396
    %v2329 = vpack.c.b16 %v1401, %v1397
    %v2330 = vpack.c.b16 %v1402, %v1398
    %v2331 = vpack.c.b16 %v1407, %v1403
    %v2332 = vpack.c.b16 %v1408, %v1404
    %v2333 = vpack.c.b16 %v1409, %v1405
    %v2334 = vpack.c.b16 %v1410, %v1406
    %v2335 = vpack.c.b16 %v1415, %v1411
    %v2336 = vpack.c.b16 %v1416, %v1412
    %v2337 = vpack.c.b16 %v1417, %v1413
    %v2338 = vpack.c.b16 %v1418, %v1414
    %v2339 = vpack.c.b16 %v1423, %v1419
    %v2340 = vpack.c.b16 %v1424, %v1420
    %v2341 = vpack.c.b16 %v1425, %v1421
    %v2342 = vpack.c.b16 %v1426, %v1422
    %v2343 = vpack.c.b16 %v1431, %v1427
    %v2344 = vpack.c.b16 %v1432, %v1428
    %v2345 = vpack.c.b16 %v1433, %v1429
    %v2346 = vpack.c.b16 %v1434, %v1430
    %v2347 = vpack.c.b16 %v1439, %v1435
    %v2348 = vpack.c.b16 %v1440, %v1436
    %v2349 = vpack.c.b16 %v1441, %v1437
    %v2350 = vpack.c.b16 %v1442, %v1438
    %v2351 = vpack.c.b16 %v1447, %v1443
    %v2352 = vpack.c.b16 %v1448, %v1444
    %v2353 = vpack.c.b16 %v1449, %v1445
    %v2354 = vpack.c.b16 %v1450, %v1446
    %v2355 = vpack.c.b16 %v1455, %v1451
    %v2356 = vpack.c.b16 %v1456, %v1452
    %v2357 = vpack.c.b16 %v1457, %v1453
    %v2358 = vpack.c.b16 %v1458, %v1454
    %v2359 = vpack.c.b16 %v1463, %v1459
    %v2360 = vpack.c.b16 %v1464, %v1460
    %v2361 = vpack.c.b16 %v1465, %v1461
    %v2362 = vpack.c.b16 %v1466, %v1462
    %v2363 = vpack.c.b16 %v1471, %v1467
    %v2364 = vpack.c.b16 %v1472, %v1468
    %v2365 = vpack.c.b16 %v1473, %v1469
    %v2366 = vpack.c.b16 %v1474, %v1470
    %v2367 = vpack.c.b16 %v1479, %v1475
    %v2368 = vpack.c.b16 %v1480, %v1476
    %v2369 = vpack.c.b16 %v1481, %v1477
    %v2370 = vpack.c.b16 %v1482, %v1478
    %v2371 = vpack.c.b16 %v1487, %v1483
    %v2372 = vpack.c.b16 %v1488, %v1484
    %v2373 = vpack.c.b16 %v1489, %v1485
    %v2374 = vpack.c.b16 %v1490, %v1486
    %v2375 = vpack.c.b16 %v1495, %v1491
    %v2376 = vpack.c.b16 %v1496, %v1492
    %v2377 = vpack.c.b16 %v1497, %v1493
    %v2378 = vpack.c.b16 %v1498, %v1494
    %v2379 = vpack.c.b16 %v1503, %v1499
    %v2380 = vpack.c.b16 %v1504, %v1500
    %v2381 = vpack.c.b16 %v1505, %v1501
    %v2382 = vpack.c.b16 %v1506, %v1502
    %v2383 = vpack.c.b16 %v1511, %v1507
    %v2384 = vpack.c.b16 %v1512, %v1508
    %v2385 = vpack.c.b16 %v1513, %v1509
    %v2386 = vpack.c.b16 %v1514, %v1510
    %v2387 = vpack.c.b16 %v1519, %v1515
    %v2388 = vpack.c.b16 %v1520, %v1516
    %v2389 = vpack.c.b16 %v1521, %v1517
    %v2390 = vpack.c.b16 %v1522, %v1518
    %v2391 = vpack.c.b16 %v1527, %v1523
    %v2392 = vpack.c.b16 %v1528, %v1524
    %v2393 = vpack.c.b16 %v1529, %v1525
    %v2394 = vpack.c.b16 %v1530, %v1526
    %v2395 = vpack.c.b16 %v1535, %v1531
    %v2396 = vpack.c.b16 %v1536, %v1532
    %v2397 = vpack.c.b16 %v1537, %v1533
    %v2398 = vpack.c.b16 %v1538, %v1534
    %v2399 = vpack.c.b16 %v1543, %v1539
    %v2400 = vpack.c.b16 %v1544, %v1540
    %v2401 = vpack.c.b16 %v1545, %v1541
    %v2402 = vpack.c.b16 %v1546, %v1542
    %v2403 = vpack.c.b16 %v1551, %v1547
    %v2404 = vpack.c.b16 %v1552, %v1548
    %v2405 = vpack.c.b16 %v1553, %v1549
    %v2406 = vpack.c.b16 %v1554, %v1550
    %v2407 = vpack.c.b16 %v1559, %v1555
    %v2408 = vpack.c.b16 %v1560, %v1556
    %v2409 = vpack.c.b16 %v1561, %v1557
    %v2410 = vpack.c.b16 %v1562, %v1558
    %v2411 = vpack.c.b16 %v1567, %v1563
    %v2412 = vpack.c.b16 %v1568, %v1564
    %v2413 = vpack.c.b16 %v1569, %v1565
    %v2414 = vpack.c.b16 %v1570, %v1566
    %v2415 = vpack.c.b16 %v1575, %v1571
    %v2416 = vpack.c.b16 %v1576, %v1572
    %v2417 = vpack.c.b16 %v1577, %v1573
    %v2418 = vpack.c.b16 %v1578, %v1574
    %v2419 = vpack.c.b16 %v1583, %v1579
    %v2420 = vpack.c.b16 %v1584, %v1580
    %v2421 = vpack.c.b16 %v1585, %v1581
    %v2422 = vpack.c.b16 %v1586, %v1582
    %v2423 = vpack.c.b16 %v1591, %v1587
    %v2424 = vpack.c.b16 %v1592, %v1588
    %v2425 = vpack.c.b16 %v1593, %v1589
    %v2426 = vpack.c.b16 %v1594, %v1590
    %v2427 = vpack.c.b16 %v1599, %v1595
    %v2428 = vpack.c.b16 %v1600, %v1596
    %v2429 = vpack.c.b16 %v1601, %v1597
    %v2430 = vpack.c.b16 %v1602, %v1598
    %v2431 = vpack.c.b16 %v1607, %v1603
    %v2432 = vpack.c.b16 %v1608, %v1604
    %v2433 = vpack.c.b16 %v1609, %v1605
    %v2434 = vpack.c.b16 %v1610, %v1606
    %v2435 = vpack.c.b16 %v1615, %v1611
    %v2436 = vpack.c.b16 %v1616, %v1612
    %v2437 = vpack.c.b16 %v1617, %v1613
    %v2438 = vpack.c.b16 %v1618, %v1614
    %v2439 = vpack.c.b16 %v1623, %v1619
    %v2440 = vpack.c.b16 %v1624, %v1620
    %v2441 = vpack.c.b16 %v1625, %v1621
    %v2442 = vpack.c.b16 %v1626, %v1622
    %v2443 = vpack.c.b16 %v1631, %v1627
    %v2444 = vpack.c.b16 %v1632, %v1628
    %v2445 = vpack.c.b16 %v1633, %v1629
    %v2446 = vpack.c.b16 %v1634, %v1630
    %v2447 = vpack.c.b16 %v1639, %v1635
    %v2448 = vpack.c.b16 %v1640, %v1636
    %v2449 = vpack.c.b16 %v1641, %v1637
    %v2450 = vpack.c.b16 %v1642, %v1638
    %v2451 = vpack.c.b16 %v1647, %v1643
    %v2452 = vpack.c.b16 %v1648, %v1644
    %v2453 = vpack.c.b16 %v1649, %v1645
    %v2454 = vpack.c.b16 %v1650, %v1646
    %v2455 = vpack.c.b16 %v1655, %v1651
    %v2456 = vpack.c.b16 %v1656, %v1652
    %v2457 = vpack.c.b16 %v1657, %v1653
    %v2458 = vpack.c.b16 %v1658, %v1654
    %v2459 = vpack.c.b16 %v1663, %v1659
    %v2460 = vpack.c.b16 %v1664, %v1660
    %v2461 = vpack.c.b16 %v1665, %v1661
    %v2462 = vpack.c.b16 %v1666, %v1662
    %v2463 = vpack.c.b16 %v1671, %v1667
    %v2464 = vpack.c.b16 %v1672, %v1668
    %v2465 = vpack.c.b16 %v1673, %v1669
    %v2466 = vpack.c.b16 %v1674, %v1670
    %v2467 = vpack.c.b16 %v1679, %v1675
    %v2468 = vpack.c.b16 %v1680, %v1676
    %v2469 = vpack.c.b16 %v1681, %v1677
    %v2470 = vpack.c.b16 %v1682, %v1678
    %v2471 = vpack.c.b16 %v1687, %v1683
    %v2472 = vpack.c.b16 %v1688, %v1684
    %v2473 = vpack.c.b16 %v1689, %v1685
    %v2474 = vpack.c.b16 %v1690, %v1686
    %v2475 = vpack.c.b16 %v1695, %v1691
    %v2476 = vpack.c.b16 %v1696, %v1692
    %v2477 = vpack.c.b16 %v1697, %v1693
    %v2478 = vpack.c.b16 %v1698, %v1694
    %v2479 = vpack.c.b16 %v1703, %v1699
    %v2480 = vpack.c.b16 %v1704, %v1700
    %v2481 = vpack.c.b16 %v1705, %v1701
    %v2482 = vpack.c.b16 %v1706, %v1702
    %v2483 = vpack.c.b16 %v1711, %v1707
    %v2484 = vpack.c.b16 %v1712, %v1708
    %v2485 = vpack.c.b16 %v1713, %v1709
    %v2486 = vpack.c.b16 %v1714, %v1710
    %v2487 = vpack.c.b16 %v1719, %v1715
    %v2488 = vpack.c.b16 %v1720, %v1716
    %v2489 = vpack.c.b16 %v1721, %v1717
    %v2490 = vpack.c.b16 %v1722, %v1718
    %v2491 = vpack.c.b16 %v1727, %v1723
    %v2492 = vpack.c.b16 %v1728, %v1724
    %v2493 = vpack.c.b16 %v1729, %v1725
    %v2494 = vpack.c.b16 %v1730, %v1726
    %v2495 = vpack.c.b16 %v1735, %v1731
    %v2496 = vpack.c.b16 %v1736, %v1732
    %v2497 = vpack.c.b16 %v1737, %v1733
    %v2498 = vpack.c.b16 %v1738, %v1734
    %v2499 = vpack.c.b16 %v1743, %v1739
    %v2500 = vpack.c.b16 %v1744, %v1740
    %v2501 = vpack.c.b16 %v1745, %v1741
    %v2502 = vpack.c.b16 %v1746, %v1742
    %v2503 = vpack.c.b16 %v1751, %v1747
    %v2504 = vpack.c.b16 %v1752, %v1748
    %v2505 = vpack.c.b16 %v1753, %v1749
    %v2506 = vpack.c.b16 %v1754, %v1750
    %v2507 = vpack.c.b16 %v1759, %v1755
    %v2508 = vpack.c.b16 %v1760, %v1756
    %v2509 = vpack.c.b16 %v1761, %v1757
    %v2510 = vpack.c.b16 %v1762, %v1758
    %v2511 = vpack.c.b16 %v1767, %v1763
    %v2512 = vpack.c.b16 %v1768, %v1764
    %v2513 = vpack.c.b16 %v1769, %v1765
    %v2514 = vpack.c.b16 %v1770, %v1766
    %v2515 = vpack.c.b16 %v1775, %v1771
    %v2516 = vpack.c.b16 %v1776, %v1772
    %v2517 = vpack.c.b16 %v1777, %v1773
    %v2518 = vpack.c.b16 %v1778, %v1774
    %v2519 = vpack.c.b16 %v1783, %v1779
    %v2520 = vpack.c.b16 %v1784, %v1780
    %v2521 = vpack.c.b16 %v1785, %v1781
    %v2522 = vpack.c.b16 %v1786, %v1782
    %v2523 = vpack.c.b16 %v1791, %v1787
    %v2524 = vpack.c.b16 %v1792, %v1788
    %v2525 = vpack.c.b16 %v1793, %v1789
    %v2526 = vpack.c.b16 %v1794, %v1790
    %v2527 = vpack.c.b16 %v1799, %v1795
    %v2528 = vpack.c.b16 %v1800, %v1796
    %v2529 = vpack.c.b16 %v1801, %v1797
    %v2530 = vpack.c.b16 %v1802, %v1798
    %v2531 = vpack.c.b16 %v1807, %v1803
    %v2532 = vpack.c.b16 %v1808, %v1804
    %v2533 = vpack.c.b16 %v1809, %v1805
    %v2534 = vpack.c.b16 %v1810, %v1806
    %v2535 = vpack.c.b16 %v1815, %v1811
    %v2536 = vpack.c.b16 %v1816, %v1812
    %v2537 = vpack.c.b16 %v1817, %v1813
    %v2538 = vpack.c.b16 %v1818, %v1814
    %v2539 = vpack.c.b16 %v1823, %v1819
    %v2540 = vpack.c.b16 %v1824, %v1820
    %v2541 = vpack.c.b16 %v1825, %v1821
    %v2542 = vpack.c.b16 %v1826, %v1822
    %v2543 = vpack.c.b16 %v1831, %v1827
    %v2544 = vpack.c.b16 %v1832, %v1828
    %v2545 = vpack.c.b16 %v1833, %v1829
    %v2546 = vpack.c.b16 %v1834, %v1830
    %v2547 = vpack.c.b16 %v1839, %v1835
    %v2548 = vpack.c.b16 %v1840, %v1836
    %v2549 = vpack.c.b16 %v1841, %v1837
    %v2550 = vpack.c.b16 %v1842, %v1838
    %v2551 = vpack.c.b16 %v1847, %v1843
    %v2552 = vpack.c.b16 %v1848, %v1844
    %v2553 = vpack.c.b16 %v1849, %v1845
    %v2554 = vpack.c.b16 %v1850, %v1846
    %v2555 = vpack.c.b16 %v1855, %v1851
    %v2556 = vpack.c.b16 %v1856, %v1852
    %v2557 = vpack.c.b16 %v1857, %v1853
    %v2558 = vpack.c.b16 %v1858, %v1854
    %v2559 = vpack.c.b16 %v1863, %v1859
    %v2560 = vpack.c.b16 %v1864, %v1860
    %v2561 = vpack.c.b16 %v1865, %v1861
    %v2562 = vpack.c.b16 %v1866, %v1862
    %v2563 = vpack.c.b16 %v1871, %v1867
    %v2564 = vpack.c.b16 %v1872, %v1868
    %v2565 = vpack.c.b16 %v1873, %v1869
    %v2566 = vpack.c.b16 %v1874, %v1870
    %v2567 = vpack.c.b16 %v1879, %v1875
    %v2568 = vpack.c.b16 %v1880, %v1876
    %v2569 = vpack.c.b16 %v1881, %v1877
    %v2570 = vpack.c.b16 %v1882, %v1878
    %v2571 = vpack.c.b16 %v1887, %v1883
    %v2572 = vpack.c.b16 %v1888, %v1884
    %v2573 = vpack.c.b16 %v1889, %v1885
    %v2574 = vpack.c.b16 %v1890, %v1886
    %v2575 = vpack.c.b16 %v1895, %v1891
    %v2576 = vpack.c.b16 %v1896, %v1892
    %v2577 = vpack.c.b16 %v1897, %v1893
    %v2578 = vpack.c.b16 %v1898, %v1894
    %v2579 = vpack.c.b16 %v1903, %v1899
    %v2580 = vpack.c.b16 %v1904, %v1900
    %v2581 = vpack.c.b16 %v1905, %v1901
    %v2582 = vpack.c.b16 %v1906, %v1902
    %v2583 = vpack.c.b16 %v1911, %v1907
    %v2584 = vpack.c.b16 %v1912, %v1908
    %v2585 = vpack.c.b16 %v1913, %v1909
    %v2586 = vpack.c.b16 %v1914, %v1910
    %v2587 = vpack.c.b16 %v1919, %v1915
    %v2588 = vpack.c.b16 %v1920, %v1916
    %v2589 = vpack.c.b16 %v1921, %v1917
    %v2590 = vpack.c.b16 %v1922, %v1918
    %v2591 = vpack.c.b16 %v1927, %v1923
    %v2592 = vpack.c.b16 %v1928, %v1924
    %v2593 = vpack.c.b16 %v1929, %v1925
    %v2594 = vpack.c.b16 %v1930, %v1926
    %v2595 = vpack.c.b16 %v1935, %v1931
    %v2596 = vpack.c.b16 %v1936, %v1932
    %v2597 = vpack.c.b16 %v1937, %v1933
    %v2598 = vpack.c.b16 %v1938, %v1934
    %v2599 = vpack.c.b16 %v1943, %v1939
    %v2600 = vpack.c.b16 %v1944, %v1940
    %v2601 = vpack.c.b16 %v1945, %v1941
    %v2602 = vpack.c.b16 %v1946, %v1942
    %v2603 = vpack.c.b16 %v1951, %v1947
    %v2604 = vpack.c.b16 %v1952, %v1948
    %v2605 = vpack.c.b16 %v1953, %v1949
    %v2606 = vpack.c.b16 %v1954, %v1950
    %v2607 = vpack.c.b16 %v1959, %v1955
    %v2608 = vpack.c.b16 %v1960, %v1956
    %v2609 = vpack.c.b16 %v1961, %v1957
    %v2610 = vpack.c.b16 %v1962, %v1958
    %v2611 = vpack.c.b16 %v1967, %v1963
    %v2612 = vpack.c.b16 %v1968, %v1964
    %v2613 = vpack.c.b16 %v1969, %v1965
    %v2614 = vpack.c.b16 %v1970, %v1966
    %v2615 = vpack.c.b16 %v1975, %v1971
    %v2616 = vpack.c.b16 %v1976, %v1972
    %v2617 = vpack.c.b16 %v1977, %v1973
    %v2618 = vpack.c.b16 %v1978, %v1974
    %v2619 = vpack.c.b16 %v1983, %v1979
    %v2620 = vpack.c.b16 %v1984, %v1980
    %v2621 = vpack.c.b16 %v1985, %v1981
    %v2622 = vpack.c.b16 %v1986, %v1982
    %v2623 = vpack.c.b16 %v1991, %v1987
    %v2624 = vpack.c.b16 %v1992, %v1988
    %v2625 = vpack.c.b16 %v1993, %v1989
    %v2626 = vpack.c.b16 %v1994, %v1990
    %v2627 = vpack.c.b16 %v1999, %v1995
    %v2628 = vpack.c.b16 %v2000, %v1996
    %v2629 = vpack.c.b16 %v2001, %v1997
    %v2630 = vpack.c.b16 %v2002, %v1998
    %v2631 = vpack.c.b16 %v2007, %v2003
    %v2632 = vpack.c.b16 %v2008, %v2004
    %v2633 = vpack.c.b16 %v2009, %v2005
    %v2634 = vpack.c.b16 %v2010, %v2006
    %v2635 = vpack.c.b16 %v2015, %v2011
    %v2636 = vpack.c.b16 %v2016, %v2012
    %v2637 = vpack.c.b16 %v2017, %v2013
    %v2638 = vpack.c.b16 %v2018, %v2014
    %v2639 = vpack.c.b16 %v2023, %v2019
    %v2640 = vpack.c.b16 %v2024, %v2020
    %v2641 = vpack.c.b16 %v2025, %v2021
    %v2642 = vpack.c.b16 %v2026, %v2022
    %v2643 = vpack.c.b16 %v2031, %v2027
    %v2644 = vpack.c.b16 %v2032, %v2028
    %v2645 = vpack.c.b16 %v2033, %v2029
    %v2646 = vpack.c.b16 %v2034, %v2030
    %v2647 = vpack.c.b16 %v2039, %v2035
    %v2648 = vpack.c.b16 %v2040, %v2036
    %v2649 = vpack.c.b16 %v2041, %v2037
    %v2650 = vpack.c.b16 %v2042, %v2038
    %v2651 = vpack.c.b16 %v2047, %v2043
    %v2652 = vpack.c.b16 %v2048, %v2044
    %v2653 = vpack.c.b16 %v2049, %v2045
    %v2654 = vpack.c.b16 %v2050, %v2046
    %v2655 = vpack.c.b16 %v2055, %v2051
    %v2656 = vpack.c.b16 %v2056, %v2052
    %v2657 = vpack.c.b16 %v2057, %v2053
    %v2658 = vpack.c.b16 %v2058, %v2054
    %v2659 = vpack.c.b16 %v2063, %v2059
    %v2660 = vpack.c.b16 %v2064, %v2060
    %v2661 = vpack.c.b16 %v2065, %v2061
    %v2662 = vpack.c.b16 %v2066, %v2062
    %v2663 = vpack.c.b16 %v2071, %v2067
    %v2664 = vpack.c.b16 %v2072, %v2068
    %v2665 = vpack.c.b16 %v2073, %v2069
    %v2666 = vpack.c.b16 %v2074, %v2070
    %v2667 = vpack.c.b16 %v2079, %v2075
    %v2668 = vpack.c.b16 %v2080, %v2076
    %v2669 = vpack.c.b16 %v2081, %v2077
    %v2670 = vpack.c.b16 %v2082, %v2078
    %v2671 = vpack.c.b16 %v2087, %v2083
    %v2672 = vpack.c.b16 %v2088, %v2084
    %v2673 = vpack.c.b16 %v2089, %v2085
    %v2674 = vpack.c.b16 %v2090, %v2086
    %v2675 = vpack.c.b16 %v2095, %v2091
    %v2676 = vpack.c.b16 %v2096, %v2092
    %v2677 = vpack.c.b16 %v2097, %v2093
    %v2678 = vpack.c.b16 %v2098, %v2094
    %v2679 = vpack.c.b16 %v2103, %v2099
    %v2680 = vpack.c.b16 %v2104, %v2100
    %v2681 = vpack.c.b16 %v2105, %v2101
    %v2682 = vpack.c.b16 %v2106, %v2102
    %v2683 = vpack.c.b16 %v2111, %v2107
    %v2684 = vpack.c.b16 %v2112, %v2108
    %v2685 = vpack.c.b16 %v2113, %v2109
    %v2686 = vpack.c.b16 %v2114, %v2110
    %v2687 = vpack.c.b16 %v2119, %v2115
    %v2688 = vpack.c.b16 %v2120, %v2116
    %v2689 = vpack.c.b16 %v2121, %v2117
    %v2690 = vpack.c.b16 %v2122, %v2118
    %v2691 = vpack.c.b16 %v2127, %v2123
    %v2692 = vpack.c.b16 %v2128, %v2124
    %v2693 = vpack.c.b16 %v2129, %v2125
    %v2694 = vpack.c.b16 %v2130, %v2126
    %v2695 = vpack.c.b16 %v2135, %v2131
    %v2696 = vpack.c.b16 %v2136, %v2132
    %v2697 = vpack.c.b16 %v2137, %v2133
    %v2698 = vpack.c.b16 %v2138, %v2134
    %v2699 = vpack.c.b16 %v2143, %v2139
    %v2700 = vpack.c.b16 %v2144, %v2140
    %v2701 = vpack.c.b16 %v2145, %v2141
    %v2702 = vpack.c.b16 %v2146, %v2142
    %v2703 = vpack.c.b16 %v2151, %v2147
    %v2704 = vpack.c.b16 %v2152, %v2148
    %v2705 = vpack.c.b16 %v2153, %v2149
    %v2706 = vpack.c.b16 %v2154, %v2150
    %v2707 = vpack.c.b16 %v2159, %v2155
    %v2708 = vpack.c.b16 %v2160, %v2156
    %v2709 = vpack.c.b16 %v2161, %v2157
    %v2710 = vpack.c.b16 %v2162, %v2158
    %v2711 = vpack.c.b16 %v2167, %v2163
    %v2712 = vpack.c.b16 %v2168, %v2164
    %v2713 = vpack.c.b16 %v2169, %v2165
    %v2714 = vpack.c.b16 %v2170, %v2166
    %v2715 = vpack.c.b16 %v2175, %v2171
    %v2716 = vpack.c.b16 %v2176, %v2172
    %v2717 = vpack.c.b16 %v2177, %v2173
    %v2718 = vpack.c.b16 %v2178, %v2174
    %v2719 = vpack.c.b16 %v2183, %v2179
    %v2720 = vpack.c.b16 %v2184, %v2180
    %v2721 = vpack.c.b16 %v2185, %v2181
    %v2722 = vpack.c.b16 %v2186, %v2182
    %v2723 = vpack.c.b16 %v2191, %v2187
    %v2724 = vpack.c.b16 %v2192, %v2188
    %v2725 = vpack.c.b16 %v2193, %v2189
    %v2726 = vpack.c.b16 %v2194, %v2190
    %v2727 = vpack.c.b16 %v2199, %v2195
    %v2728 = vpack.c.b16 %v2200, %v2196
    %v2729 = vpack.c.b16 %v2201, %v2197
    %v2730 = vpack.c.b16 %v2202, %v2198
    %v2731 = vpack.c.b16 %v2207, %v2203
    %v2732 = vpack.c.b16 %v2208, %v2204
    %v2733 = vpack.c.b16 %v2209, %v2205
    %v2734 = vpack.c.b16 %v2210, %v2206
    %v2735 = vpack.c.b16 %v2215, %v2211
    %v2736 = vpack.c.b16 %v2216, %v2212
    %v2737 = vpack.c.b16 %v2217, %v2213
    %v2738 = vpack.c.b16 %v2218, %v2214
    %v2739 = vpack.c.b16 %v2223, %v2219
    %v2740 = vpack.c.b16 %v2224, %v2220
    %v2741 = vpack.c.b16 %v2225, %v2221
    %v2742 = vpack.c.b16 %v2226, %v2222
    %v2743 = vpack.c.b16 %v2231, %v2227
    %v2744 = vpack.c.b16 %v2232, %v2228
    %v2745 = vpack.c.b16 %v2233, %v2229
    %v2746 = vpack.c.b16 %v2234, %v2230
    %3259 = vmatprep.subr.bf16.mxu0 %v2236
    %3260 = vmatpush1.bf16.msra.mxu0 %v2235
    %3261 = vmatprep.subr.bf16.mxu0 %v2240
    %3262 = vmatpush1.bf16.msra.mxu0 %v2239
    %3263 = vmatprep.subr.bf16.mxu0 %v2244
    %3264 = vmatpush1.bf16.msra.mxu0 %v2243
    %3265 = vmatprep.subr.bf16.mxu0 %v2248
    %3266 = vmatpush1.bf16.msra.mxu0 %v2247
    %3267 = vmatprep.subr.bf16.mxu0 %v2252
    %3268 = vmatpush1.bf16.msra.mxu0 %v2251
    %3269 = vmatprep.subr.bf16.mxu0 %v2256
    %3270 = vmatpush1.bf16.msra.mxu0 %v2255
    %3271 = vmatprep.subr.bf16.mxu0 %v2260
    %3272 = vmatpush1.bf16.msra.mxu0 %v2259
    %3273 = vmatprep.subr.bf16.mxu0 %v2264
    %3274 = vmatpush1.bf16.msra.mxu0 %v2263
    %3275 = vmatprep.subr.bf16.mxu0 %v2268
    %3276 = vmatpush1.bf16.msra.mxu0 %v2267
    %3277 = vmatprep.subr.bf16.mxu0 %v2272
    %3278 = vmatpush1.bf16.msra.mxu0 %v2271
    %3279 = vmatprep.subr.bf16.mxu0 %v2276
    %3280 = vmatpush1.bf16.msra.mxu0 %v2275
    %3281 = vmatprep.subr.bf16.mxu0 %v2280
    %3282 = vmatpush1.bf16.msra.mxu0 %v2279
    %3283 = vmatprep.subr.bf16.mxu0 %v2284
    %3284 = vmatpush1.bf16.msra.mxu0 %v2283
    %3285 = vmatprep.subr.bf16.mxu0 %v2288
    %3286 = vmatpush1.bf16.msra.mxu0 %v2287
    %3287 = vmatprep.subr.bf16.mxu0 %v2292
    %3288 = vmatpush1.bf16.msra.mxu0 %v2291
    %3289 = vmatprep.subr.bf16.mxu0 %v2296
    %3290 = vmatpush1.bf16.msra.mxu0 %v2295
    %3291 = vmatprep.mubr.bf16.mxu0 %v150
    %3292 = vmatmul.mubr.bf16.gmra.mrb[0].mxu0 %v149
    %v3293 = vpop.f32.mrb[0].mxu0
    %v3294 = vadd.f32 %v682, %v3293
    %v3295 = vpop.f32.mrb[0].mxu0
    %v3296 = vadd.f32 %v686, %v3295
    %v3297 = vpop.f32.mrb[0].mxu0
    %v3298 = vadd.f32 %v682, %v3297
    %v3299 = vpop.f32.mrb[0].mxu0
    %v3300 = vadd.f32 %v686, %v3299
    %3301 = vdwg.mxu0
    %3302 = vmatprep.subr.bf16.mxu0 %v2300
    %3303 = vmatpush1.bf16.msra.mxu0 %v2299
    %3304 = vmatprep.subr.bf16.mxu0 %v2304
    %3305 = vmatpush1.bf16.msra.mxu0 %v2303
    %3306 = vmatprep.subr.bf16.mxu0 %v2308
    %3307 = vmatpush1.bf16.msra.mxu0 %v2307
    %3308 = vmatprep.subr.bf16.mxu0 %v2312
    %3309 = vmatpush1.bf16.msra.mxu0 %v2311
    %3310 = vmatprep.subr.bf16.mxu0 %v2316
    %3311 = vmatpush1.bf16.msra.mxu0 %v2315
    %3312 = vmatprep.subr.bf16.mxu0 %v2320
    %3313 = vmatpush1.bf16.msra.mxu0 %v2319
    %3314 = vmatprep.subr.bf16.mxu0 %v2324
    %3315 = vmatpush1.bf16.msra.mxu0 %v2323
    %3316 = vmatprep.subr.bf16.mxu0 %v2328
    %3317 = vmatpush1.bf16.msra.mxu0 %v2327
    %3318 = vmatprep.subr.bf16.mxu0 %v2332
    %3319 = vmatpush1.bf16.msra.mxu0 %v2331
    %3320 = vmatprep.subr.bf16.mxu0 %v2336
    %3321 = vmatpush1.bf16.msra.mxu0 %v2335
    %3322 = vmatprep.subr.bf16.mxu0 %v2340
    %3323 = vmatpush1.bf16.msra.mxu0 %v2339
    %3324 = vmatprep.subr.bf16.mxu0 %v2344
    %3325 = vmatpush1.bf16.msra.mxu0 %v2343
    %3326 = vmatprep.subr.bf16.mxu0 %v2348
    %3327 = vmatpush1.bf16.msra.mxu0 %v2347
    %3328 = vmatprep.subr.bf16.mxu0 %v2352
    %3329 = vmatpush1.bf16.msra.mxu0 %v2351
    %3330 = vmatprep.subr.bf16.mxu0 %v2356
    %3331 = vmatpush1.bf16.msra.mxu0 %v2355
    %3332 = vmatprep.subr.bf16.mxu0 %v2360
    %3333 = vmatpush1.bf16.msra.mxu0 %v2359
    %3334 = vmatprep.mubr.bf16.mxu0 %v152
    %3335 = vmatmul.mubr.bf16.gmra.mrb[0].mxu0 %v151
    %v3336 = vpop.f32.mrb[0].mxu0
    %v3337 = vadd.f32 %v3294, %v3336
    %v3338 = vpop.f32.mrb[0].mxu0
    %v3339 = vadd.f32 %v3296, %v3338
    %v3340 = vpop.f32.mrb[0].mxu0
    %v3341 = vadd.f32 %v3298, %v3340
    %v3342 = vpop.f32.mrb[0].mxu0
    %v3343 = vadd.f32 %v3300, %v3342
    %3344 = vdwg.mxu0
    %3345 = vmatprep.subr.bf16.mxu0 %v2364
    %3346 = vmatpush1.bf16.msra.mxu0 %v2363
    %3347 = vmatprep.subr.bf16.mxu0 %v2368
    %3348 = vmatpush1.bf16.msra.mxu0 %v2367
    %3349 = vmatprep.subr.bf16.mxu0 %v2372
    %3350 = vmatpush1.bf16.msra.mxu0 %v2371
    %3351 = vmatprep.subr.bf16.mxu0 %v2376
    %3352 = vmatpush1.bf16.msra.mxu0 %v2375
    %3353 = vmatprep.subr.bf16.mxu0 %v2380
    %3354 = vmatpush1.bf16.msra.mxu0 %v2379
    %3355 = vmatprep.subr.bf16.mxu0 %v2384
    %3356 = vmatpush1.bf16.msra.mxu0 %v2383
    %3357 = vmatprep.subr.bf16.mxu0 %v2388
    %3358 = vmatpush1.bf16.msra.mxu0 %v2387
    %3359 = vmatprep.subr.bf16.mxu0 %v2392
    %3360 = vmatpush1.bf16.msra.mxu0 %v2391
    %3361 = vmatprep.subr.bf16.mxu0 %v2396
    %3362 = vmatpush1.bf16.msra.mxu0 %v2395
    %3363 = vmatprep.subr.bf16.mxu0 %v2400
    %3364 = vmatpush1.bf16.msra.mxu0 %v2399
    %3365 = vmatprep.subr.bf16.mxu0 %v2404
    %3366 = vmatpush1.bf16.msra.mxu0 %v2403
    %3367 = vmatprep.subr.bf16.mxu0 %v2408
    %3368 = vmatpush1.bf16.msra.mxu0 %v2407
    %3369 = vmatprep.subr.bf16.mxu0 %v2412
    %3370 = vmatpush1.bf16.msra.mxu0 %v2411
    %3371 = vmatprep.subr.bf16.mxu0 %v2416
    %3372 = vmatpush1.bf16.msra.mxu0 %v2415
    %3373 = vmatprep.subr.bf16.mxu0 %v2420
    %3374 = vmatpush1.bf16.msra.mxu0 %v2419
    %3375 = vmatprep.subr.bf16.mxu0 %v2424
    %3376 = vmatpush1.bf16.msra.mxu0 %v2423
    %3377 = vmatprep.mubr.bf16.mxu0 %v154
    %3378 = vmatmul.mubr.bf16.gmra.mrb[0].mxu0 %v153
    %v3379 = vpop.f32.mrb[0].mxu0
    %v3380 = vadd.f32 %v3337, %v3379
    %v3381 = vpop.f32.mrb[0].mxu0
    %v3382 = vadd.f32 %v3339, %v3381
    %v3383 = vpop.f32.mrb[0].mxu0
    %v3384 = vadd.f32 %v3341, %v3383
    %v3385 = vpop.f32.mrb[0].mxu0
    %v3386 = vadd.f32 %v3343, %v3385
    %3387 = vdwg.mxu0
    %3388 = vmatprep.subr.bf16.mxu0 %v2428
    %3389 = vmatpush1.bf16.msra.mxu0 %v2427
    %3390 = vmatprep.subr.bf16.mxu0 %v2432
    %3391 = vmatpush1.bf16.msra.mxu0 %v2431
    %3392 = vmatprep.subr.bf16.mxu0 %v2436
    %3393 = vmatpush1.bf16.msra.mxu0 %v2435
    %3394 = vmatprep.subr.bf16.mxu0 %v2440
    %3395 = vmatpush1.bf16.msra.mxu0 %v2439
    %3396 = vmatprep.subr.bf16.mxu0 %v2444
    %3397 = vmatpush1.bf16.msra.mxu0 %v2443
    %3398 = vmatprep.subr.bf16.mxu0 %v2448
    %3399 = vmatpush1.bf16.msra.mxu0 %v2447
    %3400 = vmatprep.subr.bf16.mxu0 %v2452
    %3401 = vmatpush1.bf16.msra.mxu0 %v2451
    %3402 = vmatprep.subr.bf16.mxu0 %v2456
    %3403 = vmatpush1.bf16.msra.mxu0 %v2455
    %3404 = vmatprep.subr.bf16.mxu0 %v2460
    %3405 = vmatpush1.bf16.msra.mxu0 %v2459
    %3406 = vmatprep.subr.bf16.mxu0 %v2464
    %3407 = vmatpush1.bf16.msra.mxu0 %v2463
    %3408 = vmatprep.subr.bf16.mxu0 %v2468
    %3409 = vmatpush1.bf16.msra.mxu0 %v2467
    %3410 = vmatprep.subr.bf16.mxu0 %v2472
    %3411 = vmatpush1.bf16.msra.mxu0 %v2471
    %3412 = vmatprep.subr.bf16.mxu0 %v2476
    %3413 = vmatpush1.bf16.msra.mxu0 %v2475
    %3414 = vmatprep.subr.bf16.mxu0 %v2480
    %3415 = vmatpush1.bf16.msra.mxu0 %v2479
    %3416 = vmatprep.subr.bf16.mxu0 %v2484
    %3417 = vmatpush1.bf16.msra.mxu0 %v2483
    %3418 = vmatprep.subr.bf16.mxu0 %v2488
    %3419 = vmatpush1.bf16.msra.mxu0 %v2487
    %3420 = vmatprep.mubr.bf16.mxu0 %v156
    %3421 = vmatmul.mubr.bf16.gmra.mrb[0].mxu0 %v155
    %v3422 = vpop.f32.mrb[0].mxu0
    %v3423 = vadd.f32 %v3380, %v3422
    %v3424 = vpop.f32.mrb[0].mxu0
    %v3425 = vadd.f32 %v3382, %v3424
    %v3426 = vpop.f32.mrb[0].mxu0
    %v3427 = vadd.f32 %v3384, %v3426
    %v3428 = vpop.f32.mrb[0].mxu0
    %v3429 = vadd.f32 %v3386, %v3428
    %3430 = vdwg.mxu0
    %3431 = vmatprep.subr.bf16.mxu0 %v2492
    %3432 = vmatpush1.bf16.msra.mxu0 %v2491
    %3433 = vmatprep.subr.bf16.mxu0 %v2496
    %3434 = vmatpush1.bf16.msra.mxu0 %v2495
    %3435 = vmatprep.subr.bf16.mxu0 %v2500
    %3436 = vmatpush1.bf16.msra.mxu0 %v2499
    %3437 = vmatprep.subr.bf16.mxu0 %v2504
    %3438 = vmatpush1.bf16.msra.mxu0 %v2503
    %3439 = vmatprep.subr.bf16.mxu0 %v2508
    %3440 = vmatpush1.bf16.msra.mxu0 %v2507
    %3441 = vmatprep.subr.bf16.mxu0 %v2512
    %3442 = vmatpush1.bf16.msra.mxu0 %v2511
    %3443 = vmatprep.subr.bf16.mxu0 %v2516
    %3444 = vmatpush1.bf16.msra.mxu0 %v2515
    %3445 = vmatprep.subr.bf16.mxu0 %v2520
    %3446 = vmatpush1.bf16.msra.mxu0 %v2519
    %3447 = vmatprep.subr.bf16.mxu0 %v2524
    %3448 = vmatpush1.bf16.msra.mxu0 %v2523
    %3449 = vmatprep.subr.bf16.mxu0 %v2528
    %3450 = vmatpush1.bf16.msra.mxu0 %v2527
    %3451 = vmatprep.subr.bf16.mxu0 %v2532
    %3452 = vmatpush1.bf16.msra.mxu0 %v2531
    %3453 = vmatprep.subr.bf16.mxu0 %v2536
    %3454 = vmatpush1.bf16.msra.mxu0 %v2535
    %3455 = vmatprep.subr.bf16.mxu0 %v2540
    %3456 = vmatpush1.bf16.msra.mxu0 %v2539
    %3457 = vmatprep.subr.bf16.mxu0 %v2544
    %3458 = vmatpush1.bf16.msra.mxu0 %v2543
    %3459 = vmatprep.subr.bf16.mxu0 %v2548
    %3460 = vmatpush1.bf16.msra.mxu0 %v2547
    %3461 = vmatprep.subr.bf16.mxu0 %v2552
    %3462 = vmatpush1.bf16.msra.mxu0 %v2551
    %3463 = vmatprep.mubr.bf16.mxu0 %v158
    %3464 = vmatmul.mubr.bf16.gmra.mrb[0].mxu0 %v157
    %v3465 = vpop.f32.mrb[0].mxu0
    %v3466 = vadd.f32 %v3423, %v3465
    %v3467 = vpop.f32.mrb[0].mxu0
    %v3468 = vadd.f32 %v3425, %v3467
    %v3469 = vpop.f32.mrb[0].mxu0
    %v3470 = vadd.f32 %v3427, %v3469
    %v3471 = vpop.f32.mrb[0].mxu0
    %v3472 = vadd.f32 %v3429, %v3471
    %3473 = vdwg.mxu0
    %3474 = vmatprep.subr.bf16.mxu0 %v2556
    %3475 = vmatpush1.bf16.msra.mxu0 %v2555
    %3476 = vmatprep.subr.bf16.mxu0 %v2560
    %3477 = vmatpush1.bf16.msra.mxu0 %v2559
    %3478 = vmatprep.subr.bf16.mxu0 %v2564
    %3479 = vmatpush1.bf16.msra.mxu0 %v2563
    %3480 = vmatprep.subr.bf16.mxu0 %v2568
    %3481 = vmatpush1.bf16.msra.mxu0 %v2567
    %3482 = vmatprep.subr.bf16.mxu0 %v2572
    %3483 = vmatpush1.bf16.msra.mxu0 %v2571
    %3484 = vmatprep.subr.bf16.mxu0 %v2576
    %3485 = vmatpush1.bf16.msra.mxu0 %v2575
    %3486 = vmatprep.subr.bf16.mxu0 %v2580
    %3487 = vmatpush1.bf16.msra.mxu0 %v2579
    %3488 = vmatprep.subr.bf16.mxu0 %v2584
    %3489 = vmatpush1.bf16.msra.mxu0 %v2583
    %3490 = vmatprep.subr.bf16.mxu0 %v2588
    %3491 = vmatpush1.bf16.msra.mxu0 %v2587
    %3492 = vmatprep.subr.bf16.mxu0 %v2592
    %3493 = vmatpush1.bf16.msra.mxu0 %v2591
    %3494 = vmatprep.subr.bf16.mxu0 %v2596
    %3495 = vmatpush1.bf16.msra.mxu0 %v2595
    %3496 = vmatprep.subr.bf16.mxu0 %v2600
    %3497 = vmatpush1.bf16.msra.mxu0 %v2599
    %3498 = vmatprep.subr.bf16.mxu0 %v2604
    %3499 = vmatpush1.bf16.msra.mxu0 %v2603
    %3500 = vmatprep.subr.bf16.mxu0 %v2608
    %3501 = vmatpush1.bf16.msra.mxu0 %v2607
    %3502 = vmatprep.subr.bf16.mxu0 %v2612
    %3503 = vmatpush1.bf16.msra.mxu0 %v2611
    %3504 = vmatprep.subr.bf16.mxu0 %v2616
    %3505 = vmatpush1.bf16.msra.mxu0 %v2615
    %3506 = vmatprep.mubr.bf16.mxu0 %v160
    %3507 = vmatmul.mubr.bf16.gmra.mrb[0].mxu0 %v159
    %v3508 = vpop.f32.mrb[0].mxu0
    %v3509 = vadd.f32 %v3466, %v3508
    %v3510 = vpop.f32.mrb[0].mxu0
    %v3511 = vadd.f32 %v3468, %v3510
    %v3512 = vpop.f32.mrb[0].mxu0
    %v3513 = vadd.f32 %v3470, %v3512
    %v3514 = vpop.f32.mrb[0].mxu0
    %v3515 = vadd.f32 %v3472, %v3514
    %3516 = vdwg.mxu0
    %3517 = vmatprep.subr.bf16.mxu0 %v2620
    %3518 = vmatpush1.bf16.msra.mxu0 %v2619
    %3519 = vmatprep.subr.bf16.mxu0 %v2624
    %3520 = vmatpush1.bf16.msra.mxu0 %v2623
    %3521 = vmatprep.subr.bf16.mxu0 %v2628
    %3522 = vmatpush1.bf16.msra.mxu0 %v2627
    %3523 = vmatprep.subr.bf16.mxu0 %v2632
    %3524 = vmatpush1.bf16.msra.mxu0 %v2631
    %3525 = vmatprep.subr.bf16.mxu0 %v2636
    %3526 = vmatpush1.bf16.msra.mxu0 %v2635
    %3527 = vmatprep.subr.bf16.mxu0 %v2640
    %3528 = vmatpush1.bf16.msra.mxu0 %v2639
    %3529 = vmatprep.subr.bf16.mxu0 %v2644
    %3530 = vmatpush1.bf16.msra.mxu0 %v2643
    %3531 = vmatprep.subr.bf16.mxu0 %v2648
    %3532 = vmatpush1.bf16.msra.mxu0 %v2647
    %3533 = vmatprep.subr.bf16.mxu0 %v2652
    %3534 = vmatpush1.bf16.msra.mxu0 %v2651
    %3535 = vmatprep.subr.bf16.mxu0 %v2656
    %3536 = vmatpush1.bf16.msra.mxu0 %v2655
    %3537 = vmatprep.subr.bf16.mxu0 %v2660
    %3538 = vmatpush1.bf16.msra.mxu0 %v2659
    %3539 = vmatprep.subr.bf16.mxu0 %v2664
    %3540 = vmatpush1.bf16.msra.mxu0 %v2663
    %3541 = vmatprep.subr.bf16.mxu0 %v2668
    %3542 = vmatpush1.bf16.msra.mxu0 %v2667
    %3543 = vmatprep.subr.bf16.mxu0 %v2672
    %3544 = vmatpush1.bf16.msra.mxu0 %v2671
    %3545 = vmatprep.subr.bf16.mxu0 %v2676
    %3546 = vmatpush1.bf16.msra.mxu0 %v2675
    %3547 = vmatprep.subr.bf16.mxu0 %v2680
    %3548 = vmatpush1.bf16.msra.mxu0 %v2679
    %3549 = vmatprep.mubr.bf16.mxu0 %v162
    %3550 = vmatmul.mubr.bf16.gmra.mrb[0].mxu0 %v161
    %v3551 = vpop.f32.mrb[0].mxu0
    %v3552 = vadd.f32 %v3509, %v3551
    %v3553 = vpop.f32.mrb[0].mxu0
    %v3554 = vadd.f32 %v3511, %v3553
    %v3555 = vpop.f32.mrb[0].mxu0
    %v3556 = vadd.f32 %v3513, %v3555
    %v3557 = vpop.f32.mrb[0].mxu0
    %v3558 = vadd.f32 %v3515, %v3557
    %3559 = vdwg.mxu0
    %3560 = vmatprep.subr.bf16.mxu0 %v2684
    %3561 = vmatpush1.bf16.msra.mxu0 %v2683
    %3562 = vmatprep.subr.bf16.mxu0 %v2688
    %3563 = vmatpush1.bf16.msra.mxu0 %v2687
    %3564 = vmatprep.subr.bf16.mxu0 %v2692
    %3565 = vmatpush1.bf16.msra.mxu0 %v2691
    %3566 = vmatprep.subr.bf16.mxu0 %v2696
    %3567 = vmatpush1.bf16.msra.mxu0 %v2695
    %3568 = vmatprep.subr.bf16.mxu0 %v2700
    %3569 = vmatpush1.bf16.msra.mxu0 %v2699
    %3570 = vmatprep.subr.bf16.mxu0 %v2704
    %3571 = vmatpush1.bf16.msra.mxu0 %v2703
    %3572 = vmatprep.subr.bf16.mxu0 %v2708
    %3573 = vmatpush1.bf16.msra.mxu0 %v2707
    %3574 = vmatprep.subr.bf16.mxu0 %v2712
    %3575 = vmatpush1.bf16.msra.mxu0 %v2711
    %3576 = vmatprep.subr.bf16.mxu0 %v2716
    %3577 = vmatpush1.bf16.msra.mxu0 %v2715
    %3578 = vmatprep.subr.bf16.mxu0 %v2720
    %3579 = vmatpush1.bf16.msra.mxu0 %v2719
    %3580 = vmatprep.subr.bf16.mxu0 %v2724
    %3581 = vmatpush1.bf16.msra.mxu0 %v2723
    %3582 = vmatprep.subr.bf16.mxu0 %v2728
    %3583 = vmatpush1.bf16.msra.mxu0 %v2727
    %3584 = vmatprep.subr.bf16.mxu0 %v2732
    %3585 = vmatpush1.bf16.msra.mxu0 %v2731
    %3586 = vmatprep.subr.bf16.mxu0 %v2736
    %3587 = vmatpush1.bf16.msra.mxu0 %v2735
    %3588 = vmatprep.subr.bf16.mxu0 %v2740
    %3589 = vmatpush1.bf16.msra.mxu0 %v2739
    %3590 = vmatprep.subr.bf16.mxu0 %v2744
    %3591 = vmatpush1.bf16.msra.mxu0 %v2743
    %3592 = vmatprep.mubr.bf16.mxu0 %v164
    %3593 = vmatmul.mubr.bf16.gmra.mrb[0].mxu0 %v163
    %v3594 = vpop.f32.mrb[0].mxu0
    %v3595 = vadd.f32 %v3552, %v3594
    %v3596 = vpop.f32.mrb[0].mxu0
    %v3597 = vadd.f32 %v3554, %v3596
    %v3598 = vpop.f32.mrb[0].mxu0
    %v3599 = vadd.f32 %v3556, %v3598
    %v3600 = vpop.f32.mrb[0].mxu0
    %v3601 = vadd.f32 %v3558, %v3600
    %3602 = vdwg.mxu0
    %3603 = vmatprep.subr.bf16.mxu0 %v2238
    %3604 = vmatpush1.bf16.msra.mxu0 %v2237
    %3605 = vmatprep.subr.bf16.mxu0 %v2242
    %3606 = vmatpush1.bf16.msra.mxu0 %v2241
    %3607 = vmatprep.subr.bf16.mxu0 %v2246
    %3608 = vmatpush1.bf16.msra.mxu0 %v2245
    %3609 = vmatprep.subr.bf16.mxu0 %v2250
    %3610 = vmatpush1.bf16.msra.mxu0 %v2249
    %3611 = vmatprep.subr.bf16.mxu0 %v2254
    %3612 = vmatpush1.bf16.msra.mxu0 %v2253
    %3613 = vmatprep.subr.bf16.mxu0 %v2258
    %3614 = vmatpush1.bf16.msra.mxu0 %v2257
    %3615 = vmatprep.subr.bf16.mxu0 %v2262
    %3616 = vmatpush1.bf16.msra.mxu0 %v2261
    %3617 = vmatprep.subr.bf16.mxu0 %v2266
    %3618 = vmatpush1.bf16.msra.mxu0 %v2265
    %3619 = vmatprep.subr.bf16.mxu0 %v2270
    %3620 = vmatpush1.bf16.msra.mxu0 %v2269
    %3621 = vmatprep.subr.bf16.mxu0 %v2274
    %3622 = vmatpush1.bf16.msra.mxu0 %v2273
    %3623 = vmatprep.subr.bf16.mxu0 %v2278
    %3624 = vmatpush1.bf16.msra.mxu0 %v2277
    %3625 = vmatprep.subr.bf16.mxu0 %v2282
    %3626 = vmatpush1.bf16.msra.mxu0 %v2281
    %3627 = vmatprep.subr.bf16.mxu0 %v2286
    %3628 = vmatpush1.bf16.msra.mxu0 %v2285
    %3629 = vmatprep.subr.bf16.mxu0 %v2290
    %3630 = vmatpush1.bf16.msra.mxu0 %v2289
    %3631 = vmatprep.subr.bf16.mxu0 %v2294
    %3632 = vmatpush1.bf16.msra.mxu0 %v2293
    %3633 = vmatprep.subr.bf16.mxu0 %v2298
    %3634 = vmatpush1.bf16.msra.mxu0 %v2297
    %3635 = vmatprep.mubr.bf16.mxu0 %v150
    %3636 = vmatmul.mubr.bf16.gmra.mrb[0].mxu0 %v149
    %v3637 = vpop.f32.mrb[0].mxu0
    %v3638 = vadd.f32 %v690, %v3637
    %v3639 = vpop.f32.mrb[0].mxu0
    %v3640 = vadd.f32 %v694, %v3639
    %v3641 = vpop.f32.mrb[0].mxu0
    %v3642 = vadd.f32 %v690, %v3641
    %v3643 = vpop.f32.mrb[0].mxu0
    %v3644 = vadd.f32 %v694, %v3643
    %3645 = vdwg.mxu0
    %3646 = vmatprep.subr.bf16.mxu0 %v2302
    %3647 = vmatpush1.bf16.msra.mxu0 %v2301
    %3648 = vmatprep.subr.bf16.mxu0 %v2306
    %3649 = vmatpush1.bf16.msra.mxu0 %v2305
    %3650 = vmatprep.subr.bf16.mxu0 %v2310
    %3651 = vmatpush1.bf16.msra.mxu0 %v2309
    %3652 = vmatprep.subr.bf16.mxu0 %v2314
    %3653 = vmatpush1.bf16.msra.mxu0 %v2313
    %3654 = vmatprep.subr.bf16.mxu0 %v2318
    %3655 = vmatpush1.bf16.msra.mxu0 %v2317
    %3656 = vmatprep.subr.bf16.mxu0 %v2322
    %3657 = vmatpush1.bf16.msra.mxu0 %v2321
    %3658 = vmatprep.subr.bf16.mxu0 %v2326
    %3659 = vmatpush1.bf16.msra.mxu0 %v2325
    %3660 = vmatprep.subr.bf16.mxu0 %v2330
    %3661 = vmatpush1.bf16.msra.mxu0 %v2329
    %3662 = vmatprep.subr.bf16.mxu0 %v2334
    %3663 = vmatpush1.bf16.msra.mxu0 %v2333
    %3664 = vmatprep.subr.bf16.mxu0 %v2338
    %3665 = vmatpush1.bf16.msra.mxu0 %v2337
    %3666 = vmatprep.subr.bf16.mxu0 %v2342
    %3667 = vmatpush1.bf16.msra.mxu0 %v2341
    %3668 = vmatprep.subr.bf16.mxu0 %v2346
    %3669 = vmatpush1.bf16.msra.mxu0 %v2345
    %3670 = vmatprep.subr.bf16.mxu0 %v2350
    %3671 = vmatpush1.bf16.msra.mxu0 %v2349
    %3672 = vmatprep.subr.bf16.mxu0 %v2354
    %3673 = vmatpush1.bf16.msra.mxu0 %v2353
    %3674 = vmatprep.subr.bf16.mxu0 %v2358
    %3675 = vmatpush1.bf16.msra.mxu0 %v2357
    %3676 = vmatprep.subr.bf16.mxu0 %v2362
    %3677 = vmatpush1.bf16.msra.mxu0 %v2361
    %3678 = vmatprep.mubr.bf16.mxu0 %v152
    %3679 = vmatmul.mubr.bf16.gmra.mrb[0].mxu0 %v151
    %v3680 = vpop.f32.mrb[0].mxu0
    %v3681 = vadd.f32 %v3638, %v3680
    %v3682 = vpop.f32.mrb[0].mxu0
    %v3683 = vadd.f32 %v3640, %v3682
    %v3684 = vpop.f32.mrb[0].mxu0
    %v3685 = vadd.f32 %v3642, %v3684
    %v3686 = vpop.f32.mrb[0].mxu0
    %v3687 = vadd.f32 %v3644, %v3686
    %3688 = vdwg.mxu0
    %3689 = vmatprep.subr.bf16.mxu0 %v2366
    %3690 = vmatpush1.bf16.msra.mxu0 %v2365
    %3691 = vmatprep.subr.bf16.mxu0 %v2370
    %3692 = vmatpush1.bf16.msra.mxu0 %v2369
    %3693 = vmatprep.subr.bf16.mxu0 %v2374
    %3694 = vmatpush1.bf16.msra.mxu0 %v2373
    %3695 = vmatprep.subr.bf16.mxu0 %v2378
    %3696 = vmatpush1.bf16.msra.mxu0 %v2377
    %3697 = vmatprep.subr.bf16.mxu0 %v2382
    %3698 = vmatpush1.bf16.msra.mxu0 %v2381
    %3699 = vmatprep.subr.bf16.mxu0 %v2386
    %3700 = vmatpush1.bf16.msra.mxu0 %v2385
    %3701 = vmatprep.subr.bf16.mxu0 %v2390
    %3702 = vmatpush1.bf16.msra.mxu0 %v2389
    %3703 = vmatprep.subr.bf16.mxu0 %v2394
    %3704 = vmatpush1.bf16.msra.mxu0 %v2393
    %3705 = vmatprep.subr.bf16.mxu0 %v2398
    %3706 = vmatpush1.bf16.msra.mxu0 %v2397
    %3707 = vmatprep.subr.bf16.mxu0 %v2402
    %3708 = vmatpush1.bf16.msra.mxu0 %v2401
    %3709 = vmatprep.subr.bf16.mxu0 %v2406
    %3710 = vmatpush1.bf16.msra.mxu0 %v2405
    %3711 = vmatprep.subr.bf16.mxu0 %v2410
    %3712 = vmatpush1.bf16.msra.mxu0 %v2409
    %3713 = vmatprep.subr.bf16.mxu0 %v2414
    %3714 = vmatpush1.bf16.msra.mxu0 %v2413
    %3715 = vmatprep.subr.bf16.mxu0 %v2418
    %3716 = vmatpush1.bf16.msra.mxu0 %v2417
    %3717 = vmatprep.subr.bf16.mxu0 %v2422
    %3718 = vmatpush1.bf16.msra.mxu0 %v2421
    %3719 = vmatprep.subr.bf16.mxu0 %v2426
    %3720 = vmatpush1.bf16.msra.mxu0 %v2425
    %3721 = vmatprep.mubr.bf16.mxu0 %v154
    %3722 = vmatmul.mubr.bf16.gmra.mrb[0].mxu0 %v153
    %v3723 = vpop.f32.mrb[0].mxu0
    %v3724 = vadd.f32 %v3681, %v3723
    %v3725 = vpop.f32.mrb[0].mxu0
    %v3726 = vadd.f32 %v3683, %v3725
    %v3727 = vpop.f32.mrb[0].mxu0
    %v3728 = vadd.f32 %v3685, %v3727
    %v3729 = vpop.f32.mrb[0].mxu0
    %v3730 = vadd.f32 %v3687, %v3729
    %3731 = vdwg.mxu0
    %3732 = vmatprep.subr.bf16.mxu0 %v2430
    %3733 = vmatpush1.bf16.msra.mxu0 %v2429
    %3734 = vmatprep.subr.bf16.mxu0 %v2434
    %3735 = vmatpush1.bf16.msra.mxu0 %v2433
    %3736 = vmatprep.subr.bf16.mxu0 %v2438
    %3737 = vmatpush1.bf16.msra.mxu0 %v2437
    %3738 = vmatprep.subr.bf16.mxu0 %v2442
    %3739 = vmatpush1.bf16.msra.mxu0 %v2441
    %3740 = vmatprep.subr.bf16.mxu0 %v2446
    %3741 = vmatpush1.bf16.msra.mxu0 %v2445
    %3742 = vmatprep.subr.bf16.mxu0 %v2450
    %3743 = vmatpush1.bf16.msra.mxu0 %v2449
    %3744 = vmatprep.subr.bf16.mxu0 %v2454
    %3745 = vmatpush1.bf16.msra.mxu0 %v2453
    %3746 = vmatprep.subr.bf16.mxu0 %v2458
    %3747 = vmatpush1.bf16.msra.mxu0 %v2457
    %3748 = vmatprep.subr.bf16.mxu0 %v2462
    %3749 = vmatpush1.bf16.msra.mxu0 %v2461
    %3750 = vmatprep.subr.bf16.mxu0 %v2466
    %3751 = vmatpush1.bf16.msra.mxu0 %v2465
    %3752 = vmatprep.subr.bf16.mxu0 %v2470
    %3753 = vmatpush1.bf16.msra.mxu0 %v2469
    %3754 = vmatprep.subr.bf16.mxu0 %v2474
    %3755 = vmatpush1.bf16.msra.mxu0 %v2473
    %3756 = vmatprep.subr.bf16.mxu0 %v2478
    %3757 = vmatpush1.bf16.msra.mxu0 %v2477
    %3758 = vmatprep.subr.bf16.mxu0 %v2482
    %3759 = vmatpush1.bf16.msra.mxu0 %v2481
    %3760 = vmatprep.subr.bf16.mxu0 %v2486
    %3761 = vmatpush1.bf16.msra.mxu0 %v2485
    %3762 = vmatprep.subr.bf16.mxu0 %v2490
    %3763 = vmatpush1.bf16.msra.mxu0 %v2489
    %3764 = vmatprep.mubr.bf16.mxu0 %v156
    %3765 = vmatmul.mubr.bf16.gmra.mrb[0].mxu0 %v155
    %v3766 = vpop.f32.mrb[0].mxu0
    %v3767 = vadd.f32 %v3724, %v3766
    %v3768 = vpop.f32.mrb[0].mxu0
    %v3769 = vadd.f32 %v3726, %v3768
    %v3770 = vpop.f32.mrb[0].mxu0
    %v3771 = vadd.f32 %v3728, %v3770
    %v3772 = vpop.f32.mrb[0].mxu0
    %v3773 = vadd.f32 %v3730, %v3772
    %3774 = vdwg.mxu0
    %3775 = vmatprep.subr.bf16.mxu0 %v2494
    %3776 = vmatpush1.bf16.msra.mxu0 %v2493
    %3777 = vmatprep.subr.bf16.mxu0 %v2498
    %3778 = vmatpush1.bf16.msra.mxu0 %v2497
    %3779 = vmatprep.subr.bf16.mxu0 %v2502
    %3780 = vmatpush1.bf16.msra.mxu0 %v2501
    %3781 = vmatprep.subr.bf16.mxu0 %v2506
    %3782 = vmatpush1.bf16.msra.mxu0 %v2505
    %3783 = vmatprep.subr.bf16.mxu0 %v2510
    %3784 = vmatpush1.bf16.msra.mxu0 %v2509
    %3785 = vmatprep.subr.bf16.mxu0 %v2514
    %3786 = vmatpush1.bf16.msra.mxu0 %v2513
    %3787 = vmatprep.subr.bf16.mxu0 %v2518
    %3788 = vmatpush1.bf16.msra.mxu0 %v2517
    %3789 = vmatprep.subr.bf16.mxu0 %v2522
    %3790 = vmatpush1.bf16.msra.mxu0 %v2521
    %3791 = vmatprep.subr.bf16.mxu0 %v2526
    %3792 = vmatpush1.bf16.msra.mxu0 %v2525
    %3793 = vmatprep.subr.bf16.mxu0 %v2530
    %3794 = vmatpush1.bf16.msra.mxu0 %v2529
    %3795 = vmatprep.subr.bf16.mxu0 %v2534
    %3796 = vmatpush1.bf16.msra.mxu0 %v2533
    %3797 = vmatprep.subr.bf16.mxu0 %v2538
    %3798 = vmatpush1.bf16.msra.mxu0 %v2537
    %3799 = vmatprep.subr.bf16.mxu0 %v2542
    %3800 = vmatpush1.bf16.msra.mxu0 %v2541
    %3801 = vmatprep.subr.bf16.mxu0 %v2546
    %3802 = vmatpush1.bf16.msra.mxu0 %v2545
    %3803 = vmatprep.subr.bf16.mxu0 %v2550
    %3804 = vmatpush1.bf16.msra.mxu0 %v2549
    %3805 = vmatprep.subr.bf16.mxu0 %v2554
    %3806 = vmatpush1.bf16.msra.mxu0 %v2553
    %3807 = vmatprep.mubr.bf16.mxu0 %v158
    %3808 = vmatmul.mubr.bf16.gmra.mrb[0].mxu0 %v157
    %v3809 = vpop.f32.mrb[0].mxu0
    %v3810 = vadd.f32 %v3767, %v3809
    %v3811 = vpop.f32.mrb[0].mxu0
    %v3812 = vadd.f32 %v3769, %v3811
    %v3813 = vpop.f32.mrb[0].mxu0
    %v3814 = vadd.f32 %v3771, %v3813
    %v3815 = vpop.f32.mrb[0].mxu0
    %v3816 = vadd.f32 %v3773, %v3815
    %3817 = vdwg.mxu0
    %3818 = vmatprep.subr.bf16.mxu0 %v2558
    %3819 = vmatpush1.bf16.msra.mxu0 %v2557
    %3820 = vmatprep.subr.bf16.mxu0 %v2562
    %3821 = vmatpush1.bf16.msra.mxu0 %v2561
    %3822 = vmatprep.subr.bf16.mxu0 %v2566
    %3823 = vmatpush1.bf16.msra.mxu0 %v2565
    %3824 = vmatprep.subr.bf16.mxu0 %v2570
    %3825 = vmatpush1.bf16.msra.mxu0 %v2569
    %3826 = vmatprep.subr.bf16.mxu0 %v2574
    %3827 = vmatpush1.bf16.msra.mxu0 %v2573
    %3828 = vmatprep.subr.bf16.mxu0 %v2578
    %3829 = vmatpush1.bf16.msra.mxu0 %v2577
    %3830 = vmatprep.subr.bf16.mxu0 %v2582
    %3831 = vmatpush1.bf16.msra.mxu0 %v2581
    %3832 = vmatprep.subr.bf16.mxu0 %v2586
    %3833 = vmatpush1.bf16.msra.mxu0 %v2585
    %3834 = vmatprep.subr.bf16.mxu0 %v2590
    %3835 = vmatpush1.bf16.msra.mxu0 %v2589
    %3836 = vmatprep.subr.bf16.mxu0 %v2594
    %3837 = vmatpush1.bf16.msra.mxu0 %v2593
    %3838 = vmatprep.subr.bf16.mxu0 %v2598
    %3839 = vmatpush1.bf16.msra.mxu0 %v2597
    %3840 = vmatprep.subr.bf16.mxu0 %v2602
    %3841 = vmatpush1.bf16.msra.mxu0 %v2601
    %3842 = vmatprep.subr.bf16.mxu0 %v2606
    %3843 = vmatpush1.bf16.msra.mxu0 %v2605
    %3844 = vmatprep.subr.bf16.mxu0 %v2610
    %3845 = vmatpush1.bf16.msra.mxu0 %v2609
    %3846 = vmatprep.subr.bf16.mxu0 %v2614
    %3847 = vmatpush1.bf16.msra.mxu0 %v2613
    %3848 = vmatprep.subr.bf16.mxu0 %v2618
    %3849 = vmatpush1.bf16.msra.mxu0 %v2617
    %3850 = vmatprep.mubr.bf16.mxu0 %v160
    %3851 = vmatmul.mubr.bf16.gmra.mrb[0].mxu0 %v159
    %v3852 = vpop.f32.mrb[0].mxu0
    %v3853 = vadd.f32 %v3810, %v3852
    %v3854 = vpop.f32.mrb[0].mxu0
    %v3855 = vadd.f32 %v3812, %v3854
    %v3856 = vpop.f32.mrb[0].mxu0
    %v3857 = vadd.f32 %v3814, %v3856
    %v3858 = vpop.f32.mrb[0].mxu0
    %v3859 = vadd.f32 %v3816, %v3858
    %3860 = vdwg.mxu0
    %3861 = vmatprep.subr.bf16.mxu0 %v2622
    %3862 = vmatpush1.bf16.msra.mxu0 %v2621
    %3863 = vmatprep.subr.bf16.mxu0 %v2626
    %3864 = vmatpush1.bf16.msra.mxu0 %v2625
    %3865 = vmatprep.subr.bf16.mxu0 %v2630
    %3866 = vmatpush1.bf16.msra.mxu0 %v2629
    %3867 = vmatprep.subr.bf16.mxu0 %v2634
    %3868 = vmatpush1.bf16.msra.mxu0 %v2633
    %3869 = vmatprep.subr.bf16.mxu0 %v2638
    %3870 = vmatpush1.bf16.msra.mxu0 %v2637
    %3871 = vmatprep.subr.bf16.mxu0 %v2642
    %3872 = vmatpush1.bf16.msra.mxu0 %v2641
    %3873 = vmatprep.subr.bf16.mxu0 %v2646
    %3874 = vmatpush1.bf16.msra.mxu0 %v2645
    %3875 = vmatprep.subr.bf16.mxu0 %v2650
    %3876 = vmatpush1.bf16.msra.mxu0 %v2649
    %3877 = vmatprep.subr.bf16.mxu0 %v2654
    %3878 = vmatpush1.bf16.msra.mxu0 %v2653
    %3879 = vmatprep.subr.bf16.mxu0 %v2658
    %3880 = vmatpush1.bf16.msra.mxu0 %v2657
    %3881 = vmatprep.subr.bf16.mxu0 %v2662
    %3882 = vmatpush1.bf16.msra.mxu0 %v2661
    %3883 = vmatprep.subr.bf16.mxu0 %v2666
    %3884 = vmatpush1.bf16.msra.mxu0 %v2665
    %3885 = vmatprep.subr.bf16.mxu0 %v2670
    %3886 = vmatpush1.bf16.msra.mxu0 %v2669
    %3887 = vmatprep.subr.bf16.mxu0 %v2674
    %3888 = vmatpush1.bf16.msra.mxu0 %v2673
    %3889 = vmatprep.subr.bf16.mxu0 %v2678
    %3890 = vmatpush1.bf16.msra.mxu0 %v2677
    %3891 = vmatprep.subr.bf16.mxu0 %v2682
    %3892 = vmatpush1.bf16.msra.mxu0 %v2681
    %3893 = vmatprep.mubr.bf16.mxu0 %v162
    %3894 = vmatmul.mubr.bf16.gmra.mrb[0].mxu0 %v161
    %v3895 = vpop.f32.mrb[0].mxu0
    %v3896 = vadd.f32 %v3853, %v3895
    %v3897 = vpop.f32.mrb[0].mxu0
    %v3898 = vadd.f32 %v3855, %v3897
    %v3899 = vpop.f32.mrb[0].mxu0
    %v3900 = vadd.f32 %v3857, %v3899
    %v3901 = vpop.f32.mrb[0].mxu0
    %v3902 = vadd.f32 %v3859, %v3901
    %3903 = vdwg.mxu0
    %3904 = vmatprep.subr.bf16.mxu0 %v2686
    %3905 = vmatpush1.bf16.msra.mxu0 %v2685
    %3906 = vmatprep.subr.bf16.mxu0 %v2690
    %3907 = vmatpush1.bf16.msra.mxu0 %v2689
    %3908 = vmatprep.subr.bf16.mxu0 %v2694
    %3909 = vmatpush1.bf16.msra.mxu0 %v2693
    %3910 = vmatprep.subr.bf16.mxu0 %v2698
    %3911 = vmatpush1.bf16.msra.mxu0 %v2697
    %3912 = vmatprep.subr.bf16.mxu0 %v2702
    %3913 = vmatpush1.bf16.msra.mxu0 %v2701
    %3914 = vmatprep.subr.bf16.mxu0 %v2706
    %3915 = vmatpush1.bf16.msra.mxu0 %v2705
    %3916 = vmatprep.subr.bf16.mxu0 %v2710
    %3917 = vmatpush1.bf16.msra.mxu0 %v2709
    %3918 = vmatprep.subr.bf16.mxu0 %v2714
    %3919 = vmatpush1.bf16.msra.mxu0 %v2713
    %3920 = vmatprep.subr.bf16.mxu0 %v2718
    %3921 = vmatpush1.bf16.msra.mxu0 %v2717
    %3922 = vmatprep.subr.bf16.mxu0 %v2722
    %3923 = vmatpush1.bf16.msra.mxu0 %v2721
    %3924 = vmatprep.subr.bf16.mxu0 %v2726
    %3925 = vmatpush1.bf16.msra.mxu0 %v2725
    %3926 = vmatprep.subr.bf16.mxu0 %v2730
    %3927 = vmatpush1.bf16.msra.mxu0 %v2729
    %3928 = vmatprep.subr.bf16.mxu0 %v2734
    %3929 = vmatpush1.bf16.msra.mxu0 %v2733
    %3930 = vmatprep.subr.bf16.mxu0 %v2738
    %3931 = vmatpush1.bf16.msra.mxu0 %v2737
    %3932 = vmatprep.subr.bf16.mxu0 %v2742
    %3933 = vmatpush1.bf16.msra.mxu0 %v2741
    %3934 = vmatprep.subr.bf16.mxu0 %v2746
    %3935 = vmatpush1.bf16.msra.mxu0 %v2745
    %3936 = vmatprep.mubr.bf16.mxu0 %v164
    %3937 = vmatmul.mubr.bf16.gmra.mrb[0].mxu0 %v163
    %v3938 = vpop.f32.mrb[0].mxu0
    %v3939 = vadd.f32 %v3896, %v3938
    %v3940 = vpop.f32.mrb[0].mxu0
    %v3941 = vadd.f32 %v3898, %v3940
    %v3942 = vpop.f32.mrb[0].mxu0
    %v3943 = vadd.f32 %v3900, %v3942
    %v3944 = vpop.f32.mrb[0].mxu0
    %v3945 = vadd.f32 %v3902, %v3944
    %3946 = vdwg.mxu0
    %v3947 = vmax.f32 %v3595, 0.0
    %v3948 = vmax.f32 %v3597, 0.0
    %v3949 = vmax.f32 %v3939, 0.0
    %v3950 = vmax.f32 %v3941, 0.0
    %v3951 = vmax.f32 %v3599, 0.0
    %v3952 = vmax.f32 %v3601, 0.0
    %v3953 = vmax.f32 %v3943, 0.0
    %v3954 = vmax.f32 %v3945, 0.0
    %v3955 = vpack.c.bf16 %v3951, %v3947
    %v3956 = vpack.c.bf16 %v3952, %v3948
    %v3957 = vpack.c.bf16 %v3953, %v3949
    %v3958 = vpack.c.bf16 %v3954, %v3950
    %v3959 = vld [vmem:[#allocation8] sm:$0xff]
    %v3960 = vld [vmem:[#allocation8 + $0x8] sm:$0xff]
    %v3961 = vld [vmem:[#allocation8 + $0x10] sm:$0xff]
    %v3962 = vld [vmem:[#allocation8 + $0x18] sm:$0xff]
    %v3963 = vld [vmem:[#allocation8 + $0x20] sm:$0xff]
    %v3964 = vld [vmem:[#allocation8 + $0x28] sm:$0xff]
    %v3965 = vld [vmem:[#allocation8 + $0x30] sm:$0xff]
    %v3966 = vld [vmem:[#allocation8 + $0x38] sm:$0xff]
    %v3967 = vld [vmem:[#allocation8 + $0x40] sm:$0xff]
    %v3968 = vld [vmem:[#allocation8 + $0x48] sm:$0xff]
    %v3969 = vld [vmem:[#allocation8 + $0x50] sm:$0xff]
    %v3970 = vld [vmem:[#allocation8 + $0x58] sm:$0xff]
    %v3971 = vld [vmem:[#allocation8 + $0x60] sm:$0xff]
    %v3972 = vld [vmem:[#allocation8 + $0x68] sm:$0xff]
    %v3973 = vld [vmem:[#allocation8 + $0x70] sm:$0xff]
    %v3974 = vld [vmem:[#allocation8 + $0x78] sm:$0xff]
    %v3975 = vld [vmem:[#allocation8 + $0x80] sm:$0xff]
    %v3976 = vld [vmem:[#allocation8 + $0x88] sm:$0xff]
    %v3977 = vld [vmem:[#allocation8 + $0x90] sm:$0xff]
    %v3978 = vld [vmem:[#allocation8 + $0x98] sm:$0xff]
    %v3979 = vld [vmem:[#allocation8 + $0xa0] sm:$0xff]
    %v3980 = vld [vmem:[#allocation8 + $0xa8] sm:$0xff]
    %v3981 = vld [vmem:[#allocation8 + $0xb0] sm:$0xff]
    %v3982 = vld [vmem:[#allocation8 + $0xb8] sm:$0xff]
    %v3983 = vld [vmem:[#allocation8 + $0xc0] sm:$0xff]
    %v3984 = vld [vmem:[#allocation8 + $0xc8] sm:$0xff]
    %v3985 = vld [vmem:[#allocation8 + $0xd0] sm:$0xff]
    %v3986 = vld [vmem:[#allocation8 + $0xd8] sm:$0xff]
    %v3987 = vld [vmem:[#allocation8 + $0xe0] sm:$0xff]
    %v3988 = vld [vmem:[#allocation8 + $0xe8] sm:$0xff]
    %v3989 = vld [vmem:[#allocation8 + $0xf0] sm:$0xff]
    %v3990 = vld [vmem:[#allocation8 + $0xf8] sm:$0xff]
    %v3991 = vld [vmem:[#allocation8 + $0x100] sm:$0xff]
    %v3992 = vld [vmem:[#allocation8 + $0x108] sm:$0xff]
    %v3993 = vld [vmem:[#allocation8 + $0x110] sm:$0xff]
    %v3994 = vld [vmem:[#allocation8 + $0x118] sm:$0xff]
    %v3995 = vld [vmem:[#allocation8 + $0x120] sm:$0xff]
    %v3996 = vld [vmem:[#allocation8 + $0x128] sm:$0xff]
    %v3997 = vld [vmem:[#allocation8 + $0x130] sm:$0xff]
    %v3998 = vld [vmem:[#allocation8 + $0x138] sm:$0xff]
    %v3999 = vld [vmem:[#allocation8 + $0x140] sm:$0xff]
    %v4000 = vld [vmem:[#allocation8 + $0x148] sm:$0xff]
    %v4001 = vld [vmem:[#allocation8 + $0x150] sm:$0xff]
    %v4002 = vld [vmem:[#allocation8 + $0x158] sm:$0xff]
    %v4003 = vld [vmem:[#allocation8 + $0x160] sm:$0xff]
    %v4004 = vld [vmem:[#allocation8 + $0x168] sm:$0xff]
    %v4005 = vld [vmem:[#allocation8 + $0x170] sm:$0xff]
    %v4006 = vld [vmem:[#allocation8 + $0x178] sm:$0xff]
    %v4007 = vld [vmem:[#allocation8 + $0x180] sm:$0xff]
    %v4008 = vld [vmem:[#allocation8 + $0x188] sm:$0xff]
    %v4009 = vld [vmem:[#allocation8 + $0x190] sm:$0xff]
    %v4010 = vld [vmem:[#allocation8 + $0x198] sm:$0xff]
    %v4011 = vld [vmem:[#allocation8 + $0x1a0] sm:$0xff]
    %v4012 = vld [vmem:[#allocation8 + $0x1a8] sm:$0xff]
    %v4013 = vld [vmem:[#allocation8 + $0x1b0] sm:$0xff]
    %v4014 = vld [vmem:[#allocation8 + $0x1b8] sm:$0xff]
    %v4015 = vld [vmem:[#allocation8 + $0x1c0] sm:$0xff]
    %v4016 = vld [vmem:[#allocation8 + $0x1c8] sm:$0xff]
    %v4017 = vld [vmem:[#allocation8 + $0x1d0] sm:$0xff]
    %v4018 = vld [vmem:[#allocation8 + $0x1d8] sm:$0xff]
    %v4019 = vld [vmem:[#allocation8 + $0x1e0] sm:$0xff]
    %v4020 = vld [vmem:[#allocation8 + $0x1e8] sm:$0xff]
    %v4021 = vld [vmem:[#allocation8 + $0x1f0] sm:$0xff]
    %v4022 = vld [vmem:[#allocation8 + $0x1f8] sm:$0xff]
    %v4023 = vld [vmem:[#allocation10] sm:$0x3]
    %v4025 = vlaneseq
    %v4026 = vshrl.u32 %v4025, 7
    %v4027 = vsub.s32 0, %v4026
    %v4028 = vrot.slane %v4023, %v4027
    %v4029 = vlaneseq
    %v4030 = vshrl.u32 %v4029, 7
    %v4031 = vsub.s32 1, %v4030
    %v4032 = vrot.slane %v4023, %v4031
    %v4099 = vunpack.c.l.b16 %v3959
    %v4100 = vunpack.c.h.b16 %v3959
    %v4101 = vunpack.c.l.b16 %v3960
    %v4102 = vunpack.c.h.b16 %v3960
    %v4103 = vunpack.c.l.b16 %v3961
    %v4104 = vunpack.c.h.b16 %v3961
    %v4105 = vunpack.c.l.b16 %v3962
    %v4106 = vunpack.c.h.b16 %v3962
    %v4107 = vunpack.c.l.b16 %v3963
    %v4108 = vunpack.c.h.b16 %v3963
    %v4109 = vunpack.c.l.b16 %v3964
    %v4110 = vunpack.c.h.b16 %v3964
    %v4111 = vunpack.c.l.b16 %v3965
    %v4112 = vunpack.c.h.b16 %v3965
    %v4113 = vunpack.c.l.b16 %v3966
    %v4114 = vunpack.c.h.b16 %v3966
    %v4115 = vunpack.c.l.b16 %v3967
    %v4116 = vunpack.c.h.b16 %v3967
    %v4117 = vunpack.c.l.b16 %v3968
    %v4118 = vunpack.c.h.b16 %v3968
    %v4119 = vunpack.c.l.b16 %v3969
    %v4120 = vunpack.c.h.b16 %v3969
    %v4121 = vunpack.c.l.b16 %v3970
    %v4122 = vunpack.c.h.b16 %v3970
    %v4123 = vunpack.c.l.b16 %v3971
    %v4124 = vunpack.c.h.b16 %v3971
    %v4125 = vunpack.c.l.b16 %v3972
    %v4126 = vunpack.c.h.b16 %v3972
    %v4127 = vunpack.c.l.b16 %v3973
    %v4128 = vunpack.c.h.b16 %v3973
    %v4129 = vunpack.c.l.b16 %v3974
    %v4130 = vunpack.c.h.b16 %v3974
    %v4131 = vunpack.c.l.b16 %v3975
    %v4132 = vunpack.c.h.b16 %v3975
    %v4133 = vunpack.c.l.b16 %v3976
    %v4134 = vunpack.c.h.b16 %v3976
    %v4135 = vunpack.c.l.b16 %v3977
    %v4136 = vunpack.c.h.b16 %v3977
    %v4137 = vunpack.c.l.b16 %v3978
    %v4138 = vunpack.c.h.b16 %v3978
    %v4139 = vunpack.c.l.b16 %v3979
    %v4140 = vunpack.c.h.b16 %v3979
    %v4141 = vunpack.c.l.b16 %v3980
    %v4142 = vunpack.c.h.b16 %v3980
    %v4143 = vunpack.c.l.b16 %v3981
    %v4144 = vunpack.c.h.b16 %v3981
    %v4145 = vunpack.c.l.b16 %v3982
    %v4146 = vunpack.c.h.b16 %v3982
    %v4147 = vunpack.c.l.b16 %v3983
    %v4148 = vunpack.c.h.b16 %v3983
    %v4149 = vunpack.c.l.b16 %v3984
    %v4150 = vunpack.c.h.b16 %v3984
    %v4151 = vunpack.c.l.b16 %v3985
    %v4152 = vunpack.c.h.b16 %v3985
    %v4153 = vunpack.c.l.b16 %v3986
    %v4154 = vunpack.c.h.b16 %v3986
    %v4155 = vunpack.c.l.b16 %v3987
    %v4156 = vunpack.c.h.b16 %v3987
    %v4157 = vunpack.c.l.b16 %v3988
    %v4158 = vunpack.c.h.b16 %v3988
    %v4159 = vunpack.c.l.b16 %v3989
    %v4160 = vunpack.c.h.b16 %v3989
    %v4161 = vunpack.c.l.b16 %v3990
    %v4162 = vunpack.c.h.b16 %v3990
    %v4163 = vunpack.c.l.b16 %v3991
    %v4164 = vunpack.c.h.b16 %v3991
    %v4165 = vunpack.c.l.b16 %v3992
    %v4166 = vunpack.c.h.b16 %v3992
    %v4167 = vunpack.c.l.b16 %v3993
    %v4168 = vunpack.c.h.b16 %v3993
    %v4169 = vunpack.c.l.b16 %v3994
    %v4170 = vunpack.c.h.b16 %v3994
    %v4171 = vunpack.c.l.b16 %v3995
    %v4172 = vunpack.c.h.b16 %v3995
    %v4173 = vunpack.c.l.b16 %v3996
    %v4174 = vunpack.c.h.b16 %v3996
    %v4175 = vunpack.c.l.b16 %v3997
    %v4176 = vunpack.c.h.b16 %v3997
    %v4177 = vunpack.c.l.b16 %v3998
    %v4178 = vunpack.c.h.b16 %v3998
    %v4179 = vunpack.c.l.b16 %v3999
    %v4180 = vunpack.c.h.b16 %v3999
    %v4181 = vunpack.c.l.b16 %v4000
    %v4182 = vunpack.c.h.b16 %v4000
    %v4183 = vunpack.c.l.b16 %v4001
    %v4184 = vunpack.c.h.b16 %v4001
    %v4185 = vunpack.c.l.b16 %v4002
    %v4186 = vunpack.c.h.b16 %v4002
    %v4187 = vunpack.c.l.b16 %v4003
    %v4188 = vunpack.c.h.b16 %v4003
    %v4189 = vunpack.c.l.b16 %v4004
    %v4190 = vunpack.c.h.b16 %v4004
    %v4191 = vunpack.c.l.b16 %v4005
    %v4192 = vunpack.c.h.b16 %v4005
    %v4193 = vunpack.c.l.b16 %v4006
    %v4194 = vunpack.c.h.b16 %v4006
    %v4195 = vunpack.c.l.b16 %v4007
    %v4196 = vunpack.c.h.b16 %v4007
    %v4197 = vunpack.c.l.b16 %v4008
    %v4198 = vunpack.c.h.b16 %v4008
    %v4199 = vunpack.c.l.b16 %v4009
    %v4200 = vunpack.c.h.b16 %v4009
    %v4201 = vunpack.c.l.b16 %v4010
    %v4202 = vunpack.c.h.b16 %v4010
    %v4203 = vunpack.c.l.b16 %v4011
    %v4204 = vunpack.c.h.b16 %v4011
    %v4205 = vunpack.c.l.b16 %v4012
    %v4206 = vunpack.c.h.b16 %v4012
    %v4207 = vunpack.c.l.b16 %v4013
    %v4208 = vunpack.c.h.b16 %v4013
    %v4209 = vunpack.c.l.b16 %v4014
    %v4210 = vunpack.c.h.b16 %v4014
    %v4211 = vunpack.c.l.b16 %v4015
    %v4212 = vunpack.c.h.b16 %v4015
    %v4213 = vunpack.c.l.b16 %v4016
    %v4214 = vunpack.c.h.b16 %v4016
    %v4215 = vunpack.c.l.b16 %v4017
    %v4216 = vunpack.c.h.b16 %v4017
    %v4217 = vunpack.c.l.b16 %v4018
    %v4218 = vunpack.c.h.b16 %v4018
    %v4219 = vunpack.c.l.b16 %v4019
    %v4220 = vunpack.c.h.b16 %v4019
    %v4221 = vunpack.c.l.b16 %v4020
    %v4222 = vunpack.c.h.b16 %v4020
    %v4223 = vunpack.c.l.b16 %v4021
    %v4224 = vunpack.c.h.b16 %v4021
    %v4225 = vunpack.c.l.b16 %v4022
    %v4226 = vunpack.c.h.b16 %v4022
    %v4227 = vpack.c.b16 %v4101, %v4099
    %v4228 = vpack.c.b16 %v4102, %v4100
    %v4229 = vpack.c.b16 %v4105, %v4103
    %v4230 = vpack.c.b16 %v4106, %v4104
    %v4231 = vpack.c.b16 %v4109, %v4107
    %v4232 = vpack.c.b16 %v4110, %v4108
    %v4233 = vpack.c.b16 %v4113, %v4111
    %v4234 = vpack.c.b16 %v4114, %v4112
    %v4235 = vpack.c.b16 %v4117, %v4115
    %v4236 = vpack.c.b16 %v4118, %v4116
    %v4237 = vpack.c.b16 %v4121, %v4119
    %v4238 = vpack.c.b16 %v4122, %v4120
    %v4239 = vpack.c.b16 %v4125, %v4123
    %v4240 = vpack.c.b16 %v4126, %v4124
    %v4241 = vpack.c.b16 %v4129, %v4127
    %v4242 = vpack.c.b16 %v4130, %v4128
    %v4243 = vpack.c.b16 %v4133, %v4131
    %v4244 = vpack.c.b16 %v4134, %v4132
    %v4245 = vpack.c.b16 %v4137, %v4135
    %v4246 = vpack.c.b16 %v4138, %v4136
    %v4247 = vpack.c.b16 %v4141, %v4139
    %v4248 = vpack.c.b16 %v4142, %v4140
    %v4249 = vpack.c.b16 %v4145, %v4143
    %v4250 = vpack.c.b16 %v4146, %v4144
    %v4251 = vpack.c.b16 %v4149, %v4147
    %v4252 = vpack.c.b16 %v4150, %v4148
    %v4253 = vpack.c.b16 %v4153, %v4151
    %v4254 = vpack.c.b16 %v4154, %v4152
    %v4255 = vpack.c.b16 %v4157, %v4155
    %v4256 = vpack.c.b16 %v4158, %v4156
    %v4257 = vpack.c.b16 %v4161, %v4159
    %v4258 = vpack.c.b16 %v4162, %v4160
    %v4259 = vpack.c.b16 %v4165, %v4163
    %v4260 = vpack.c.b16 %v4166, %v4164
    %v4261 = vpack.c.b16 %v4169, %v4167
    %v4262 = vpack.c.b16 %v4170, %v4168
    %v4263 = vpack.c.b16 %v4173, %v4171
    %v4264 = vpack.c.b16 %v4174, %v4172
    %v4265 = vpack.c.b16 %v4177, %v4175
    %v4266 = vpack.c.b16 %v4178, %v4176
    %v4267 = vpack.c.b16 %v4181, %v4179
    %v4268 = vpack.c.b16 %v4182, %v4180
    %v4269 = vpack.c.b16 %v4185, %v4183
    %v4270 = vpack.c.b16 %v4186, %v4184
    %v4271 = vpack.c.b16 %v4189, %v4187
    %v4272 = vpack.c.b16 %v4190, %v4188
    %v4273 = vpack.c.b16 %v4193, %v4191
    %v4274 = vpack.c.b16 %v4194, %v4192
    %v4275 = vpack.c.b16 %v4197, %v4195
    %v4276 = vpack.c.b16 %v4198, %v4196
    %v4277 = vpack.c.b16 %v4201, %v4199
    %v4278 = vpack.c.b16 %v4202, %v4200
    %v4279 = vpack.c.b16 %v4205, %v4203
    %v4280 = vpack.c.b16 %v4206, %v4204
    %v4281 = vpack.c.b16 %v4209, %v4207
    %v4282 = vpack.c.b16 %v4210, %v4208
    %v4283 = vpack.c.b16 %v4213, %v4211
    %v4284 = vpack.c.b16 %v4214, %v4212
    %v4285 = vpack.c.b16 %v4217, %v4215
    %v4286 = vpack.c.b16 %v4218, %v4216
    %v4287 = vpack.c.b16 %v4221, %v4219
    %v4288 = vpack.c.b16 %v4222, %v4220
    %v4289 = vpack.c.b16 %v4225, %v4223
    %v4290 = vpack.c.b16 %v4226, %v4224
    %4355 = vmatprep.subr.bf16.mxu0 %v4228
    %4356 = vmatpush1.bf16.msra.mxu0 %v4227
    %4357 = vmatprep.subr.bf16.mxu0 %v4230
    %4358 = vmatpush1.bf16.msra.mxu0 %v4229
    %4359 = vmatprep.subr.bf16.mxu0 %v4232
    %4360 = vmatpush1.bf16.msra.mxu0 %v4231
    %4361 = vmatprep.subr.bf16.mxu0 %v4234
    %4362 = vmatpush1.bf16.msra.mxu0 %v4233
    %4363 = vmatprep.subr.bf16.mxu0 %v4236
    %4364 = vmatpush1.bf16.msra.mxu0 %v4235
    %4365 = vmatprep.subr.bf16.mxu0 %v4238
    %4366 = vmatpush1.bf16.msra.mxu0 %v4237
    %4367 = vmatprep.subr.bf16.mxu0 %v4240
    %4368 = vmatpush1.bf16.msra.mxu0 %v4239
    %4369 = vmatprep.subr.bf16.mxu0 %v4242
    %4370 = vmatpush1.bf16.msra.mxu0 %v4241
    %4371 = vmatprep.subr.bf16.mxu0 %v4244
    %4372 = vmatpush1.bf16.msra.mxu0 %v4243
    %4373 = vmatprep.subr.bf16.mxu0 %v4246
    %4374 = vmatpush1.bf16.msra.mxu0 %v4245
    %4375 = vmatprep.subr.bf16.mxu0 %v4248
    %4376 = vmatpush1.bf16.msra.mxu0 %v4247
    %4377 = vmatprep.subr.bf16.mxu0 %v4250
    %4378 = vmatpush1.bf16.msra.mxu0 %v4249
    %4379 = vmatprep.subr.bf16.mxu0 %v4252
    %4380 = vmatpush1.bf16.msra.mxu0 %v4251
    %4381 = vmatprep.subr.bf16.mxu0 %v4254
    %4382 = vmatpush1.bf16.msra.mxu0 %v4253
    %4383 = vmatprep.subr.bf16.mxu0 %v4256
    %4384 = vmatpush1.bf16.msra.mxu0 %v4255
    %4385 = vmatprep.subr.bf16.mxu0 %v4258
    %4386 = vmatpush1.bf16.msra.mxu0 %v4257
    %4387 = vmatprep.mubr.bf16.mxu0 %v3956
    %4388 = vmatmul.mubr.bf16.gmra.mrb[0].mxu0 %v3955
    %v4389 = vpop.f32.mrb[0].mxu0
    %v4390 = vadd.f32 %v4028, %v4389
    %v4391 = vpop.f32.mrb[0].mxu0
    %v4392 = vadd.f32 %v4032, %v4391
    %v4393 = vpop.f32.mrb[0].mxu0
    %v4394 = vadd.f32 %v4028, %v4393
    %v4395 = vpop.f32.mrb[0].mxu0
    %v4396 = vadd.f32 %v4032, %v4395
    %4397 = vdwg.mxu0
    %4398 = vmatprep.subr.bf16.mxu0 %v4260
    %4399 = vmatpush1.bf16.msra.mxu0 %v4259
    %4400 = vmatprep.subr.bf16.mxu0 %v4262
    %4401 = vmatpush1.bf16.msra.mxu0 %v4261
    %4402 = vmatprep.subr.bf16.mxu0 %v4264
    %4403 = vmatpush1.bf16.msra.mxu0 %v4263
    %4404 = vmatprep.subr.bf16.mxu0 %v4266
    %4405 = vmatpush1.bf16.msra.mxu0 %v4265
    %4406 = vmatprep.subr.bf16.mxu0 %v4268
    %4407 = vmatpush1.bf16.msra.mxu0 %v4267
    %4408 = vmatprep.subr.bf16.mxu0 %v4270
    %4409 = vmatpush1.bf16.msra.mxu0 %v4269
    %4410 = vmatprep.subr.bf16.mxu0 %v4272
    %4411 = vmatpush1.bf16.msra.mxu0 %v4271
    %4412 = vmatprep.subr.bf16.mxu0 %v4274
    %4413 = vmatpush1.bf16.msra.mxu0 %v4273
    %4414 = vmatprep.subr.bf16.mxu0 %v4276
    %4415 = vmatpush1.bf16.msra.mxu0 %v4275
    %4416 = vmatprep.subr.bf16.mxu0 %v4278
    %4417 = vmatpush1.bf16.msra.mxu0 %v4277
    %4418 = vmatprep.subr.bf16.mxu0 %v4280
    %4419 = vmatpush1.bf16.msra.mxu0 %v4279
    %4420 = vmatprep.subr.bf16.mxu0 %v4282
    %4421 = vmatpush1.bf16.msra.mxu0 %v4281
    %4422 = vmatprep.subr.bf16.mxu0 %v4284
    %4423 = vmatpush1.bf16.msra.mxu0 %v4283
    %4424 = vmatprep.subr.bf16.mxu0 %v4286
    %4425 = vmatpush1.bf16.msra.mxu0 %v4285
    %4426 = vmatprep.subr.bf16.mxu0 %v4288
    %4427 = vmatpush1.bf16.msra.mxu0 %v4287
    %4428 = vmatprep.subr.bf16.mxu0 %v4290
    %4429 = vmatpush1.bf16.msra.mxu0 %v4289
    %4430 = vmatprep.mubr.bf16.mxu0 %v3958
    %4431 = vmatmul.mubr.bf16.gmra.mrb[0].mxu0 %v3957
    %v4432 = vpop.f32.mrb[0].mxu0
    %v4433 = vadd.f32 %v4390, %v4432
    %v4434 = vpop.f32.mrb[0].mxu0
    %v4435 = vadd.f32 %v4392, %v4434
    %v4436 = vpop.f32.mrb[0].mxu0
    %v4437 = vadd.f32 %v4394, %v4436
    %v4438 = vpop.f32.mrb[0].mxu0
    %v4439 = vadd.f32 %v4396, %v4438
    %4440 = vdwg.mxu0
    %v4441 = vmax.f32 %v4433, 0.0
    %v4442 = vmax.f32 %v4435, 0.0
    %v4443 = vmax.f32 %v4437, 0.0
    %v4444 = vmax.f32 %v4439, 0.0
    %v4445 = vpack.c.bf16 %v4443, %v4441
    %v4446 = vpack.c.bf16 %v4444, %v4442
    %v4447 = vld [vmem:[#allocation11] sm:$0xf]
    %v4448 = vld [vmem:[#allocation11 + $0x4] sm:$0xf]
    %v4449 = vld [vmem:[#allocation11 + $0x8] sm:$0xf]
    %v4450 = vld [vmem:[#allocation11 + $0xc] sm:$0xf]
    %v4451 = vld [vmem:[#allocation11 + $0x10] sm:$0xf]
    %v4452 = vld [vmem:[#allocation11 + $0x14] sm:$0xf]
    %v4453 = vld [vmem:[#allocation11 + $0x18] sm:$0xf]
    %v4454 = vld [vmem:[#allocation11 + $0x1c] sm:$0xf]
    %v4455 = vld [vmem:[#allocation11 + $0x20] sm:$0xf]
    %v4456 = vld [vmem:[#allocation11 + $0x24] sm:$0xf]
    %v4457 = vld [vmem:[#allocation11 + $0x28] sm:$0xf]
    %v4458 = vld [vmem:[#allocation11 + $0x2c] sm:$0xf]
    %v4459 = vld [vmem:[#allocation11 + $0x30] sm:$0xf]
    %v4460 = vld [vmem:[#allocation11 + $0x34] sm:$0xf]
    %v4461 = vld [vmem:[#allocation11 + $0x38] sm:$0xf]
    %v4462 = vld [vmem:[#allocation11 + $0x3c] sm:$0xf]
    %v4463 = vld [vmem:[#allocation11 + $0x40] sm:$0xf]
    %v4464 = vld [vmem:[#allocation11 + $0x44] sm:$0xf]
    %v4465 = vld [vmem:[#allocation11 + $0x48] sm:$0xf]
    %v4466 = vld [vmem:[#allocation11 + $0x4c] sm:$0xf]
    %v4467 = vld [vmem:[#allocation11 + $0x50] sm:$0xf]
    %v4468 = vld [vmem:[#allocation11 + $0x54] sm:$0xf]
    %v4469 = vld [vmem:[#allocation11 + $0x58] sm:$0xf]
    %v4470 = vld [vmem:[#allocation11 + $0x5c] sm:$0xf]
    %v4471 = vld [vmem:[#allocation11 + $0x60] sm:$0xf]
    %v4472 = vld [vmem:[#allocation11 + $0x64] sm:$0xf]
    %v4473 = vld [vmem:[#allocation11 + $0x68] sm:$0xf]
    %v4474 = vld [vmem:[#allocation11 + $0x6c] sm:$0xf]
    %v4475 = vld [vmem:[#allocation11 + $0x70] sm:$0xf]
    %v4476 = vld [vmem:[#allocation11 + $0x74] sm:$0xf]
    %v4477 = vld [vmem:[#allocation11 + $0x78] sm:$0xf]
    %v4478 = vld [vmem:[#allocation11 + $0x7c] sm:$0xf]
    %v4479 = vld [vmem:[#allocation13] sm:$0x1]
    %v4481 = vlaneseq
    %v4482 = vshrl.u32 %v4481, 7
    %v4483 = vsub.s32 0, %v4482
    %v4484 = vrot.slane %v4479, %v4483
    %v4518 = vunpack.c.l.b16 %v4447
    %v4519 = vunpack.c.l.b16 %v4448
    %v4520 = vunpack.c.l.b16 %v4449
    %v4521 = vunpack.c.l.b16 %v4450
    %v4522 = vunpack.c.l.b16 %v4451
    %v4523 = vunpack.c.l.b16 %v4452
    %v4524 = vunpack.c.l.b16 %v4453
    %v4525 = vunpack.c.l.b16 %v4454
    %v4526 = vunpack.c.l.b16 %v4455
    %v4527 = vunpack.c.l.b16 %v4456
    %v4528 = vunpack.c.l.b16 %v4457
    %v4529 = vunpack.c.l.b16 %v4458
    %v4530 = vunpack.c.l.b16 %v4459
    %v4531 = vunpack.c.l.b16 %v4460
    %v4532 = vunpack.c.l.b16 %v4461
    %v4533 = vunpack.c.l.b16 %v4462
    %v4534 = vunpack.c.l.b16 %v4463
    %v4535 = vunpack.c.l.b16 %v4464
    %v4536 = vunpack.c.l.b16 %v4465
    %v4537 = vunpack.c.l.b16 %v4466
    %v4538 = vunpack.c.l.b16 %v4467
    %v4539 = vunpack.c.l.b16 %v4468
    %v4540 = vunpack.c.l.b16 %v4469
    %v4541 = vunpack.c.l.b16 %v4470
    %v4542 = vunpack.c.l.b16 %v4471
    %v4543 = vunpack.c.l.b16 %v4472
    %v4544 = vunpack.c.l.b16 %v4473
    %v4545 = vunpack.c.l.b16 %v4474
    %v4546 = vunpack.c.l.b16 %v4475
    %v4547 = vunpack.c.l.b16 %v4476
    %v4548 = vunpack.c.l.b16 %v4477
    %v4549 = vunpack.c.l.b16 %v4478
    %v4550 = vpack.c.b16 %v4519, %v4518
    %v4551 = vpack.c.b16 %v4521, %v4520
    %v4552 = vpack.c.b16 %v4523, %v4522
    %v4553 = vpack.c.b16 %v4525, %v4524
    %v4554 = vpack.c.b16 %v4527, %v4526
    %v4555 = vpack.c.b16 %v4529, %v4528
    %v4556 = vpack.c.b16 %v4531, %v4530
    %v4557 = vpack.c.b16 %v4533, %v4532
    %v4558 = vpack.c.b16 %v4535, %v4534
    %v4559 = vpack.c.b16 %v4537, %v4536
    %v4560 = vpack.c.b16 %v4539, %v4538
    %v4561 = vpack.c.b16 %v4541, %v4540
    %v4562 = vpack.c.b16 %v4543, %v4542
    %v4563 = vpack.c.b16 %v4545, %v4544
    %v4564 = vpack.c.b16 %v4547, %v4546
    %v4565 = vpack.c.b16 %v4549, %v4548
    %4582 = vmatprep.subr.bf16.mxu0 0
    %4583 = vmatpush1.bf16.msra.mxu0 %v4550
    %4584 = vmatprep.subr.bf16.mxu0 0
    %4585 = vmatpush1.bf16.msra.mxu0 %v4551
    %4586 = vmatprep.subr.bf16.mxu0 0
    %4587 = vmatpush1.bf16.msra.mxu0 %v4552
    %4588 = vmatprep.subr.bf16.mxu0 0
    %4589 = vmatpush1.bf16.msra.mxu0 %v4553
    %4590 = vmatprep.subr.bf16.mxu0 0
    %4591 = vmatpush1.bf16.msra.mxu0 %v4554
    %4592 = vmatprep.subr.bf16.mxu0 0
    %4593 = vmatpush1.bf16.msra.mxu0 %v4555
    %4594 = vmatprep.subr.bf16.mxu0 0
    %4595 = vmatpush1.bf16.msra.mxu0 %v4556
    %4596 = vmatprep.subr.bf16.mxu0 0
    %4597 = vmatpush1.bf16.msra.mxu0 %v4557
    %4598 = vmatprep.subr.bf16.mxu0 0
    %4599 = vmatpush1.bf16.msra.mxu0 %v4558
    %4600 = vmatprep.subr.bf16.mxu0 0
    %4601 = vmatpush1.bf16.msra.mxu0 %v4559
    %4602 = vmatprep.subr.bf16.mxu0 0
    %4603 = vmatpush1.bf16.msra.mxu0 %v4560
    %4604 = vmatprep.subr.bf16.mxu0 0
    %4605 = vmatpush1.bf16.msra.mxu0 %v4561
    %4606 = vmatprep.subr.bf16.mxu0 0
    %4607 = vmatpush1.bf16.msra.mxu0 %v4562
    %4608 = vmatprep.subr.bf16.mxu0 0
    %4609 = vmatpush1.bf16.msra.mxu0 %v4563
    %4610 = vmatprep.subr.bf16.mxu0 0
    %4611 = vmatpush1.bf16.msra.mxu0 %v4564
    %4612 = vmatprep.subr.bf16.mxu0 0
    %4613 = vmatpush1.bf16.msra.mxu0 %v4565
    %4614 = vmatprep.mubr.bf16.mxu0 %v4446
    %4615 = vmatmul.mubr.bf16.gmra.mrb[0].mxu0 %v4445
    %v4616 = vpop.f32.mrb[0].mxu0
    %v4617 = vadd.f32 %v4484, %v4616
    %v4618 = vpop.f32.mrb[0].mxu0
    %v4619 = vpop.f32.mrb[0].mxu0
    %v4620 = vadd.f32 %v4484, %v4619
    %v4621 = vpop.f32.mrb[0].mxu0
    %4622 = vdwg.mxu0
    %v4623 = vpack.c.bf16 %v4620, %v4617
    %v4625 = vunpack.c.l.b16 %v4623
    %v4626 = vunpack.c.h.b16 %v4623
    %v4627 = vpack.c.b16 %v4625, %v4625
    %v4628 = vpack.c.b16 %v4626, %v4626
    %4631 = vst [vmem:[#allocation14] sm:$0xf] %v4627
    %4632 = vst [vmem:[#allocation14 + $0x4] sm:$0xf] %v4628
    // Predicated region
    $region58: #{tpu_custom_call.1} parent=1 // pred_check
      _
    $region59: #{tpu_custom_call.1} parent=1 // pred_check_branch
      %4634 = sbr.rel (0) target = $region61
    $region60: #{tpu_custom_call.1} parent=1 // pred_region
      %s4636 = ssub.s32 128, 128
      %4637 = vsyncadd [#allocation4], %s4636
      %s4638 = sshll.u32 [#allocation14], 4
      %s4639 = int_to_ptr.vmem [resolvable:$true] %s4638
      %4644 = dma.vmem_to_hbm [thread:$0]  %s4639, 128, %s7, [#allocation4], 64, 64, 4
    $region61: #{tpu_custom_call.1} parent=1 // pred_fallthru
      _
    // Predicated region
    $region62: #{tpu_custom_call.1} parent=1 // pred_check
      _
    $region63: #{tpu_custom_call.1} parent=1 // pred_check_branch
      %4646 = sbr.rel (0) target = $region65
    $region64: #{tpu_custom_call.1} parent=1 // pred_region
      %4647 = dma.done [#allocation4], 128
    $region65: #{tpu_custom_call.1} parent=1 // pred_fallthru
      _
    %4648 = vsyncpa [#allocation3], 1
    %4649 = vsyncpa [#allocation6], 1
    %4650 = vsyncpa [#allocation9], 1
    %4651 = vsyncpa [#allocation12], 1
    %4652 = vsyncpa [#allocation4], 1

</llo_original>
